<compile_context>
chip_gen: v7x
topology: tpu7x:2x2x1
jax: 0.10.0
libtpu: 0.0.40
codegen_flags: <defaults>
</compile_context>

<pallas_src>
import functools

import jax
import jax.numpy as jnp
import numpy as np
from jax.experimental import pallas as pl
from jax.experimental.pallas import tpu as pltpu

_NEG = -1e9  # "minus infinity" for cross-window score blocks (finite, underflows exp to 0)


def _window_attention_body(x_ref, wqkv_ref, bqkv_ref, wproj_ref, bproj_ref,
                           rpb_ref, mask_ref, o_ref, *, num_heads):
    """One grid step == one block of WB windows.

    x_ref    : (WB, N, C)    input tokens of this window block
    wqkv_ref : (C, 3C)       bf16 fused qkv weight, out axis ordered (3, H, Dh); q part pre-scaled
    bqkv_ref : (1, 3C)       f32 fused qkv bias (q part pre-scaled)
    wproj_ref: (H, Dh, C)    bf16 head-split output projection weight
    bproj_ref: (1, C)        f32 output projection bias
    rpb_ref  : (H, M, M)     f32 block-diagonal rel-pos bias, off-diagonal blocks = -1e9
    mask_ref : (WB, N, M)    f32 lane-pretiled additive window mask, or None
    o_ref    : (WB, N, C)    output tokens
    """
    WB, N, C = x_ref.shape
    H = num_heads
    Dh = C // H
    M = WB * N

    # ---- fused qkv projection: a single wide MXU matmul, f32 bias add -------------
    xf = x_ref[...].reshape(M, C).astype(jnp.bfloat16)                      # (M, C)
    qkv = jnp.dot(xf, wqkv_ref[...], preferred_element_type=jnp.float32)
    qkv = qkv + bqkv_ref[...]                                               # (M, 3C) f32

    mask_bd = None
    if mask_ref is not None:
        # leading-dims-only reshape (no lane movement): (WB, N, M) -> (M, M)
        mask_bd = mask_ref[...].reshape(M, M)

    # ---- per-head block-diagonal attention, heads reduced into one f32 accumulator --
    y = jnp.zeros((M, C), jnp.float32)
    for h in range(H):  # H is small & static; each head's (M,M) temporaries die per iter
        q_h = qkv[:, h * Dh:(h + 1) * Dh].astype(jnp.bfloat16)              # (M, Dh)
        k_h = qkv[:, C + h * Dh:C + (h + 1) * Dh].astype(jnp.bfloat16)
        v_h = qkv[:, 2 * C + h * Dh:2 * C + (h + 1) * Dh].astype(jnp.bfloat16)

        # lane-dense (M, M) scores; cross-window blocks get -1e9 from rpb_ref
        s = jnp.einsum('md,nd->mn', q_h, k_h,
                       preferred_element_type=jnp.float32)                  # (M, M)
        s = s + rpb_ref[h]
        if mask_bd is not None:
            s = s + mask_bd

        # f32 softmax; off-diagonal entries underflow to exactly 0, so cross-window
        # products vanish in p @ v_h.  Reciprocal goes to the EUP slot.
        s = s - jnp.max(s, axis=-1, keepdims=True)
        e = jnp.exp(s)
        p = e * pl.reciprocal(jnp.sum(e, axis=-1, keepdims=True), approx=True)

        o_h = jnp.einsum('mn,nd->md', p.astype(jnp.bfloat16), v_h,
                         preferred_element_type=jnp.float32)                # (M, Dh)
        y = y + jnp.einsum('md,dc->mc', o_h.astype(jnp.bfloat16), wproj_ref[h],
                           preferred_element_type=jnp.float32)              # (M, C)

    y = y + bproj_ref[...]
    o_ref[...] = y.reshape(WB, N, C).astype(o_ref.dtype)


def _kernel_with_mask(x_ref, wqkv_ref, bqkv_ref, wproj_ref, bproj_ref,
                      rpb_ref, mask_ref, o_ref, *, num_heads):
    _window_attention_body(x_ref, wqkv_ref, bqkv_ref, wproj_ref, bproj_ref,
                           rpb_ref, mask_ref, o_ref, num_heads=num_heads)


def _kernel_no_mask(x_ref, wqkv_ref, bqkv_ref, wproj_ref, bproj_ref,
                    rpb_ref, o_ref, *, num_heads):
    _window_attention_body(x_ref, wqkv_ref, bqkv_ref, wproj_ref, bproj_ref,
                           rpb_ref, None, o_ref, num_heads=num_heads)


def prepare_window_attention_params(wqkv, bqkv, wproj, bproj, *, num_heads, scale):
    """One-time parameter transform into the kernel layout.

    wqkv : (C, 3C)  (in, out) layout (out axis ordered as (3, H, Dh)), qkv = x @ wqkv + bqkv
    wproj: (C, C)   (in, out) layout
    The 1/sqrt(Dh) scale is folded into the q columns/bias; weights pre-cast to bf16.
    """
    C = wqkv.shape[0]
    H = num_heads
    Dh = C // H
    col_scale = jnp.concatenate([jnp.full((C,), scale, jnp.float32),
                                 jnp.ones((2 * C,), jnp.float32)])
    return dict(
        wqkv=(wqkv * col_scale[None, :]).astype(jnp.bfloat16),   # (C, 3C)
        bqkv=(bqkv * col_scale)[None, :].astype(jnp.float32),    # (1, 3C)
        wproj=wproj.reshape(H, Dh, C).astype(jnp.bfloat16),      # (H, Dh, C)
        bproj=bproj.reshape(1, C).astype(jnp.float32),           # (1, C)
    )


def _choose_window_block(B_, N, *, max_rows=128, min_steps=2):
    """Largest WB dividing B_ with WB*N <= max_rows.

    max_rows=128 keeps the per-head (M, M) f32 softmax working set near the vreg file
    (spill traffic, not the MXU, is the binding slot at these shapes) while making the
    score/softmax tensors 128-lane dense.  min_steps=2 keeps >= 2 'parallel' grid steps
    so both v7x TensorCores are fed; pass min_steps=1 on single-core v5e/v6e to grow WB.
    """
    divisors = [d for d in range(1, B_ + 1) if B_ % d == 0]
    cands = [d for d in divisors if d * N <= max_rows and B_ // d >= min_steps]
    if not cands:
        cands = [d for d in divisors if d * N <= max_rows] or [1]
    return max(cands)


def window_attention(x, params, rpb, mask=None, *, num_heads,
                     window_block=None, min_steps=2):
    """x: (B_, N, C); rpb: (H, N, N); mask: (nW, N, N) additive (0 / -100) or None."""
    B_, N, C = x.shape
    H = num_heads
    Dh = C // H

    WB = window_block if window_block is not None else _choose_window_block(
        B_, N, min_steps=min_steps)
    assert B_ % WB == 0, "window block must divide B_"
    M = WB * N

    # Grid-invariant block-diagonal relative-position bias (H, M, M):
    # diagonal (window, window) blocks carry rpb[h]; off-diagonal blocks carry -1e9 so
    # softmax zeroes all cross-window attention inside the fused (M, M) score matmul.
    eye5 = jnp.eye(WB, dtype=jnp.bool_).reshape(1, WB, 1, WB, 1)
    rpb_bd = jnp.where(eye5, rpb.astype(jnp.float32)[:, None, :, None, :],
                       jnp.float32(_NEG)).reshape(H, M, M)

    in_specs = [
        pl.BlockSpec((WB, N, C), lambda g: (g, 0, 0)),    # x
        pl.BlockSpec((C, 3 * C), lambda g: (0, 0)),       # fused qkv weight (bf16)
        pl.BlockSpec((1, 3 * C), lambda g: (0, 0)),       # fused qkv bias (f32)
        pl.BlockSpec((H, Dh, C), lambda g: (0, 0, 0)),    # head-split proj weight (bf16)
        pl.BlockSpec((1, C), lambda g: (0, 0)),           # proj bias (f32)
        pl.BlockSpec((H, M, M), lambda g: (0, 0, 0)),     # block-diagonal rel-pos bias
    ]
    args = [x, params["wqkv"], params["bqkv"], params["wproj"], params["bproj"], rpb_bd]

    if mask is not None:
        nW = mask.shape[0]
        # Lane-pretile the per-window mask along the key axis so the kernel only does a
        # leading-dims reshape + one broadcast add (no in-kernel lane concatenates).
        mask_t = jnp.tile(mask.astype(jnp.float32), (1, 1, WB))          # (nW, N, M)
        if nW % WB == 0:                       # block of WB windows within one mask period
            n_rep = nW // WB
            mask_op = mask_t
            mask_idx = lambda g: (g % n_rep, 0, 0)
        elif WB % nW == 0:                     # block spans whole mask period(s)
            mask_op = jnp.tile(mask_t, (WB // nW, 1, 1))                 # (WB, N, M)
            mask_idx = lambda g: (0, 0, 0)
        else:                                  # general fallback: one mask row per window
            mask_op = jnp.tile(mask_t, (B_ // nW, 1, 1))                 # (B_, N, M)
            mask_idx = lambda g: (g, 0, 0)
        in_specs.append(pl.BlockSpec((WB, N, M), mask_idx))
        args.append(mask_op)
        kernel = functools.partial(_kernel_with_mask, num_heads=num_heads)
    else:
        kernel = functools.partial(_kernel_no_mask, num_heads=num_heads)

    return pl.pallas_call(
        kernel,
        out_shape=jax.ShapeDtypeStruct((B_, N, C), x.dtype),
        grid_spec=pltpu.PrefetchScalarGridSpec(
            num_scalar_prefetch=0,
            grid=(B_ // WB,),
            in_specs=in_specs,
            out_specs=pl.BlockSpec((WB, N, C), lambda g: (g, 0, 0)),
        ),
        compiler_params=pltpu.CompilerParams(
            dimension_semantics=("parallel",)),
    )(*args)


def reference_window_attention(x, wqkv, bqkv, wproj, bproj, rpb, mask,
                               *, num_heads, scale):
    """Plain-JAX replica of the PyTorch forward (for validation)."""
    B_, N, C = x.shape
    H = num_heads
    Dh = C // H
    qkv = (x @ wqkv + bqkv[None, None, :]).reshape(B_, N, 3, H, Dh).transpose(2, 0, 3, 1, 4)
    q, k, v = qkv[0], qkv[1], qkv[2]                        # (B_, H, N, Dh)
    attn = (q * scale) @ jnp.swapaxes(k, -2, -1)            # (B_, H, N, N)
    attn = attn + rpb[None]                                 # rel pos bias
    if mask is not None:
        nW = mask.shape[0]
        attn = attn.reshape(B_ // nW, nW, H, N, N) + mask[None, :, None, :, :]
        attn = attn.reshape(B_, H, N, N)
    attn = jax.nn.softmax(attn, axis=-1)
    out = (attn @ v).transpose(0, 2, 1, 3).reshape(B_, N, C)
    return out @ wproj + bproj[None, None, :]


def make_relative_position_index(window_size):
    Wh, Ww = window_size
    coords = np.stack(np.meshgrid(np.arange(Wh), np.arange(Ww), indexing="ij"))
    coords_flatten = coords.reshape(2, -1)                         # (2, N)
    rel = coords_flatten[:, :, None] - coords_flatten[:, None, :]  # (2, N, N)
    rel = rel.transpose(1, 2, 0).astype(np.int64)                  # (N, N, 2)
    rel[:, :, 0] += Wh - 1
    rel[:, :, 1] += Ww - 1
    rel[:, :, 0] *= 2 * Ww - 1
    return rel.sum(-1)                                             # (N, N)


if __name__ == "__main__":
    # Module configuration (small, consistent with WindowAttention)
    dim = 32
    window_size = (4, 4)          # -> N = 16
    num_heads = 4
    head_dim = dim // num_heads
    scale = head_dim ** -0.5
    Wh, Ww = window_size
    N = Wh * Ww
    batch = 4
    nW = 4                        # number of windows per image
    B_ = batch * nW               # num_windows * B = 16  -> WB=8, M=128, grid=(2,)

    key = jax.random.PRNGKey(0)
    ks = jax.random.split(key, 8)

    # Parameters (deterministic synthetic init); Linear weights stored as (in, out).
    wqkv = jax.random.normal(ks[0], (dim, 3 * dim), jnp.float32) * 0.02
    bqkv = jax.random.normal(ks[1], (3 * dim,), jnp.float32) * 0.02
    wproj = jax.random.normal(ks[2], (dim, dim), jnp.float32) * 0.02
    bproj = jax.random.normal(ks[3], (dim,), jnp.float32) * 0.02
    # relative_position_bias_table: ((2Wh-1)*(2Ww-1), H), trunc_normal(std=0.02)
    rpb_table = jax.random.truncated_normal(
        ks[4], -2.0, 2.0, ((2 * Wh - 1) * (2 * Ww - 1), num_heads),
        jnp.float32) * 0.02

    # Gather bias table -> (H, N, N)   (glue, mirrors the PyTorch indexing)
    rel_idx = jnp.asarray(make_relative_position_index(window_size))
    rpb = rpb_table[rel_idx.reshape(-1)].reshape(N, N, num_heads)
    rpb = jnp.transpose(rpb, (2, 0, 1))                            # (H, N, N)

    # Inputs
    x = jax.random.normal(ks[5], (B_, N, dim), jnp.float32)
    # shift-window style additive mask per window: 0 or -100, shape (nW, N, N)
    mask_w = jnp.where(jax.random.bernoulli(ks[6], 0.7, (nW, N, N)),
                       0.0, -100.0).astype(jnp.float32)

    # One-time parameter transform into the kernel layout (scale folded into q).
    params = prepare_window_attention_params(
        wqkv, bqkv, wproj, bproj, num_heads=num_heads, scale=scale)

    # Masked (shifted-window) path.
    out = window_attention(x, params, rpb, mask_w, num_heads=num_heads)
    out = jax.block_until_ready(out)
    ref = reference_window_attention(x, wqkv, bqkv, wproj, bproj, rpb, mask_w,
                                     num_heads=num_heads, scale=scale)
    np.testing.assert_allclose(np.asarray(out), np.asarray(ref),
                               rtol=2e-2, atol=2e-2)

    # No-mask (non-shifted) path uses the dedicated variant without the mask operand.
    out_nm = window_attention(x, params, rpb, None, num_heads=num_heads)
    out_nm = jax.block_until_ready(out_nm)
    ref_nm = reference_window_attention(x, wqkv, bqkv, wproj, bproj, rpb, None,
                                        num_heads=num_heads, scale=scale)
    np.testing.assert_allclose(np.asarray(out_nm), np.asarray(ref_nm),
                               rtol=2e-2, atol=2e-2)

    print("KERNEL_OK")
</pallas_src>

<mosaic_0001>
module attributes {stable_mosaic.version = 11 : i64} {
  func.func @_kernel_with_mask(%arg0: i32, %arg1: memref<8x16x32xf32, #tpu.memory_space<vmem>>, %arg2: memref<32x96xbf16, #tpu.memory_space<vmem>>, %arg3: memref<1x96xf32, #tpu.memory_space<vmem>>, %arg4: memref<4x8x32xbf16, #tpu.memory_space<vmem>>, %arg5: memref<1x32xf32, #tpu.memory_space<vmem>>, %arg6: memref<4x128x128xf32, #tpu.memory_space<vmem>>, %arg7: memref<8x16x128xf32, #tpu.memory_space<vmem>>, %arg8: memref<8x16x32xf32, #tpu.memory_space<vmem>>) attributes {dimension_semantics = [#tpu.dimension_semantics<parallel>], iteration_bounds = array<i64: 2>, scalar_prefetch = 0 : i64, scratch_operands = 0 : i64, tpu.core_type = #tpu.core_type<tc>, window_params = [{transform_indices = @transform_0, window_bounds = array<i64: 8, 16, 32>}, {pipeline_mode = #tpu.pipeline_mode<synchronous>, transform_indices = @transform_1, window_bounds = array<i64: 32, 96>}, {pipeline_mode = #tpu.pipeline_mode<synchronous>, transform_indices = @transform_2, window_bounds = array<i64: 1, 96>}, {pipeline_mode = #tpu.pipeline_mode<synchronous>, transform_indices = @transform_3, window_bounds = array<i64: 4, 8, 32>}, {pipeline_mode = #tpu.pipeline_mode<synchronous>, transform_indices = @transform_4, window_bounds = array<i64: 1, 32>}, {pipeline_mode = #tpu.pipeline_mode<synchronous>, transform_indices = @transform_5, window_bounds = array<i64: 4, 128, 128>}, {pipeline_mode = #tpu.pipeline_mode<synchronous>, transform_indices = @transform_6, window_bounds = array<i64: 8, 16, 128>}, {transform_indices = @transform_7, window_bounds = array<i64: 8, 16, 32>}]} {
    %c0 = arith.constant 0 : index
    %c0_0 = arith.constant 0 : index
    %c0_1 = arith.constant 0 : index
    %0 = vector.load %arg1[%c0, %c0_0, %c0_1] : memref<8x16x32xf32, #tpu.memory_space<vmem>>, vector<8x16x32xf32>
    %1 = vector.shape_cast %0 : vector<8x16x32xf32> to vector<128x32xf32>
    %2 = arith.truncf %1 : vector<128x32xf32> to vector<128x32xbf16>
    %c0_2 = arith.constant 0 : index
    %c0_3 = arith.constant 0 : index
    %3 = vector.load %arg2[%c0_2, %c0_3] : memref<32x96xbf16, #tpu.memory_space<vmem>>, vector<32x96xbf16>
    %cst = arith.constant dense<0.000000e+00> : vector<128x96xf32>
    %4 = tpu.matmul %2, %3, %cst {dimension_numbers = #tpu.dot_dimension_numbers<[1], [0], [0], [1], [0, 0, 1, 1], [], []>} : vector<128x32xbf16>, vector<32x96xbf16>, vector<128x96xf32> -> vector<128x96xf32>
    %c0_4 = arith.constant 0 : index
    %c0_5 = arith.constant 0 : index
    %5 = vector.load %arg3[%c0_4, %c0_5] : memref<1x96xf32, #tpu.memory_space<vmem>>, vector<1x96xf32>
    %6 = vector.broadcast %5 : vector<1x96xf32> to vector<128x96xf32>
    %7 = arith.addf %4, %6 : vector<128x96xf32>
    %c0_6 = arith.constant 0 : index
    %c0_7 = arith.constant 0 : index
    %c0_8 = arith.constant 0 : index
    %8 = vector.load %arg7[%c0_6, %c0_7, %c0_8] : memref<8x16x128xf32, #tpu.memory_space<vmem>>, vector<8x16x128xf32>
    %9 = vector.shape_cast %8 : vector<8x16x128xf32> to vector<128x128xf32>
    %cst_9 = arith.constant 0.000000e+00 : f32
    %10 = vector.broadcast %cst_9 : f32 to vector<128x32xf32>
    %11 = vector.extract_strided_slice %7 {offsets = [0, 0], sizes = [128, 8], strides = [1, 1]} : vector<128x96xf32> to vector<128x8xf32>
    %12 = arith.truncf %11 : vector<128x8xf32> to vector<128x8xbf16>
    %13 = vector.extract_strided_slice %7 {offsets = [0, 32], sizes = [128, 8], strides = [1, 1]} : vector<128x96xf32> to vector<128x8xf32>
    %14 = arith.truncf %13 : vector<128x8xf32> to vector<128x8xbf16>
    %15 = vector.extract_strided_slice %7 {offsets = [0, 64], sizes = [128, 8], strides = [1, 1]} : vector<128x96xf32> to vector<128x8xf32>
    %16 = arith.truncf %15 : vector<128x8xf32> to vector<128x8xbf16>
    "tpu.trace_start"() <{level = 10 : i32, message = "md,nd->mn"}> : () -> ()
    %cst_10 = arith.constant dense<0.000000e+00> : vector<128x128xf32>
    %17 = tpu.matmul %12, %14, %cst_10 {dimension_numbers = #tpu.dot_dimension_numbers<[1], [1], [0], [0], [0, 0, 1, 0], [], []>} : vector<128x8xbf16>, vector<128x8xbf16>, vector<128x128xf32> -> vector<128x128xf32>
    "tpu.trace_stop"() : () -> ()
    %c0_11 = arith.constant 0 : index
    %c0_12 = arith.constant 0 : index
    %c0_13 = arith.constant 0 : index
    %18 = vector.load %arg6[%c0_11, %c0_12, %c0_13] : memref<4x128x128xf32, #tpu.memory_space<vmem>>, vector<1x128x128xf32>
    %19 = vector.shape_cast %18 : vector<1x128x128xf32> to vector<128x128xf32>
    %20 = arith.addf %17, %19 : vector<128x128xf32>
    %21 = arith.addf %20, %9 : vector<128x128xf32>
    %cst_14 = arith.constant dense<0xFF800000> : vector<128xf32>
    %22 = vector.multi_reduction <maximumf>, %21, %cst_14 [1] : vector<128x128xf32> to vector<128xf32>
    %23 = vector.shape_cast %22 : vector<128xf32> to vector<128x1xf32>
    %24 = vector.broadcast %23 : vector<128x1xf32> to vector<128x128xf32>
    %25 = arith.subf %21, %24 : vector<128x128xf32>
    %26 = math.exp %25 : vector<128x128xf32>
    %cst_15 = arith.constant dense<0.000000e+00> : vector<128xf32>
    %27 = vector.multi_reduction <add>, %26, %cst_15 [1] : vector<128x128xf32> to vector<128xf32>
    %28 = vector.shape_cast %27 : vector<128xf32> to vector<128x1xf32>
    %29 = tpu.reciprocal %28 {approx = true} : vector<128x1xf32> -> vector<128x1xf32>
    %30 = vector.broadcast %29 : vector<128x1xf32> to vector<128x128xf32>
    %31 = arith.mulf %26, %30 : vector<128x128xf32>
    %32 = arith.truncf %31 : vector<128x128xf32> to vector<128x128xbf16>
    "tpu.trace_start"() <{level = 10 : i32, message = "mn,nd->md"}> : () -> ()
    %cst_16 = arith.constant dense<0.000000e+00> : vector<128x8xf32>
    %33 = tpu.matmul %32, %16, %cst_16 {dimension_numbers = #tpu.dot_dimension_numbers<[1], [0], [0], [1], [0, 0, 1, 1], [], []>} : vector<128x128xbf16>, vector<128x8xbf16>, vector<128x8xf32> -> vector<128x8xf32>
    "tpu.trace_stop"() : () -> ()
    %34 = arith.truncf %33 : vector<128x8xf32> to vector<128x8xbf16>
    %c0_17 = arith.constant 0 : index
    %c0_18 = arith.constant 0 : index
    %c0_19 = arith.constant 0 : index
    %35 = vector.load %arg4[%c0_17, %c0_18, %c0_19] : memref<4x8x32xbf16, #tpu.memory_space<vmem>>, vector<1x8x32xbf16>
    %36 = vector.shape_cast %35 : vector<1x8x32xbf16> to vector<8x32xbf16>
    "tpu.trace_start"() <{level = 10 : i32, message = "md,dc->mc"}> : () -> ()
    %cst_20 = arith.constant dense<0.000000e+00> : vector<128x32xf32>
    %37 = tpu.matmul %34, %36, %cst_20 {dimension_numbers = #tpu.dot_dimension_numbers<[1], [0], [0], [1], [0, 0, 1, 1], [], []>} : vector<128x8xbf16>, vector<8x32xbf16>, vector<128x32xf32> -> vector<128x32xf32>
    "tpu.trace_stop"() : () -> ()
    %38 = arith.addf %10, %37 : vector<128x32xf32>
    %39 = vector.extract_strided_slice %7 {offsets = [0, 8], sizes = [128, 8], strides = [1, 1]} : vector<128x96xf32> to vector<128x8xf32>
    %40 = arith.truncf %39 : vector<128x8xf32> to vector<128x8xbf16>
    %41 = vector.extract_strided_slice %7 {offsets = [0, 40], sizes = [128, 8], strides = [1, 1]} : vector<128x96xf32> to vector<128x8xf32>
    %42 = arith.truncf %41 : vector<128x8xf32> to vector<128x8xbf16>
    %43 = vector.extract_strided_slice %7 {offsets = [0, 72], sizes = [128, 8], strides = [1, 1]} : vector<128x96xf32> to vector<128x8xf32>
    %44 = arith.truncf %43 : vector<128x8xf32> to vector<128x8xbf16>
    "tpu.trace_start"() <{level = 10 : i32, message = "md,nd->mn"}> : () -> ()
    %cst_21 = arith.constant dense<0.000000e+00> : vector<128x128xf32>
    %45 = tpu.matmul %40, %42, %cst_21 {dimension_numbers = #tpu.dot_dimension_numbers<[1], [1], [0], [0], [0, 0, 1, 0], [], []>} : vector<128x8xbf16>, vector<128x8xbf16>, vector<128x128xf32> -> vector<128x128xf32>
    "tpu.trace_stop"() : () -> ()
    %c1 = arith.constant 1 : index
    %c0_22 = arith.constant 0 : index
    %c0_23 = arith.constant 0 : index
    %46 = vector.load %arg6[%c1, %c0_22, %c0_23] : memref<4x128x128xf32, #tpu.memory_space<vmem>>, vector<1x128x128xf32>
    %47 = vector.shape_cast %46 : vector<1x128x128xf32> to vector<128x128xf32>
    %48 = arith.addf %45, %47 : vector<128x128xf32>
    %49 = arith.addf %48, %9 : vector<128x128xf32>
    %cst_24 = arith.constant dense<0xFF800000> : vector<128xf32>
    %50 = vector.multi_reduction <maximumf>, %49, %cst_24 [1] : vector<128x128xf32> to vector<128xf32>
    %51 = vector.shape_cast %50 : vector<128xf32> to vector<128x1xf32>
    %52 = vector.broadcast %51 : vector<128x1xf32> to vector<128x128xf32>
    %53 = arith.subf %49, %52 : vector<128x128xf32>
    %54 = math.exp %53 : vector<128x128xf32>
    %cst_25 = arith.constant dense<0.000000e+00> : vector<128xf32>
    %55 = vector.multi_reduction <add>, %54, %cst_25 [1] : vector<128x128xf32> to vector<128xf32>
    %56 = vector.shape_cast %55 : vector<128xf32> to vector<128x1xf32>
    %57 = tpu.reciprocal %56 {approx = true} : vector<128x1xf32> -> vector<128x1xf32>
    %58 = vector.broadcast %57 : vector<128x1xf32> to vector<128x128xf32>
    %59 = arith.mulf %54, %58 : vector<128x128xf32>
    %60 = arith.truncf %59 : vector<128x128xf32> to vector<128x128xbf16>
    "tpu.trace_start"() <{level = 10 : i32, message = "mn,nd->md"}> : () -> ()
    %cst_26 = arith.constant dense<0.000000e+00> : vector<128x8xf32>
    %61 = tpu.matmul %60, %44, %cst_26 {dimension_numbers = #tpu.dot_dimension_numbers<[1], [0], [0], [1], [0, 0, 1, 1], [], []>} : vector<128x128xbf16>, vector<128x8xbf16>, vector<128x8xf32> -> vector<128x8xf32>
    "tpu.trace_stop"() : () -> ()
    %62 = arith.truncf %61 : vector<128x8xf32> to vector<128x8xbf16>
    %c1_27 = arith.constant 1 : index
    %c0_28 = arith.constant 0 : index
    %c0_29 = arith.constant 0 : index
    %63 = vector.load %arg4[%c1_27, %c0_28, %c0_29] : memref<4x8x32xbf16, #tpu.memory_space<vmem>>, vector<1x8x32xbf16>
    %64 = vector.shape_cast %63 : vector<1x8x32xbf16> to vector<8x32xbf16>
    "tpu.trace_start"() <{level = 10 : i32, message = "md,dc->mc"}> : () -> ()
    %cst_30 = arith.constant dense<0.000000e+00> : vector<128x32xf32>
    %65 = tpu.matmul %62, %64, %cst_30 {dimension_numbers = #tpu.dot_dimension_numbers<[1], [0], [0], [1], [0, 0, 1, 1], [], []>} : vector<128x8xbf16>, vector<8x32xbf16>, vector<128x32xf32> -> vector<128x32xf32>
    "tpu.trace_stop"() : () -> ()
    %66 = arith.addf %38, %65 : vector<128x32xf32>
    %67 = vector.extract_strided_slice %7 {offsets = [0, 16], sizes = [128, 8], strides = [1, 1]} : vector<128x96xf32> to vector<128x8xf32>
    %68 = arith.truncf %67 : vector<128x8xf32> to vector<128x8xbf16>
    %69 = vector.extract_strided_slice %7 {offsets = [0, 48], sizes = [128, 8], strides = [1, 1]} : vector<128x96xf32> to vector<128x8xf32>
    %70 = arith.truncf %69 : vector<128x8xf32> to vector<128x8xbf16>
    %71 = vector.extract_strided_slice %7 {offsets = [0, 80], sizes = [128, 8], strides = [1, 1]} : vector<128x96xf32> to vector<128x8xf32>
    %72 = arith.truncf %71 : vector<128x8xf32> to vector<128x8xbf16>
    "tpu.trace_start"() <{level = 10 : i32, message = "md,nd->mn"}> : () -> ()
    %cst_31 = arith.constant dense<0.000000e+00> : vector<128x128xf32>
    %73 = tpu.matmul %68, %70, %cst_31 {dimension_numbers = #tpu.dot_dimension_numbers<[1], [1], [0], [0], [0, 0, 1, 0], [], []>} : vector<128x8xbf16>, vector<128x8xbf16>, vector<128x128xf32> -> vector<128x128xf32>
    "tpu.trace_stop"() : () -> ()
    %c2 = arith.constant 2 : index
    %c0_32 = arith.constant 0 : index
    %c0_33 = arith.constant 0 : index
    %74 = vector.load %arg6[%c2, %c0_32, %c0_33] : memref<4x128x128xf32, #tpu.memory_space<vmem>>, vector<1x128x128xf32>
    %75 = vector.shape_cast %74 : vector<1x128x128xf32> to vector<128x128xf32>
    %76 = arith.addf %73, %75 : vector<128x128xf32>
    %77 = arith.addf %76, %9 : vector<128x128xf32>
    %cst_34 = arith.constant dense<0xFF800000> : vector<128xf32>
    %78 = vector.multi_reduction <maximumf>, %77, %cst_34 [1] : vector<128x128xf32> to vector<128xf32>
    %79 = vector.shape_cast %78 : vector<128xf32> to vector<128x1xf32>
    %80 = vector.broadcast %79 : vector<128x1xf32> to vector<128x128xf32>
    %81 = arith.subf %77, %80 : vector<128x128xf32>
    %82 = math.exp %81 : vector<128x128xf32>
    %cst_35 = arith.constant dense<0.000000e+00> : vector<128xf32>
    %83 = vector.multi_reduction <add>, %82, %cst_35 [1] : vector<128x128xf32> to vector<128xf32>
    %84 = vector.shape_cast %83 : vector<128xf32> to vector<128x1xf32>
    %85 = tpu.reciprocal %84 {approx = true} : vector<128x1xf32> -> vector<128x1xf32>
    %86 = vector.broadcast %85 : vector<128x1xf32> to vector<128x128xf32>
    %87 = arith.mulf %82, %86 : vector<128x128xf32>
    %88 = arith.truncf %87 : vector<128x128xf32> to vector<128x128xbf16>
    "tpu.trace_start"() <{level = 10 : i32, message = "mn,nd->md"}> : () -> ()
    %cst_36 = arith.constant dense<0.000000e+00> : vector<128x8xf32>
    %89 = tpu.matmul %88, %72, %cst_36 {dimension_numbers = #tpu.dot_dimension_numbers<[1], [0], [0], [1], [0, 0, 1, 1], [], []>} : vector<128x128xbf16>, vector<128x8xbf16>, vector<128x8xf32> -> vector<128x8xf32>
    "tpu.trace_stop"() : () -> ()
    %90 = arith.truncf %89 : vector<128x8xf32> to vector<128x8xbf16>
    %c2_37 = arith.constant 2 : index
    %c0_38 = arith.constant 0 : index
    %c0_39 = arith.constant 0 : index
    %91 = vector.load %arg4[%c2_37, %c0_38, %c0_39] : memref<4x8x32xbf16, #tpu.memory_space<vmem>>, vector<1x8x32xbf16>
    %92 = vector.shape_cast %91 : vector<1x8x32xbf16> to vector<8x32xbf16>
    "tpu.trace_start"() <{level = 10 : i32, message = "md,dc->mc"}> : () -> ()
    %cst_40 = arith.constant dense<0.000000e+00> : vector<128x32xf32>
    %93 = tpu.matmul %90, %92, %cst_40 {dimension_numbers = #tpu.dot_dimension_numbers<[1], [0], [0], [1], [0, 0, 1, 1], [], []>} : vector<128x8xbf16>, vector<8x32xbf16>, vector<128x32xf32> -> vector<128x32xf32>
    "tpu.trace_stop"() : () -> ()
    %94 = arith.addf %66, %93 : vector<128x32xf32>
    %95 = vector.extract_strided_slice %7 {offsets = [0, 24], sizes = [128, 8], strides = [1, 1]} : vector<128x96xf32> to vector<128x8xf32>
    %96 = arith.truncf %95 : vector<128x8xf32> to vector<128x8xbf16>
    %97 = vector.extract_strided_slice %7 {offsets = [0, 56], sizes = [128, 8], strides = [1, 1]} : vector<128x96xf32> to vector<128x8xf32>
    %98 = arith.truncf %97 : vector<128x8xf32> to vector<128x8xbf16>
    %99 = vector.extract_strided_slice %7 {offsets = [0, 88], sizes = [128, 8], strides = [1, 1]} : vector<128x96xf32> to vector<128x8xf32>
    %100 = arith.truncf %99 : vector<128x8xf32> to vector<128x8xbf16>
    "tpu.trace_start"() <{level = 10 : i32, message = "md,nd->mn"}> : () -> ()
    %cst_41 = arith.constant dense<0.000000e+00> : vector<128x128xf32>
    %101 = tpu.matmul %96, %98, %cst_41 {dimension_numbers = #tpu.dot_dimension_numbers<[1], [1], [0], [0], [0, 0, 1, 0], [], []>} : vector<128x8xbf16>, vector<128x8xbf16>, vector<128x128xf32> -> vector<128x128xf32>
    "tpu.trace_stop"() : () -> ()
    %c3 = arith.constant 3 : index
    %c0_42 = arith.constant 0 : index
    %c0_43 = arith.constant 0 : index
    %102 = vector.load %arg6[%c3, %c0_42, %c0_43] : memref<4x128x128xf32, #tpu.memory_space<vmem>>, vector<1x128x128xf32>
    %103 = vector.shape_cast %102 : vector<1x128x128xf32> to vector<128x128xf32>
    %104 = arith.addf %101, %103 : vector<128x128xf32>
    %105 = arith.addf %104, %9 : vector<128x128xf32>
    %cst_44 = arith.constant dense<0xFF800000> : vector<128xf32>
    %106 = vector.multi_reduction <maximumf>, %105, %cst_44 [1] : vector<128x128xf32> to vector<128xf32>
    %107 = vector.shape_cast %106 : vector<128xf32> to vector<128x1xf32>
    %108 = vector.broadcast %107 : vector<128x1xf32> to vector<128x128xf32>
    %109 = arith.subf %105, %108 : vector<128x128xf32>
    %110 = math.exp %109 : vector<128x128xf32>
    %cst_45 = arith.constant dense<0.000000e+00> : vector<128xf32>
    %111 = vector.multi_reduction <add>, %110, %cst_45 [1] : vector<128x128xf32> to vector<128xf32>
    %112 = vector.shape_cast %111 : vector<128xf32> to vector<128x1xf32>
    %113 = tpu.reciprocal %112 {approx = true} : vector<128x1xf32> -> vector<128x1xf32>
    %114 = vector.broadcast %113 : vector<128x1xf32> to vector<128x128xf32>
    %115 = arith.mulf %110, %114 : vector<128x128xf32>
    %116 = arith.truncf %115 : vector<128x128xf32> to vector<128x128xbf16>
    "tpu.trace_start"() <{level = 10 : i32, message = "mn,nd->md"}> : () -> ()
    %cst_46 = arith.constant dense<0.000000e+00> : vector<128x8xf32>
    %117 = tpu.matmul %116, %100, %cst_46 {dimension_numbers = #tpu.dot_dimension_numbers<[1], [0], [0], [1], [0, 0, 1, 1], [], []>} : vector<128x128xbf16>, vector<128x8xbf16>, vector<128x8xf32> -> vector<128x8xf32>
    "tpu.trace_stop"() : () -> ()
    %118 = arith.truncf %117 : vector<128x8xf32> to vector<128x8xbf16>
    %c3_47 = arith.constant 3 : index
    %c0_48 = arith.constant 0 : index
    %c0_49 = arith.constant 0 : index
    %119 = vector.load %arg4[%c3_47, %c0_48, %c0_49] : memref<4x8x32xbf16, #tpu.memory_space<vmem>>, vector<1x8x32xbf16>
    %120 = vector.shape_cast %119 : vector<1x8x32xbf16> to vector<8x32xbf16>
    "tpu.trace_start"() <{level = 10 : i32, message = "md,dc->mc"}> : () -> ()
    %cst_50 = arith.constant dense<0.000000e+00> : vector<128x32xf32>
    %121 = tpu.matmul %118, %120, %cst_50 {dimension_numbers = #tpu.dot_dimension_numbers<[1], [0], [0], [1], [0, 0, 1, 1], [], []>} : vector<128x8xbf16>, vector<8x32xbf16>, vector<128x32xf32> -> vector<128x32xf32>
    "tpu.trace_stop"() : () -> ()
    %122 = arith.addf %94, %121 : vector<128x32xf32>
    %c0_51 = arith.constant 0 : index
    %c0_52 = arith.constant 0 : index
    %123 = vector.load %arg5[%c0_51, %c0_52] : memref<1x32xf32, #tpu.memory_space<vmem>>, vector<1x32xf32>
    %124 = vector.broadcast %123 : vector<1x32xf32> to vector<128x32xf32>
    %125 = arith.addf %122, %124 : vector<128x32xf32>
    %126 = vector.shape_cast %125 : vector<128x32xf32> to vector<8x16x32xf32>
    %c0_53 = arith.constant 0 : index
    %c0_54 = arith.constant 0 : index
    %c0_55 = arith.constant 0 : index
    %127 = vector.load %arg8[%c0_53, %c0_54, %c0_55] : memref<8x16x32xf32, #tpu.memory_space<vmem>>, vector<8x16x32xf32>
    tpu.vector_store %arg8[%c0_53, %c0_54, %c0_55], %126 {strides = array<i32>} : memref<8x16x32xf32, #tpu.memory_space<vmem>>, vector<8x16x32xf32>,
    return
  }
  func.func @transform_0(%arg0: i32) -> (i32, i32, i32) {
    %c0_i32 = arith.constant 0 : i32
    %c0_i32_0 = arith.constant 0 : i32
    %c0_i32_1 = arith.constant 0 : i32
    return %arg0, %c0_i32, %c0_i32_0 : i32, i32, i32
  }
  func.func @transform_1(%arg0: i32) -> (i32, i32) {
    %c0_i32 = arith.constant 0 : i32
    %c0_i32_0 = arith.constant 0 : i32
    %c0_i32_1 = arith.constant 0 : i32
    return %c0_i32, %c0_i32_0 : i32, i32
  }
  func.func @transform_2(%arg0: i32) -> (i32, i32) {
    %c0_i32 = arith.constant 0 : i32
    %c0_i32_0 = arith.constant 0 : i32
    %c0_i32_1 = arith.constant 0 : i32
    return %c0_i32, %c0_i32_0 : i32, i32
  }
  func.func @transform_3(%arg0: i32) -> (i32, i32, i32) {
    %c0_i32 = arith.constant 0 : i32
    %c0_i32_0 = arith.constant 0 : i32
    %c0_i32_1 = arith.constant 0 : i32
    %c0_i32_2 = arith.constant 0 : i32
    return %c0_i32, %c0_i32_0, %c0_i32_1 : i32, i32, i32
  }
  func.func @transform_4(%arg0: i32) -> (i32, i32) {
    %c0_i32 = arith.constant 0 : i32
    %c0_i32_0 = arith.constant 0 : i32
    %c0_i32_1 = arith.constant 0 : i32
    return %c0_i32, %c0_i32_0 : i32, i32
  }
  func.func @transform_5(%arg0: i32) -> (i32, i32, i32) {
    %c0_i32 = arith.constant 0 : i32
    %c0_i32_0 = arith.constant 0 : i32
    %c0_i32_1 = arith.constant 0 : i32
    %c0_i32_2 = arith.constant 0 : i32
    return %c0_i32, %c0_i32_0, %c0_i32_1 : i32, i32, i32
  }
  func.func @transform_6(%arg0: i32) -> (i32, i32, i32) {
    %c0_i32 = arith.constant 0 : i32
    %c0_i32_0 = arith.constant 0 : i32
    %c0_i32_1 = arith.constant 0 : i32
    %c0_i32_2 = arith.constant 0 : i32
    return %c0_i32, %c0_i32_0, %c0_i32_1 : i32, i32, i32
  }
  func.func @transform_7(%arg0: i32) -> (i32, i32, i32) {
    %c0_i32 = arith.constant 0 : i32
    %c0_i32_0 = arith.constant 0 : i32
    %c0_i32_1 = arith.constant 0 : i32
    return %arg0, %c0_i32, %c0_i32_0 : i32, i32, i32
  }
}

</mosaic_0001>

<llo_original>
// kernel: tpu_custom_call.1
$region0: #{tpu_custom_call.1}
  #allocation0 [shape = 'u32[]', space=smem, size = 0x4, offset = 0x4, fixed_abs, tag = 'smem constant byte address 0x4 - core index']
  #allocation1 [shape = 'u32[144,128]{1,0:T(1,128)}', space=vmem, size = 0x12000, scoped, tag = 'internal scratch']
  %s0 = inlined_call_operand.hbm [shape: f32[16,16,32], index: 0, kind: input, shape index: {}]
  %s1 = inlined_call_operand.hbm [shape: bf16[32,96], index: 1, kind: input, shape index: {}]
  %s2 = inlined_call_operand.vmem [shape: f32[1,96], index: 2, kind: input, shape index: {}]
  %s3 = inlined_call_operand.hbm [shape: bf16[4,8,32], index: 3, kind: input, shape index: {}]
  %s4 = inlined_call_operand.vmem [shape: f32[1,32], index: 4, kind: input, shape index: {}]
  %s5 = inlined_call_operand.hbm [shape: f32[4,128,128], index: 5, kind: input, shape index: {}]
  %s6 = inlined_call_operand.hbm [shape: f32[8,16,128], index: 6, kind: input, shape index: {}]
  %s7 = inlined_call_operand.hbm [shape: f32[16,16,32], index: 7, kind: output, shape index: {}]
  %s8 = sld [smem:[#allocation0]]
  $region81: #{tpu_custom_call.1} parent=0
    _
  %s10 = ssub.s32 1, %s8
  %s11 = scalar_select 0, %s10, %s8
  $region1: #{tpu_custom_call.1} parent=0
    #allocation2 [shape = 'u8[131072]{0}', space=vmem, size = 0x20000, scoped, tag = 'input window, operand 0']
    #allocation3 [shape = 's32[2]{0}', space=sflag, size = 0x8, scoped, tag = 'scoped memory for tpu_custom_call.1']
    #allocation4 [shape = 's32[2]{0}', space=sflag, size = 0x8, scoped, tag = 'scoped memory for tpu_custom_call.1']
    #allocation5 [shape = 'u8[8192]{0}', space=vmem, size = 0x2000, scoped, tag = 'input window, operand 1, single buffered']
    #allocation6 [shape = 's32[1]{0}', space=sflag, size = 0x4, scoped, tag = 'scoped memory for tpu_custom_call.1']
    #allocation7 [shape = 'u8[8192]{0}', space=vmem, size = 0x2000, scoped, tag = 'input window, operand 3, single buffered']
    #allocation8 [shape = 'u8[262144]{0}', space=vmem, size = 0x40000, scoped, tag = 'input window, operand 5, single buffered']
    #allocation9 [shape = 's32[1]{0}', space=sflag, size = 0x4, scoped, tag = 'scoped memory for tpu_custom_call.1']
    #allocation10 [shape = 'u8[65536]{0}', space=vmem, size = 0x10000, scoped, tag = 'input window, operand 6, single buffered']
    #allocation11 [shape = 'u8[131072]{0}', space=vmem, size = 0x20000, scoped, tag = 'output window, operand 0']
    %12 = vsyncpa [#allocation3], 0
    %s13 = scalar_lea.sflag [#allocation3], 1
    %14 = vsyncpa %s13, 0
    %15 = vsyncpa [#allocation6], 0
    %16 = vsyncpa [#allocation9], 0
    %17 = vsyncpa [#allocation4], 0
    %s18 = scalar_lea.sflag [#allocation4], 1
    %19 = vsyncpa %s18, 0
    loop: start=0, step=1, limit=4
    $region2: #{tpu_custom_call.1} parent=1 // loop_pre_header
      _
    $region3: #{tpu_custom_call.1} parent=1 // loop_header
      %s21 = sphi 0, %s25
      %p22 = scmp.ge.s32.totalorder %s21, 4
      %s31 = sphi 0, %s33
      %s34 = sphi 0, %s31
      %s35 = sphi 0, %s34
      %s51 = sphi 0, %s35
      %s55 = sphi 0, %s55
      %s57 = sphi 0, %s55
      %s58 = sphi 0, %s57
      %s72 = sphi 0, %s58
      %s76 = sphi 0, %s76
      %s78 = sphi 0, %s76
      %s79 = sphi 0, %s78
      %s93 = sphi 0, %s79
      %s97 = sphi 0, %s97
      %s99 = sphi 0, %s97
      %s100 = sphi 0, %s99
      %s114 = sphi 0, %s100
      %s118 = sphi 0, %s118
      %s120 = sphi 0, %s118
      %s121 = sphi 0, %s120
      %s135 = sphi 0, %s121
      %s139 = sphi 0, %s139
      %s141 = sphi 0, %s139
      %s142 = sphi 0, %s141
      %s156 = sphi 0, %s142
      %s160 = sphi 0, %s160
      %s162 = sphi 0, %s160
      %s163 = sphi 0, %s162
      %s177 = sphi 0, %s163
      %s183 = sphi 0, %s185
      %s186 = sphi 0, %s183
      %s187 = sphi 0, %s186
      %s203 = sphi 0, %s187
    $region4: #{tpu_custom_call.1} parent=1 // loop_header_branch
      %24 = sbr.rel (%p22) target = $region8
    $region5: #{tpu_custom_call.1} parent=1 // loop_body
      %s26 = ssub.s32 %s21, 1
      %s27 = ssub.s32 %s21, 2
      %s28 = sadd.s32 %s21, 1
      %s29 = ssub.s32 %s21, %s28
      %p30 = scmp.eq.s32.totalorder %s29, 0
      %s32 = sadd.s32 %s31, 1
      %s33 = scalar_select %p30, %s31, %s32
      %p36 = pneg %p30
      %p37 = scmp.eq.s32.totalorder %s21, 1
      %p38 = por %p36, %p37
      %p39 = scmp.ne.s32.totalorder %s31, %s34
      %p40 = scmp.eq.s32.totalorder %s21, 0
      %p41 = por %p39, %p40
      %p42 = scmp.ne.s32.totalorder %s31, %s34
      %p43 = scmp.eq.s32.totalorder %s26, 1
      %p44 = por %p42, %p43
      %p45 = scmp.ne.s32.totalorder %s34, %s35
      %p46 = scmp.eq.s32.totalorder %s26, 0
      %p47 = por %p45, %p46
      %p48 = scmp.ne.s32.totalorder %s34, %s35
      %p49 = scmp.eq.s32.totalorder %s27, 1
      %p50 = por %p48, %p49
      %p52 = scmp.ne.s32.totalorder %s35, %s51
      %p53 = scmp.eq.s32.totalorder %s27, 0
      %p54 = por %p52, %p53
      %s56 = sadd.s32 %s55, 1
      %p59 = scmp.eq.s32.totalorder %s21, 1
      %p60 = scmp.ne.s32.totalorder %s55, %s57
      %p61 = scmp.eq.s32.totalorder %s21, 0
      %p62 = por %p60, %p61
      %p63 = scmp.ne.s32.totalorder %s55, %s57
      %p64 = scmp.eq.s32.totalorder %s26, 1
      %p65 = por %p63, %p64
      %p66 = scmp.ne.s32.totalorder %s57, %s58
      %p67 = scmp.eq.s32.totalorder %s26, 0
      %p68 = por %p66, %p67
      %p69 = scmp.ne.s32.totalorder %s57, %s58
      %p70 = scmp.eq.s32.totalorder %s27, 1
      %p71 = por %p69, %p70
      %p73 = scmp.ne.s32.totalorder %s58, %s72
      %p74 = scmp.eq.s32.totalorder %s27, 0
      %p75 = por %p73, %p74
      %s77 = sadd.s32 %s76, 1
      %p80 = scmp.eq.s32.totalorder %s21, 1
      %p81 = scmp.ne.s32.totalorder %s76, %s78
      %p82 = scmp.eq.s32.totalorder %s21, 0
      %p83 = por %p81, %p82
      %p84 = scmp.ne.s32.totalorder %s76, %s78
      %p85 = scmp.eq.s32.totalorder %s26, 1
      %p86 = por %p84, %p85
      %p87 = scmp.ne.s32.totalorder %s78, %s79
      %p88 = scmp.eq.s32.totalorder %s26, 0
      %p89 = por %p87, %p88
      %p90 = scmp.ne.s32.totalorder %s78, %s79
      %p91 = scmp.eq.s32.totalorder %s27, 1
      %p92 = por %p90, %p91
      %p94 = scmp.ne.s32.totalorder %s79, %s93
      %p95 = scmp.eq.s32.totalorder %s27, 0
      %p96 = por %p94, %p95
      %s98 = sadd.s32 %s97, 1
      %p101 = scmp.eq.s32.totalorder %s21, 1
      %p102 = scmp.ne.s32.totalorder %s97, %s99
      %p103 = scmp.eq.s32.totalorder %s21, 0
      %p104 = por %p102, %p103
      %p105 = scmp.ne.s32.totalorder %s97, %s99
      %p106 = scmp.eq.s32.totalorder %s26, 1
      %p107 = por %p105, %p106
      %p108 = scmp.ne.s32.totalorder %s99, %s100
      %p109 = scmp.eq.s32.totalorder %s26, 0
      %p110 = por %p108, %p109
      %p111 = scmp.ne.s32.totalorder %s99, %s100
      %p112 = scmp.eq.s32.totalorder %s27, 1
      %p113 = por %p111, %p112
      %p115 = scmp.ne.s32.totalorder %s100, %s114
      %p116 = scmp.eq.s32.totalorder %s27, 0
      %p117 = por %p115, %p116
      %s119 = sadd.s32 %s118, 1
      %p122 = scmp.eq.s32.totalorder %s21, 1
      %p123 = scmp.ne.s32.totalorder %s118, %s120
      %p124 = scmp.eq.s32.totalorder %s21, 0
      %p125 = por %p123, %p124
      %p126 = scmp.ne.s32.totalorder %s118, %s120
      %p127 = scmp.eq.s32.totalorder %s26, 1
      %p128 = por %p126, %p127
      %p129 = scmp.ne.s32.totalorder %s120, %s121
      %p130 = scmp.eq.s32.totalorder %s26, 0
      %p131 = por %p129, %p130
      %p132 = scmp.ne.s32.totalorder %s120, %s121
      %p133 = scmp.eq.s32.totalorder %s27, 1
      %p134 = por %p132, %p133
      %p136 = scmp.ne.s32.totalorder %s121, %s135
      %p137 = scmp.eq.s32.totalorder %s27, 0
      %p138 = por %p136, %p137
      %s140 = sadd.s32 %s139, 1
      %p143 = scmp.eq.s32.totalorder %s21, 1
      %p144 = scmp.ne.s32.totalorder %s139, %s141
      %p145 = scmp.eq.s32.totalorder %s21, 0
      %p146 = por %p144, %p145
      %p147 = scmp.ne.s32.totalorder %s139, %s141
      %p148 = scmp.eq.s32.totalorder %s26, 1
      %p149 = por %p147, %p148
      %p150 = scmp.ne.s32.totalorder %s141, %s142
      %p151 = scmp.eq.s32.totalorder %s26, 0
      %p152 = por %p150, %p151
      %p153 = scmp.ne.s32.totalorder %s141, %s142
      %p154 = scmp.eq.s32.totalorder %s27, 1
      %p155 = por %p153, %p154
      %p157 = scmp.ne.s32.totalorder %s142, %s156
      %p158 = scmp.eq.s32.totalorder %s27, 0
      %p159 = por %p157, %p158
      %s161 = sadd.s32 %s160, 1
      %p164 = scmp.eq.s32.totalorder %s21, 1
      %p165 = scmp.ne.s32.totalorder %s160, %s162
      %p166 = scmp.eq.s32.totalorder %s21, 0
      %p167 = por %p165, %p166
      %p168 = scmp.ne.s32.totalorder %s160, %s162
      %p169 = scmp.eq.s32.totalorder %s26, 1
      %p170 = por %p168, %p169
      %p171 = scmp.ne.s32.totalorder %s162, %s163
      %p172 = scmp.eq.s32.totalorder %s26, 0
      %p173 = por %p171, %p172
      %p174 = scmp.ne.s32.totalorder %s162, %s163
      %p175 = scmp.eq.s32.totalorder %s27, 1
      %p176 = por %p174, %p175
      %p178 = scmp.ne.s32.totalorder %s163, %s177
      %p179 = scmp.eq.s32.totalorder %s27, 0
      %p180 = por %p178, %p179
      %s181 = ssub.s32 %s21, %s28
      %p182 = scmp.eq.s32.totalorder %s181, 0
      %s184 = sadd.s32 %s183, 1
      %s185 = scalar_select %p182, %s183, %s184
      %p188 = pneg %p182
      %p189 = scmp.eq.s32.totalorder %s21, 1
      %p190 = por %p188, %p189
      %p191 = scmp.ne.s32.totalorder %s183, %s186
      %p192 = scmp.eq.s32.totalorder %s21, 0
      %p193 = por %p191, %p192
      %p194 = scmp.ne.s32.totalorder %s183, %s186
      %p195 = scmp.eq.s32.totalorder %s26, 1
      %p196 = por %p194, %p195
      %p197 = scmp.ne.s32.totalorder %s186, %s187
      %p198 = scmp.eq.s32.totalorder %s26, 0
      %p199 = por %p197, %p198
      %p200 = scmp.ne.s32.totalorder %s186, %s187
      %p201 = scmp.eq.s32.totalorder %s27, 1
      %p202 = por %p200, %p201
      %p204 = scmp.ne.s32.totalorder %s187, %s203
      %p205 = scmp.eq.s32.totalorder %s27, 0
      %p206 = por %p204, %p205
      %p207 = scmp.le.s32.totalorder 1, %s21
      %p208 = scmp.lt.s32.totalorder %s21, 3
      %p209 = pnand %p207, %p208
      %p210 = pneg %p209
      // Predicated region
      $region9: #{tpu_custom_call.1} parent=5 // pred_check
        _
      $region10: #{tpu_custom_call.1} parent=5 // pred_check_branch
        %212 = sbr.rel (%p209) target = $region12
      $region11: #{tpu_custom_call.1} parent=5 // pred_region
        %s213 = ssub.s32 %s21, 1
        // Predicated region
        $region13: #{tpu_custom_call.1} parent=11 // pred_check
          %p214 = pneg %p68
        $region14: #{tpu_custom_call.1} parent=11 // pred_check_branch
          %216 = sbr.rel (%p214) target = $region16
        $region15: #{tpu_custom_call.1} parent=11 // pred_region
          %s218 = ssub.s32 256, 256
          %219 = vsyncadd [#allocation6], %s218
          %s220 = sshll.u32 [#allocation5], 4
          %s221 = int_to_ptr.vmem [resolvable:$true] %s220
          %226 = dma.hbm_to_vmem [thread:$0]  %s1, 256, %s221, [#allocation6], 64, 64, 4
        $region16: #{tpu_custom_call.1} parent=11 // pred_fallthru
          _
        // Predicated region
        $region17: #{tpu_custom_call.1} parent=11 // pred_check
          %p227 = pneg %p89
        $region18: #{tpu_custom_call.1} parent=11 // pred_check_branch
          %229 = sbr.rel (%p227) target = $region20
        $region19: #{tpu_custom_call.1} parent=11 // pred_region
          _
        $region20: #{tpu_custom_call.1} parent=11 // pred_fallthru
          _
        // Predicated region
        $region21: #{tpu_custom_call.1} parent=11 // pred_check
          %p230 = pneg %p110
        $region22: #{tpu_custom_call.1} parent=11 // pred_check_branch
          %232 = sbr.rel (%p230) target = $region24
        $region23: #{tpu_custom_call.1} parent=11 // pred_region
          %s234 = ssub.s32 256, 256
          %235 = vsyncadd [#allocation6], %s234
          %s236 = sshll.u32 [#allocation7], 4
          %s237 = int_to_ptr.vmem [resolvable:$true] %s236
          %242 = dma.hbm_to_vmem [thread:$0]  %s3, 256, %s237, [#allocation6], 64, 64, 4
        $region24: #{tpu_custom_call.1} parent=11 // pred_fallthru
          _
        // Predicated region
        $region25: #{tpu_custom_call.1} parent=11 // pred_check
          %p243 = pneg %p131
        $region26: #{tpu_custom_call.1} parent=11 // pred_check_branch
          %245 = sbr.rel (%p243) target = $region28
        $region27: #{tpu_custom_call.1} parent=11 // pred_region
          _
        $region28: #{tpu_custom_call.1} parent=11 // pred_fallthru
          _
        // Predicated region
        $region29: #{tpu_custom_call.1} parent=11 // pred_check
          %p246 = pneg %p152
        $region30: #{tpu_custom_call.1} parent=11 // pred_check_branch
          %248 = sbr.rel (%p246) target = $region32
        $region31: #{tpu_custom_call.1} parent=11 // pred_region
          %s250 = ssub.s32 8192, 8192
          %251 = vsyncadd [#allocation9], %s250
          %s252 = sshll.u32 [#allocation8], 4
          %s253 = int_to_ptr.vmem [resolvable:$true] %s252
          %258 = dma.hbm_to_vmem [thread:$0]  %s5, 8192, %s253, [#allocation9], 128, 128, 8
        $region32: #{tpu_custom_call.1} parent=11 // pred_fallthru
          _
        // Predicated region
        $region33: #{tpu_custom_call.1} parent=11 // pred_check
          %p259 = pneg %p173
        $region34: #{tpu_custom_call.1} parent=11 // pred_check_branch
          %261 = sbr.rel (%p259) target = $region36
        $region35: #{tpu_custom_call.1} parent=11 // pred_region
          %s263 = ssub.s32 2048, 2048
          %264 = vsyncadd [#allocation9], %s263
          %s265 = sshll.u32 [#allocation10], 4
          %s266 = int_to_ptr.vmem [resolvable:$true] %s265
          %271 = dma.hbm_to_vmem [thread:$0]  %s6, 2048, %s266, [#allocation9], 128, 128, 8
        $region36: #{tpu_custom_call.1} parent=11 // pred_fallthru
          _
      $region12: #{tpu_custom_call.1} parent=5 // pred_fallthru
        _
      %p272 = scmp.lt.s32.totalorder %s21, 2
      // Predicated region
      $region37: #{tpu_custom_call.1} parent=5 // pred_check
        %p273 = pneg %p272
      $region38: #{tpu_custom_call.1} parent=5 // pred_check_branch
        %275 = sbr.rel (%p273) target = $region40
      $region39: #{tpu_custom_call.1} parent=5 // pred_region
        // Predicated region
        $region41: #{tpu_custom_call.1} parent=39 // pred_check
          %p276 = pneg %p41
        $region42: #{tpu_custom_call.1} parent=39 // pred_check_branch
          %278 = sbr.rel (%p276) target = $region44
        $region43: #{tpu_custom_call.1} parent=39 // pred_region
          %s279 = sand.u32 %s31, 1
          %s280 = scalar_lea.sflag [#allocation3], %s279
          %s281 = sand.u32 %s31, 1
          %s282 = smul.addr %s281, 128
          %s283 = scalar_lea.vmem [#allocation2], %s282
          %s284 = smul.u32 8, %s21
          %s286 = ssub.s32 2048, 2048
          %287 = vsyncadd %s280, %s286
          %s288 = smul.addr %s284, 2
          %s289 = smul.addr %s288, 128
          %s290 = scalar_lea.hbm %s0, %s289
          %s291 = sshll.u32 %s283, 4
          %s292 = int_to_ptr.vmem [resolvable:$true] %s291
          %297 = dma.hbm_to_vmem [thread:$0]  %s290, 2048, %s292, %s280, 128, 128, 8
        $region44: #{tpu_custom_call.1} parent=39 // pred_fallthru
          _
      $region40: #{tpu_custom_call.1} parent=5 // pred_fallthru
        _
      %p298 = scmp.le.s32.totalorder 1, %s21
      %p299 = scmp.lt.s32.totalorder %s21, 3
      %p300 = pnand %p298, %p299
      %p301 = pneg %p300
      // Predicated region
      $region45: #{tpu_custom_call.1} parent=5 // pred_check
        _
      $region46: #{tpu_custom_call.1} parent=5 // pred_check_branch
        %303 = sbr.rel (%p300) target = $region48
      $region47: #{tpu_custom_call.1} parent=5 // pred_region
        %s304 = ssub.s32 %s21, 1
        %s305 = sand.u32 %s34, 1
        %s306 = scalar_lea.sflag [#allocation3], %s305
        %s307 = sand.u32 %s34, 1
        %s308 = smul.addr %s307, 128
        %s309 = scalar_lea.vmem [#allocation2], %s308
        // Predicated region
        $region49: #{tpu_custom_call.1} parent=47 // pred_check
          %p310 = pneg %p47
        $region50: #{tpu_custom_call.1} parent=47 // pred_check_branch
          %312 = sbr.rel (%p310) target = $region52
        $region51: #{tpu_custom_call.1} parent=47 // pred_region
          %313 = dma.done %s306, 2048
        $region52: #{tpu_custom_call.1} parent=47 // pred_fallthru
          _
        // Predicated region
        $region53: #{tpu_custom_call.1} parent=47 // pred_check
          %p314 = pneg %p68
        $region54: #{tpu_custom_call.1} parent=47 // pred_check_branch
          %316 = sbr.rel (%p314) target = $region56
        $region55: #{tpu_custom_call.1} parent=47 // pred_region
          %317 = dma.done [#allocation6], 256
        $region56: #{tpu_custom_call.1} parent=47 // pred_fallthru
          _
        // Predicated region
        $region57: #{tpu_custom_call.1} parent=47 // pred_check
          %p318 = pneg %p110
        $region58: #{tpu_custom_call.1} parent=47 // pred_check_branch
          %320 = sbr.rel (%p318) target = $region60
        $region59: #{tpu_custom_call.1} parent=47 // pred_region
          %321 = dma.done [#allocation6], 256
        $region60: #{tpu_custom_call.1} parent=47 // pred_fallthru
          _
        // Predicated region
        $region61: #{tpu_custom_call.1} parent=47 // pred_check
          %p322 = pneg %p152
        $region62: #{tpu_custom_call.1} parent=47 // pred_check_branch
          %324 = sbr.rel (%p322) target = $region64
        $region63: #{tpu_custom_call.1} parent=47 // pred_region
          %325 = dma.done [#allocation9], 8192
        $region64: #{tpu_custom_call.1} parent=47 // pred_fallthru
          _
        // Predicated region
        $region65: #{tpu_custom_call.1} parent=47 // pred_check
          %p326 = pneg %p173
        $region66: #{tpu_custom_call.1} parent=47 // pred_check_branch
          %328 = sbr.rel (%p326) target = $region68
        $region67: #{tpu_custom_call.1} parent=47 // pred_region
          %329 = dma.done [#allocation9], 2048
        $region68: #{tpu_custom_call.1} parent=47 // pred_fallthru
          _
        %s330 = sand.u32 %s34, 1
        %s331 = scalar_lea.sflag [#allocation3], %s330
        %s332 = sand.u32 %s34, 1
        %s333 = smul.addr %s332, 128
        %s334 = scalar_lea.vmem [#allocation2], %s333
        %p335 = pneg %p47
        %p336 = pneg %p44
        %p337 = pneg %p68
        %p338 = pneg %p65
        %p339 = pneg %p89
        %p340 = pneg %p86
        %p341 = pneg %p110
        %p342 = pneg %p107
        %p343 = pneg %p131
        %p344 = pneg %p128
        %p345 = pneg %p152
        %p346 = pneg %p149
        %p347 = pneg %p173
        %p348 = pneg %p170
        %p349 = pneg %p199
        %p350 = pneg %p196
        %s351 = sand.u32 %s186, 1
        %s352 = scalar_lea.sflag [#allocation4], %s351
        %s353 = sand.u32 %s186, 1
        %s354 = smul.addr %s353, 128
        %s355 = scalar_lea.vmem [#allocation11], %s354
        %s356 = smul.u32 8, %s26
        %s357 = smul.u32 8, %s26
        %v359 = vld [vmem:[%s309] sm:$0xff]
        %v360 = vld [vmem:[%s309 + $0x8] sm:$0xff]
        %v361 = vld [vmem:[%s309 + $0x10] sm:$0xff]
        %v362 = vld [vmem:[%s309 + $0x18] sm:$0xff]
        %v363 = vld [vmem:[%s309 + $0x20] sm:$0xff]
        %v364 = vld [vmem:[%s309 + $0x28] sm:$0xff]
        %v365 = vld [vmem:[%s309 + $0x30] sm:$0xff]
        %v366 = vld [vmem:[%s309 + $0x38] sm:$0xff]
        %v367 = vld [vmem:[%s309 + $0x40] sm:$0xff]
        %v368 = vld [vmem:[%s309 + $0x48] sm:$0xff]
        %v369 = vld [vmem:[%s309 + $0x50] sm:$0xff]
        %v370 = vld [vmem:[%s309 + $0x58] sm:$0xff]
        %v371 = vld [vmem:[%s309 + $0x60] sm:$0xff]
        %v372 = vld [vmem:[%s309 + $0x68] sm:$0xff]
        %v373 = vld [vmem:[%s309 + $0x70] sm:$0xff]
        %v374 = vld [vmem:[%s309 + $0x78] sm:$0xff]
        %v375 = vpack.c.bf16 %v360, %v359
        %v376 = vpack.c.bf16 %v362, %v361
        %v377 = vpack.c.bf16 %v364, %v363
        %v378 = vpack.c.bf16 %v366, %v365
        %v379 = vpack.c.bf16 %v368, %v367
        %v380 = vpack.c.bf16 %v370, %v369
        %v381 = vpack.c.bf16 %v372, %v371
        %v382 = vpack.c.bf16 %v374, %v373
        %v383 = vld [vmem:[#allocation5] sm:$0xf]
        %v384 = vld [vmem:[#allocation5 + $0x4] sm:$0xf]
        %v385 = vld [vmem:[#allocation5 + $0x8] sm:$0xf]
        %v386 = vld [vmem:[#allocation5 + $0xc] sm:$0xf]
        %v387 = vld [vmem:[%s2] sm:$0x1]
        %v389 = vlaneseq
        %v390 = vshrl.u32 %v389, 7
        %v391 = vsub.s32 0, %v390
        %v392 = vrot.slane %v387, %v391
        %v398 = vunpack.c.l.b16 %v383
        %v399 = vunpack.c.l.b16 %v384
        %v400 = vunpack.c.l.b16 %v385
        %v401 = vunpack.c.l.b16 %v386
        %v402 = vpack.c.b16 %v399, %v398
        %v403 = vpack.c.b16 %v401, %v400
        %vm406 = vcmask 261120
        %v408 = vsel %vm406, %v375, 0
        %v411 = vsel %vm406, %v376, 0
        %v414 = vsel %vm406, %v377, 0
        %v417 = vsel %vm406, %v378, 0
        %v420 = vsel %vm406, %v379, 0
        %v423 = vsel %vm406, %v380, 0
        %v426 = vsel %vm406, %v381, 0
        %v429 = vsel %vm406, %v382, 0
        %431 = vmatprep.subr.bf16.mxu0 0
        %432 = vmatpush1.bf16.msra.mxu0 %v402
        %433 = vmatprep.subr.bf16.mxu0 0
        %434 = vmatpush1.bf16.msra.mxu0 %v403
        %435 = vmatprep.subr.bf16.mxu0 0
        %436 = vmatpush1.bf16.msra.mxu0 0
        %437 = vmatprep.subr.bf16.mxu0 0
        %438 = vmatpush1.bf16.msra.mxu0 0
        %439 = vmatprep.subr.bf16.mxu0 0
        %440 = vmatpush1.bf16.msra.mxu0 0
        %441 = vmatprep.subr.bf16.mxu0 0
        %442 = vmatpush1.bf16.msra.mxu0 0
        %443 = vmatprep.subr.bf16.mxu0 0
        %444 = vmatpush1.bf16.msra.mxu0 0
        %445 = vmatprep.subr.bf16.mxu0 0
        %446 = vmatpush1.bf16.msra.mxu0 0
        %447 = vmatprep.subr.bf16.mxu0 0
        %448 = vmatpush1.bf16.msra.mxu0 0
        %449 = vmatprep.subr.bf16.mxu0 0
        %450 = vmatpush1.bf16.msra.mxu0 0
        %451 = vmatprep.subr.bf16.mxu0 0
        %452 = vmatpush1.bf16.msra.mxu0 0
        %453 = vmatprep.subr.bf16.mxu0 0
        %454 = vmatpush1.bf16.msra.mxu0 0
        %455 = vmatprep.subr.bf16.mxu0 0
        %456 = vmatpush1.bf16.msra.mxu0 0
        %457 = vmatprep.subr.bf16.mxu0 0
        %458 = vmatpush1.bf16.msra.mxu0 0
        %459 = vmatprep.subr.bf16.mxu0 0
        %460 = vmatpush1.bf16.msra.mxu0 0
        %461 = vmatprep.subr.bf16.mxu0 0
        %462 = vmatpush1.bf16.msra.mxu0 0
        %463 = vmatprep.mubr.bf16.mxu0 0
        %464 = vmatmul.mubr.bf16.gmra.mrb[0].mxu0 %v408
        %v465 = vpop.f32.mrb[0].mxu0
        %v466 = vadd.f32 %v392, %v465
        %v467 = vpop.f32.mrb[0].mxu0
        %v468 = vpop.f32.mrb[0].mxu0
        %v469 = vadd.f32 %v392, %v468
        %v470 = vpop.f32.mrb[0].mxu0
        %471 = vmatprep.mubr.bf16.mxu0 0
        %472 = vmatmul.mubr.bf16.gmra.mrb[0].mxu0 %v411
        %v473 = vpop.f32.mrb[0].mxu0
        %v474 = vadd.f32 %v392, %v473
        %v475 = vpop.f32.mrb[0].mxu0
        %v476 = vpop.f32.mrb[0].mxu0
        %v477 = vadd.f32 %v392, %v476
        %v478 = vpop.f32.mrb[0].mxu0
        %479 = vmatprep.mubr.bf16.mxu0 0
        %480 = vmatmul.mubr.bf16.gmra.mrb[0].mxu0 %v414
        %v481 = vpop.f32.mrb[0].mxu0
        %v482 = vadd.f32 %v392, %v481
        %v483 = vpop.f32.mrb[0].mxu0
        %v484 = vpop.f32.mrb[0].mxu0
        %v485 = vadd.f32 %v392, %v484
        %v486 = vpop.f32.mrb[0].mxu0
        %487 = vmatprep.mubr.bf16.mxu0 0
        %488 = vmatmul.mubr.bf16.gmra.mrb[0].mxu0 %v417
        %v489 = vpop.f32.mrb[0].mxu0
        %v490 = vadd.f32 %v392, %v489
        %v491 = vpop.f32.mrb[0].mxu0
        %v492 = vpop.f32.mrb[0].mxu0
        %v493 = vadd.f32 %v392, %v492
        %v494 = vpop.f32.mrb[0].mxu0
        %495 = vmatprep.mubr.bf16.mxu0 0
        %496 = vmatmul.mubr.bf16.gmra.mrb[0].mxu0 %v420
        %v497 = vpop.f32.mrb[0].mxu0
        %v498 = vadd.f32 %v392, %v497
        %v499 = vpop.f32.mrb[0].mxu0
        %v500 = vpop.f32.mrb[0].mxu0
        %v501 = vadd.f32 %v392, %v500
        %v502 = vpop.f32.mrb[0].mxu0
        %503 = vmatprep.mubr.bf16.mxu0 0
        %504 = vmatmul.mubr.bf16.gmra.mrb[0].mxu0 %v423
        %v505 = vpop.f32.mrb[0].mxu0
        %v506 = vadd.f32 %v392, %v505
        %v507 = vpop.f32.mrb[0].mxu0
        %v508 = vpop.f32.mrb[0].mxu0
        %v509 = vadd.f32 %v392, %v508
        %v510 = vpop.f32.mrb[0].mxu0
        %511 = vmatprep.mubr.bf16.mxu0 0
        %512 = vmatmul.mubr.bf16.gmra.mrb[0].mxu0 %v426
        %v513 = vpop.f32.mrb[0].mxu0
        %v514 = vadd.f32 %v392, %v513
        %v515 = vpop.f32.mrb[0].mxu0
        %v516 = vpop.f32.mrb[0].mxu0
        %v517 = vadd.f32 %v392, %v516
        %v518 = vpop.f32.mrb[0].mxu0
        %519 = vmatprep.mubr.bf16.mxu0 0
        %520 = vmatmul.mubr.bf16.gmra.mrb[0].mxu0 %v429
        %v521 = vpop.f32.mrb[0].mxu0
        %v522 = vadd.f32 %v392, %v521
        %v523 = vpop.f32.mrb[0].mxu0
        %v524 = vpop.f32.mrb[0].mxu0
        %v525 = vadd.f32 %v392, %v524
        %v526 = vpop.f32.mrb[0].mxu0
        %527 = vdwg.mxu0
        %v528 = vld [vmem:[#allocation10] sm:$0xff]
        %v529 = vld [vmem:[#allocation10 + $0x8] sm:$0xff]
        %v530 = vld [vmem:[#allocation10 + $0x10] sm:$0xff]
        %v531 = vld [vmem:[#allocation10 + $0x18] sm:$0xff]
        %v532 = vld [vmem:[#allocation10 + $0x20] sm:$0xff]
        %v533 = vld [vmem:[#allocation10 + $0x28] sm:$0xff]
        %v534 = vld [vmem:[#allocation10 + $0x30] sm:$0xff]
        %v535 = vld [vmem:[#allocation10 + $0x38] sm:$0xff]
        %v536 = vld [vmem:[#allocation10 + $0x40] sm:$0xff]
        %v537 = vld [vmem:[#allocation10 + $0x48] sm:$0xff]
        %v538 = vld [vmem:[#allocation10 + $0x50] sm:$0xff]
        %v539 = vld [vmem:[#allocation10 + $0x58] sm:$0xff]
        %v540 = vld [vmem:[#allocation10 + $0x60] sm:$0xff]
        %v541 = vld [vmem:[#allocation10 + $0x68] sm:$0xff]
        %v542 = vld [vmem:[#allocation10 + $0x70] sm:$0xff]
        %v543 = vld [vmem:[#allocation10 + $0x78] sm:$0xff]
        %v544 = vpack.c.bf16 %v469, %v466
        %v545 = vpack.c.bf16 %v477, %v474
        %v546 = vpack.c.bf16 %v485, %v482
        %v547 = vpack.c.bf16 %v493, %v490
        %v548 = vpack.c.bf16 %v501, %v498
        %v549 = vpack.c.bf16 %v509, %v506
        %v550 = vpack.c.bf16 %v517, %v514
        %v551 = vpack.c.bf16 %v525, %v522
        %v552 = vld [vmem:[#allocation8] sm:$0xff]
        %v553 = vld [vmem:[#allocation8 + $0x8] sm:$0xff]
        %v554 = vld [vmem:[#allocation8 + $0x10] sm:$0xff]
        %v555 = vld [vmem:[#allocation8 + $0x18] sm:$0xff]
        %v556 = vld [vmem:[#allocation8 + $0x20] sm:$0xff]
        %v557 = vld [vmem:[#allocation8 + $0x28] sm:$0xff]
        %v558 = vld [vmem:[#allocation8 + $0x30] sm:$0xff]
        %v559 = vld [vmem:[#allocation8 + $0x38] sm:$0xff]
        %v560 = vld [vmem:[#allocation8 + $0x40] sm:$0xff]
        %v561 = vld [vmem:[#allocation8 + $0x48] sm:$0xff]
        %v562 = vld [vmem:[#allocation8 + $0x50] sm:$0xff]
        %v563 = vld [vmem:[#allocation8 + $0x58] sm:$0xff]
        %v564 = vld [vmem:[#allocation8 + $0x60] sm:$0xff]
        %v565 = vld [vmem:[#allocation8 + $0x68] sm:$0xff]
        %v566 = vld [vmem:[#allocation8 + $0x70] sm:$0xff]
        %v567 = vld [vmem:[#allocation8 + $0x78] sm:$0xff]
        %576 = vrot.lane.b32.xlu0 %v544, 96
        %v577 = vpop.permute.xlu0 %576
        %578 = vrot.lane.b32.xlu0 %v545, 96
        %v579 = vpop.permute.xlu0 %578
        %580 = vrot.lane.b32.xlu0 %v546, 96
        %v581 = vpop.permute.xlu0 %580
        %582 = vrot.lane.b32.xlu0 %v547, 96
        %v583 = vpop.permute.xlu0 %582
        %584 = vrot.lane.b32.xlu0 %v548, 96
        %v585 = vpop.permute.xlu0 %584
        %586 = vrot.lane.b32.xlu0 %v549, 96
        %v587 = vpop.permute.xlu0 %586
        %588 = vrot.lane.b32.xlu0 %v550, 96
        %v589 = vpop.permute.xlu0 %588
        %590 = vrot.lane.b32.xlu0 %v551, 96
        %v591 = vpop.permute.xlu0 %590
        %vm592 = vcmask 64512
        %v594 = vsel %vm592, %v544, 0
        %v597 = vsel %vm592, %v545, 0
        %v600 = vsel %vm592, %v546, 0
        %v603 = vsel %vm592, %v547, 0
        %v606 = vsel %vm592, %v548, 0
        %v609 = vsel %vm592, %v549, 0
        %v612 = vsel %vm592, %v550, 0
        %v615 = vsel %vm592, %v551, 0
        %v618 = vsel %vm592, %v577, 0
        %v621 = vsel %vm592, %v579, 0
        %v624 = vsel %vm592, %v581, 0
        %v627 = vsel %vm592, %v583, 0
        %v630 = vsel %vm592, %v585, 0
        %v633 = vsel %vm592, %v587, 0
        %v636 = vsel %vm592, %v589, 0
        %v639 = vsel %vm592, %v591, 0
        %641 = vmatprep.subr.bf16.mxu0 0
        %642 = vmatpush1.bf16.xpose.msra.mxu0 %v618
        %643 = vmatprep.subr.bf16.mxu0 0
        %644 = vmatpush1.bf16.xpose.msra.mxu0 %v621
        %645 = vmatprep.subr.bf16.mxu0 0
        %646 = vmatpush1.bf16.xpose.msra.mxu0 %v624
        %647 = vmatprep.subr.bf16.mxu0 0
        %648 = vmatpush1.bf16.xpose.msra.mxu0 %v627
        %649 = vmatprep.subr.bf16.mxu0 0
        %650 = vmatpush1.bf16.xpose.msra.mxu0 %v630
        %651 = vmatprep.subr.bf16.mxu0 0
        %652 = vmatpush1.bf16.xpose.msra.mxu0 %v633
        %653 = vmatprep.subr.bf16.mxu0 0
        %654 = vmatpush1.bf16.xpose.msra.mxu0 %v636
        %655 = vmatprep.subr.bf16.mxu0 0
        %656 = vmatpush1.bf16.xpose.msra.mxu0 %v639
        %657 = vmatprep.subr.bf16.mxu0 0
        %658 = vmatpush1.bf16.xpose.msra.mxu0 0
        %659 = vmatprep.subr.bf16.mxu0 0
        %660 = vmatpush1.bf16.xpose.msra.mxu0 0
        %661 = vmatprep.subr.bf16.mxu0 0
        %662 = vmatpush1.bf16.xpose.msra.mxu0 0
        %663 = vmatprep.subr.bf16.mxu0 0
        %664 = vmatpush1.bf16.xpose.msra.mxu0 0
        %665 = vmatprep.subr.bf16.mxu0 0
        %666 = vmatpush1.bf16.xpose.msra.mxu0 0
        %667 = vmatprep.subr.bf16.mxu0 0
        %668 = vmatpush1.bf16.xpose.msra.mxu0 0
        %669 = vmatprep.subr.bf16.mxu0 0
        %670 = vmatpush1.bf16.xpose.msra.mxu0 0
        %671 = vmatprep.subr.bf16.mxu0 0
        %672 = vmatpush1.bf16.xpose.msra.mxu0 0
        %673 = vmatprep.mubr.bf16.mxu0 0
        %674 = vmatmul.mubr.bf16.gmra.mrb[0].mxu0 %v594
        %v675 = vpop.f32.mrb[0].mxu0
        %v676 = vadd.f32 %v552, %v675
        %v677 = vpop.f32.mrb[0].mxu0
        %v678 = vpop.f32.mrb[0].mxu0
        %v679 = vadd.f32 %v553, %v678
        %v680 = vpop.f32.mrb[0].mxu0
        %681 = vmatprep.mubr.bf16.mxu0 0
        %682 = vmatmul.mubr.bf16.gmra.mrb[0].mxu0 %v597
        %v683 = vpop.f32.mrb[0].mxu0
        %v684 = vadd.f32 %v554, %v683
        %v685 = vpop.f32.mrb[0].mxu0
        %v686 = vpop.f32.mrb[0].mxu0
        %v687 = vadd.f32 %v555, %v686
        %v688 = vpop.f32.mrb[0].mxu0
        %689 = vmatprep.mubr.bf16.mxu0 0
        %690 = vmatmul.mubr.bf16.gmra.mrb[0].mxu0 %v600
        %v691 = vpop.f32.mrb[0].mxu0
        %v692 = vadd.f32 %v556, %v691
        %v693 = vpop.f32.mrb[0].mxu0
        %v694 = vpop.f32.mrb[0].mxu0
        %v695 = vadd.f32 %v557, %v694
        %v696 = vpop.f32.mrb[0].mxu0
        %697 = vmatprep.mubr.bf16.mxu0 0
        %698 = vmatmul.mubr.bf16.gmra.mrb[0].mxu0 %v603
        %v699 = vpop.f32.mrb[0].mxu0
        %v700 = vadd.f32 %v558, %v699
        %v701 = vpop.f32.mrb[0].mxu0
        %v702 = vpop.f32.mrb[0].mxu0
        %v703 = vadd.f32 %v559, %v702
        %v704 = vpop.f32.mrb[0].mxu0
        %705 = vmatprep.mubr.bf16.mxu0 0
        %706 = vmatmul.mubr.bf16.gmra.mrb[0].mxu0 %v606
        %v707 = vpop.f32.mrb[0].mxu0
        %v708 = vadd.f32 %v560, %v707
        %v709 = vpop.f32.mrb[0].mxu0
        %v710 = vpop.f32.mrb[0].mxu0
        %v711 = vadd.f32 %v561, %v710
        %v712 = vpop.f32.mrb[0].mxu0
        %713 = vmatprep.mubr.bf16.mxu0 0
        %714 = vmatmul.mubr.bf16.gmra.mrb[0].mxu0 %v609
        %v715 = vpop.f32.mrb[0].mxu0
        %v716 = vadd.f32 %v562, %v715
        %v717 = vpop.f32.mrb[0].mxu0
        %v718 = vpop.f32.mrb[0].mxu0
        %v719 = vadd.f32 %v563, %v718
        %v720 = vpop.f32.mrb[0].mxu0
        %721 = vmatprep.mubr.bf16.mxu0 0
        %722 = vmatmul.mubr.bf16.gmra.mrb[0].mxu0 %v612
        %v723 = vpop.f32.mrb[0].mxu0
        %v724 = vadd.f32 %v564, %v723
        %v725 = vpop.f32.mrb[0].mxu0
        %v726 = vpop.f32.mrb[0].mxu0
        %v727 = vadd.f32 %v565, %v726
        %v728 = vpop.f32.mrb[0].mxu0
        %729 = vmatprep.mubr.bf16.mxu0 0
        %730 = vmatmul.mubr.bf16.gmra.mrb[0].mxu0 %v615
        %v731 = vpop.f32.mrb[0].mxu0
        %v732 = vadd.f32 %v566, %v731
        %v733 = vpop.f32.mrb[0].mxu0
        %v734 = vpop.f32.mrb[0].mxu0
        %v735 = vadd.f32 %v567, %v734
        %v736 = vpop.f32.mrb[0].mxu0
        %737 = vdwg.mxu0
        %v738 = vadd.f32 %v676, %v528
        %v739 = vadd.f32 %v679, %v529
        %v740 = vadd.f32 %v684, %v530
        %v741 = vadd.f32 %v687, %v531
        %v742 = vadd.f32 %v692, %v532
        %v743 = vadd.f32 %v695, %v533
        %v744 = vadd.f32 %v700, %v534
        %v745 = vadd.f32 %v703, %v535
        %v746 = vadd.f32 %v708, %v536
        %v747 = vadd.f32 %v711, %v537
        %v748 = vadd.f32 %v716, %v538
        %v749 = vadd.f32 %v719, %v539
        %v750 = vadd.f32 %v724, %v540
        %v751 = vadd.f32 %v727, %v541
        %v752 = vadd.f32 %v732, %v542
        %v753 = vadd.f32 %v735, %v543
        %754 = vmax.xlane.f32.xlu0 %v738
        %v755 = vpop.xlane.xlu0 %754
        %756 = vmax.xlane.f32.xlu0 %v739
        %v757 = vpop.xlane.xlu0 %756
        %758 = vmax.xlane.f32.xlu0 %v740
        %v759 = vpop.xlane.xlu0 %758
        %760 = vmax.xlane.f32.xlu0 %v741
        %v761 = vpop.xlane.xlu0 %760
        %762 = vmax.xlane.f32.xlu0 %v742
        %v763 = vpop.xlane.xlu0 %762
        %764 = vmax.xlane.f32.xlu0 %v743
        %v765 = vpop.xlane.xlu0 %764
        %766 = vmax.xlane.f32.xlu0 %v744
        %v767 = vpop.xlane.xlu0 %766
        %768 = vmax.xlane.f32.xlu0 %v745
        %v769 = vpop.xlane.xlu0 %768
        %770 = vmax.xlane.f32.xlu0 %v746
        %v771 = vpop.xlane.xlu0 %770
        %772 = vmax.xlane.f32.xlu0 %v747
        %v773 = vpop.xlane.xlu0 %772
        %774 = vmax.xlane.f32.xlu0 %v748
        %v775 = vpop.xlane.xlu0 %774
        %776 = vmax.xlane.f32.xlu0 %v749
        %v777 = vpop.xlane.xlu0 %776
        %778 = vmax.xlane.f32.xlu0 %v750
        %v779 = vpop.xlane.xlu0 %778
        %780 = vmax.xlane.f32.xlu0 %v751
        %v781 = vpop.xlane.xlu0 %780
        %782 = vmax.xlane.f32.xlu0 %v752
        %v783 = vpop.xlane.xlu0 %782
        %784 = vmax.xlane.f32.xlu0 %v753
        %v785 = vpop.xlane.xlu0 %784
        %v786 = vsub.f32 %v738, %v755
        %v787 = vsub.f32 %v739, %v757
        %v788 = vsub.f32 %v740, %v759
        %v789 = vsub.f32 %v741, %v761
        %v790 = vsub.f32 %v742, %v763
        %v791 = vsub.f32 %v743, %v765
        %v792 = vsub.f32 %v744, %v767
        %v793 = vsub.f32 %v745, %v769
        %v794 = vsub.f32 %v746, %v771
        %v795 = vsub.f32 %v747, %v773
        %v796 = vsub.f32 %v748, %v775
        %v797 = vsub.f32 %v749, %v777
        %v798 = vsub.f32 %v750, %v779
        %v799 = vsub.f32 %v751, %v781
        %v800 = vsub.f32 %v752, %v783
        %v801 = vsub.f32 %v753, %v785
        %v802 = vmul.f32 %v786, 1.442695
        %v803 = vpow.pop %v802
        %v804 = vmul.f32 %v787, 1.442695
        %v805 = vpow.pop %v804
        %v806 = vmul.f32 %v788, 1.442695
        %v807 = vpow.pop %v806
        %v808 = vmul.f32 %v789, 1.442695
        %v809 = vpow.pop %v808
        %v810 = vmul.f32 %v790, 1.442695
        %v811 = vpow.pop %v810
        %v812 = vmul.f32 %v791, 1.442695
        %v813 = vpow.pop %v812
        %v814 = vmul.f32 %v792, 1.442695
        %v815 = vpow.pop %v814
        %v816 = vmul.f32 %v793, 1.442695
        %v817 = vpow.pop %v816
        %v818 = vmul.f32 %v794, 1.442695
        %v819 = vpow.pop %v818
        %v820 = vmul.f32 %v795, 1.442695
        %v821 = vpow.pop %v820
        %v822 = vmul.f32 %v796, 1.442695
        %v823 = vpow.pop %v822
        %v824 = vmul.f32 %v797, 1.442695
        %v825 = vpow.pop %v824
        %v826 = vmul.f32 %v798, 1.442695
        %v827 = vpow.pop %v826
        %v828 = vmul.f32 %v799, 1.442695
        %v829 = vpow.pop %v828
        %v830 = vmul.f32 %v800, 1.442695
        %v831 = vpow.pop %v830
        %v832 = vmul.f32 %v801, 1.442695
        %v833 = vpow.pop %v832
        %834 = vadd.xlane.f32.xlu0 %v803
        %v835 = vpop.xlane.xlu0 %834
        %836 = vadd.xlane.f32.xlu0 %v805
        %v837 = vpop.xlane.xlu0 %836
        %838 = vadd.xlane.f32.xlu0 %v807
        %v839 = vpop.xlane.xlu0 %838
        %840 = vadd.xlane.f32.xlu0 %v809
        %v841 = vpop.xlane.xlu0 %840
        %842 = vadd.xlane.f32.xlu0 %v811
        %v843 = vpop.xlane.xlu0 %842
        %844 = vadd.xlane.f32.xlu0 %v813
        %v845 = vpop.xlane.xlu0 %844
        %846 = vadd.xlane.f32.xlu0 %v815
        %v847 = vpop.xlane.xlu0 %846
        %848 = vadd.xlane.f32.xlu0 %v817
        %v849 = vpop.xlane.xlu0 %848
        %850 = vadd.xlane.f32.xlu0 %v819
        %v851 = vpop.xlane.xlu0 %850
        %852 = vadd.xlane.f32.xlu0 %v821
        %v853 = vpop.xlane.xlu0 %852
        %854 = vadd.xlane.f32.xlu0 %v823
        %v855 = vpop.xlane.xlu0 %854
        %856 = vadd.xlane.f32.xlu0 %v825
        %v857 = vpop.xlane.xlu0 %856
        %858 = vadd.xlane.f32.xlu0 %v827
        %v859 = vpop.xlane.xlu0 %858
        %860 = vadd.xlane.f32.xlu0 %v829
        %v861 = vpop.xlane.xlu0 %860
        %862 = vadd.xlane.f32.xlu0 %v831
        %v863 = vpop.xlane.xlu0 %862
        %864 = vadd.xlane.f32.xlu0 %v833
        %v865 = vpop.xlane.xlu0 %864
        %v866 = vrcp.pop %v835
        %v867 = vrcp.pop %v837
        %v868 = vrcp.pop %v839
        %v869 = vrcp.pop %v841
        %v870 = vrcp.pop %v843
        %v871 = vrcp.pop %v845
        %v872 = vrcp.pop %v847
        %v873 = vrcp.pop %v849
        %v874 = vrcp.pop %v851
        %v875 = vrcp.pop %v853
        %v876 = vrcp.pop %v855
        %v877 = vrcp.pop %v857
        %v878 = vrcp.pop %v859
        %v879 = vrcp.pop %v861
        %v880 = vrcp.pop %v863
        %v881 = vrcp.pop %v865
        %v882 = vmul.f32 %v803, %v866
        %v883 = vmul.f32 %v805, %v867
        %v884 = vmul.f32 %v807, %v868
        %v885 = vmul.f32 %v809, %v869
        %v886 = vmul.f32 %v811, %v870
        %v887 = vmul.f32 %v813, %v871
        %v888 = vmul.f32 %v815, %v872
        %v889 = vmul.f32 %v817, %v873
        %v890 = vmul.f32 %v819, %v874
        %v891 = vmul.f32 %v821, %v875
        %v892 = vmul.f32 %v823, %v876
        %v893 = vmul.f32 %v825, %v877
        %v894 = vmul.f32 %v827, %v878
        %v895 = vmul.f32 %v829, %v879
        %v896 = vmul.f32 %v831, %v880
        %v897 = vmul.f32 %v833, %v881
        %v898 = vpack.c.bf16 %v883, %v882
        %v899 = vpack.c.bf16 %v885, %v884
        %v900 = vpack.c.bf16 %v887, %v886
        %v901 = vpack.c.bf16 %v889, %v888
        %v902 = vpack.c.bf16 %v891, %v890
        %v903 = vpack.c.bf16 %v893, %v892
        %v904 = vpack.c.bf16 %v895, %v894
        %v905 = vpack.c.bf16 %v897, %v896
        %906 = vrot.lane.b32.xlu0 %v544, 64
        %v907 = vpop.permute.xlu0 %906
        %908 = vrot.lane.b32.xlu0 %v545, 64
        %v909 = vpop.permute.xlu0 %908
        %910 = vrot.lane.b32.xlu0 %v546, 64
        %v911 = vpop.permute.xlu0 %910
        %912 = vrot.lane.b32.xlu0 %v547, 64
        %v913 = vpop.permute.xlu0 %912
        %914 = vrot.lane.b32.xlu0 %v548, 64
        %v915 = vpop.permute.xlu0 %914
        %916 = vrot.lane.b32.xlu0 %v549, 64
        %v917 = vpop.permute.xlu0 %916
        %918 = vrot.lane.b32.xlu0 %v550, 64
        %v919 = vpop.permute.xlu0 %918
        %920 = vrot.lane.b32.xlu0 %v551, 64
        %v921 = vpop.permute.xlu0 %920
        %930 = vmatprep.subr.bf16.mxu0 0
        %931 = vmatpush1.bf16.msra.mxu0 %v907
        %932 = vmatprep.subr.bf16.mxu0 0
        %933 = vmatpush1.bf16.msra.mxu0 %v909
        %934 = vmatprep.subr.bf16.mxu0 0
        %935 = vmatpush1.bf16.msra.mxu0 %v911
        %936 = vmatprep.subr.bf16.mxu0 0
        %937 = vmatpush1.bf16.msra.mxu0 %v913
        %938 = vmatprep.subr.bf16.mxu0 0
        %939 = vmatpush1.bf16.msra.mxu0 %v915
        %940 = vmatprep.subr.bf16.mxu0 0
        %941 = vmatpush1.bf16.msra.mxu0 %v917
        %942 = vmatprep.subr.bf16.mxu0 0
        %943 = vmatpush1.bf16.msra.mxu0 %v919
        %944 = vmatprep.subr.bf16.mxu0 0
        %945 = vmatpush1.bf16.msra.mxu0 %v921
        %946 = vmatprep.subr.bf16.mxu0 0
        %947 = vmatpush1.bf16.msra.mxu0 0
        %948 = vmatprep.subr.bf16.mxu0 0
        %949 = vmatpush1.bf16.msra.mxu0 0
        %950 = vmatprep.subr.bf16.mxu0 0
        %951 = vmatpush1.bf16.msra.mxu0 0
        %952 = vmatprep.subr.bf16.mxu0 0
        %953 = vmatpush1.bf16.msra.mxu0 0
        %954 = vmatprep.subr.bf16.mxu0 0
        %955 = vmatpush1.bf16.msra.mxu0 0
        %956 = vmatprep.subr.bf16.mxu0 0
        %957 = vmatpush1.bf16.msra.mxu0 0
        %958 = vmatprep.subr.bf16.mxu0 0
        %959 = vmatpush1.bf16.msra.mxu0 0
        %960 = vmatprep.subr.bf16.mxu0 0
        %961 = vmatpush1.bf16.msra.mxu0 0
        %962 = vmatprep.mubr.bf16.mxu0 0
        %963 = vmatmul.mubr.bf16.gmra.mrb[0].mxu0 %v898
        %v964 = vpop.f32.mrb[0].mxu0
        %v965 = vadd.f32 0.0, %v964
        %v966 = vpop.f32.mrb[0].mxu0
        %v967 = vpop.f32.mrb[0].mxu0
        %v968 = vadd.f32 0.0, %v967
        %v969 = vpop.f32.mrb[0].mxu0
        %970 = vmatprep.mubr.bf16.mxu0 0
        %971 = vmatmul.mubr.bf16.gmra.mrb[0].mxu0 %v899
        %v972 = vpop.f32.mrb[0].mxu0
        %v973 = vadd.f32 0.0, %v972
        %v974 = vpop.f32.mrb[0].mxu0
        %v975 = vpop.f32.mrb[0].mxu0
        %v976 = vadd.f32 0.0, %v975
        %v977 = vpop.f32.mrb[0].mxu0
        %978 = vmatprep.mubr.bf16.mxu0 0
        %979 = vmatmul.mubr.bf16.gmra.mrb[0].mxu0 %v900
        %v980 = vpop.f32.mrb[0].mxu0
        %v981 = vadd.f32 0.0, %v980
        %v982 = vpop.f32.mrb[0].mxu0
        %v983 = vpop.f32.mrb[0].mxu0
        %v984 = vadd.f32 0.0, %v983
        %v985 = vpop.f32.mrb[0].mxu0
        %986 = vmatprep.mubr.bf16.mxu0 0
        %987 = vmatmul.mubr.bf16.gmra.mrb[0].mxu0 %v901
        %v988 = vpop.f32.mrb[0].mxu0
        %v989 = vadd.f32 0.0, %v988
        %v990 = vpop.f32.mrb[0].mxu0
        %v991 = vpop.f32.mrb[0].mxu0
        %v992 = vadd.f32 0.0, %v991
        %v993 = vpop.f32.mrb[0].mxu0
        %994 = vmatprep.mubr.bf16.mxu0 0
        %995 = vmatmul.mubr.bf16.gmra.mrb[0].mxu0 %v902
        %v996 = vpop.f32.mrb[0].mxu0
        %v997 = vadd.f32 0.0, %v996
        %v998 = vpop.f32.mrb[0].mxu0
        %v999 = vpop.f32.mrb[0].mxu0
        %v1000 = vadd.f32 0.0, %v999
        %v1001 = vpop.f32.mrb[0].mxu0
        %1002 = vmatprep.mubr.bf16.mxu0 0
        %1003 = vmatmul.mubr.bf16.gmra.mrb[0].mxu0 %v903
        %v1004 = vpop.f32.mrb[0].mxu0
        %v1005 = vadd.f32 0.0, %v1004
        %v1006 = vpop.f32.mrb[0].mxu0
        %v1007 = vpop.f32.mrb[0].mxu0
        %v1008 = vadd.f32 0.0, %v1007
        %v1009 = vpop.f32.mrb[0].mxu0
        %1010 = vmatprep.mubr.bf16.mxu0 0
        %1011 = vmatmul.mubr.bf16.gmra.mrb[0].mxu0 %v904
        %v1012 = vpop.f32.mrb[0].mxu0
        %v1013 = vadd.f32 0.0, %v1012
        %v1014 = vpop.f32.mrb[0].mxu0
        %v1015 = vpop.f32.mrb[0].mxu0
        %v1016 = vadd.f32 0.0, %v1015
        %v1017 = vpop.f32.mrb[0].mxu0
        %1018 = vmatprep.mubr.bf16.mxu0 0
        %1019 = vmatmul.mubr.bf16.gmra.mrb[0].mxu0 %v905
        %v1020 = vpop.f32.mrb[0].mxu0
        %v1021 = vadd.f32 0.0, %v1020
        %v1022 = vpop.f32.mrb[0].mxu0
        %v1023 = vpop.f32.mrb[0].mxu0
        %v1024 = vadd.f32 0.0, %v1023
        %v1025 = vpop.f32.mrb[0].mxu0
        %1026 = vdwg.mxu0
        %v1027 = vpack.c.bf16 %v968, %v965
        %v1028 = vpack.c.bf16 %v976, %v973
        %v1029 = vpack.c.bf16 %v984, %v981
        %v1030 = vpack.c.bf16 %v992, %v989
        %v1031 = vpack.c.bf16 %v1000, %v997
        %v1032 = vpack.c.bf16 %v1008, %v1005
        %v1033 = vpack.c.bf16 %v1016, %v1013
        %v1034 = vpack.c.bf16 %v1024, %v1021
        %v1035 = vld [vmem:[#allocation7] sm:$0xf]
        %s1036 = scalar_lea.vmem [#allocation8], 128
        %v1037 = vld [vmem:[%s1036] sm:$0xff]
        %v1038 = vld [vmem:[%s1036 + $0x8] sm:$0xff]
        %v1039 = vld [vmem:[%s1036 + $0x10] sm:$0xff]
        %v1040 = vld [vmem:[%s1036 + $0x18] sm:$0xff]
        %v1041 = vld [vmem:[%s1036 + $0x20] sm:$0xff]
        %v1042 = vld [vmem:[%s1036 + $0x28] sm:$0xff]
        %v1043 = vld [vmem:[%s1036 + $0x30] sm:$0xff]
        %v1044 = vld [vmem:[%s1036 + $0x38] sm:$0xff]
        %v1045 = vld [vmem:[%s1036 + $0x40] sm:$0xff]
        %v1046 = vld [vmem:[%s1036 + $0x48] sm:$0xff]
        %v1047 = vld [vmem:[%s1036 + $0x50] sm:$0xff]
        %v1048 = vld [vmem:[%s1036 + $0x58] sm:$0xff]
        %v1049 = vld [vmem:[%s1036 + $0x60] sm:$0xff]
        %v1050 = vld [vmem:[%s1036 + $0x68] sm:$0xff]
        %v1051 = vld [vmem:[%s1036 + $0x70] sm:$0xff]
        %v1052 = vld [vmem:[%s1036 + $0x78] sm:$0xff]
        %1053 = vrot.lane.b32.xlu0 %v544, 120
        %v1054 = vpop.permute.xlu0 %1053
        %1055 = vrot.lane.b32.xlu0 %v545, 120
        %v1056 = vpop.permute.xlu0 %1055
        %1057 = vrot.lane.b32.xlu0 %v546, 120
        %v1058 = vpop.permute.xlu0 %1057
        %1059 = vrot.lane.b32.xlu0 %v547, 120
        %v1060 = vpop.permute.xlu0 %1059
        %1061 = vrot.lane.b32.xlu0 %v548, 120
        %v1062 = vpop.permute.xlu0 %1061
        %1063 = vrot.lane.b32.xlu0 %v549, 120
        %v1064 = vpop.permute.xlu0 %1063
        %1065 = vrot.lane.b32.xlu0 %v550, 120
        %v1066 = vpop.permute.xlu0 %1065
        %1067 = vrot.lane.b32.xlu0 %v551, 120
        %v1068 = vpop.permute.xlu0 %1067
        %1069 = vrot.lane.b32.xlu0 %v544, 88
        %v1070 = vpop.permute.xlu0 %1069
        %1071 = vrot.lane.b32.xlu0 %v545, 88
        %v1072 = vpop.permute.xlu0 %1071
        %1073 = vrot.lane.b32.xlu0 %v546, 88
        %v1074 = vpop.permute.xlu0 %1073
        %1075 = vrot.lane.b32.xlu0 %v547, 88
        %v1076 = vpop.permute.xlu0 %1075
        %1077 = vrot.lane.b32.xlu0 %v548, 88
        %v1078 = vpop.permute.xlu0 %1077
        %1079 = vrot.lane.b32.xlu0 %v549, 88
        %v1080 = vpop.permute.xlu0 %1079
        %1081 = vrot.lane.b32.xlu0 %v550, 88
        %v1082 = vpop.permute.xlu0 %1081
        %1083 = vrot.lane.b32.xlu0 %v551, 88
        %v1084 = vpop.permute.xlu0 %1083
        %v1086 = vsel %vm592, %v1054, 0
        %v1089 = vsel %vm592, %v1056, 0
        %v1092 = vsel %vm592, %v1058, 0
        %v1095 = vsel %vm592, %v1060, 0
        %v1098 = vsel %vm592, %v1062, 0
        %v1101 = vsel %vm592, %v1064, 0
        %v1104 = vsel %vm592, %v1066, 0
        %v1107 = vsel %vm592, %v1068, 0
        %v1110 = vsel %vm592, %v1070, 0
        %v1113 = vsel %vm592, %v1072, 0
        %v1116 = vsel %vm592, %v1074, 0
        %v1119 = vsel %vm592, %v1076, 0
        %v1122 = vsel %vm592, %v1078, 0
        %v1125 = vsel %vm592, %v1080, 0
        %v1128 = vsel %vm592, %v1082, 0
        %v1131 = vsel %vm592, %v1084, 0
        %1133 = vmatprep.subr.bf16.mxu0 0
        %1134 = vmatpush1.bf16.xpose.msra.mxu0 %v1110
        %1135 = vmatprep.subr.bf16.mxu0 0
        %1136 = vmatpush1.bf16.xpose.msra.mxu0 %v1113
        %1137 = vmatprep.subr.bf16.mxu0 0
        %1138 = vmatpush1.bf16.xpose.msra.mxu0 %v1116
        %1139 = vmatprep.subr.bf16.mxu0 0
        %1140 = vmatpush1.bf16.xpose.msra.mxu0 %v1119
        %1141 = vmatprep.subr.bf16.mxu0 0
        %1142 = vmatpush1.bf16.xpose.msra.mxu0 %v1122
        %1143 = vmatprep.subr.bf16.mxu0 0
        %1144 = vmatpush1.bf16.xpose.msra.mxu0 %v1125
        %1145 = vmatprep.subr.bf16.mxu0 0
        %1146 = vmatpush1.bf16.xpose.msra.mxu0 %v1128
        %1147 = vmatprep.subr.bf16.mxu0 0
        %1148 = vmatpush1.bf16.xpose.msra.mxu0 %v1131
        %1149 = vmatprep.subr.bf16.mxu0 0
        %1150 = vmatpush1.bf16.xpose.msra.mxu0 0
        %1151 = vmatprep.subr.bf16.mxu0 0
        %1152 = vmatpush1.bf16.xpose.msra.mxu0 0
        %1153 = vmatprep.subr.bf16.mxu0 0
        %1154 = vmatpush1.bf16.xpose.msra.mxu0 0
        %1155 = vmatprep.subr.bf16.mxu0 0
        %1156 = vmatpush1.bf16.xpose.msra.mxu0 0
        %1157 = vmatprep.subr.bf16.mxu0 0
        %1158 = vmatpush1.bf16.xpose.msra.mxu0 0
        %1159 = vmatprep.subr.bf16.mxu0 0
        %1160 = vmatpush1.bf16.xpose.msra.mxu0 0
        %1161 = vmatprep.subr.bf16.mxu0 0
        %1162 = vmatpush1.bf16.xpose.msra.mxu0 0
        %1163 = vmatprep.subr.bf16.mxu0 0
        %1164 = vmatpush1.bf16.xpose.msra.mxu0 0
        %1165 = vmatprep.mubr.bf16.mxu0 0
        %1166 = vmatmul.mubr.bf16.gmra.mrb[0].mxu0 %v1086
        %v1167 = vpop.f32.mrb[0].mxu0
        %v1168 = vadd.f32 %v1037, %v1167
        %v1169 = vpop.f32.mrb[0].mxu0
        %v1170 = vpop.f32.mrb[0].mxu0
        %v1171 = vadd.f32 %v1038, %v1170
        %v1172 = vpop.f32.mrb[0].mxu0
        %1173 = vmatprep.mubr.bf16.mxu0 0
        %1174 = vmatmul.mubr.bf16.gmra.mrb[0].mxu0 %v1089
        %v1175 = vpop.f32.mrb[0].mxu0
        %v1176 = vadd.f32 %v1039, %v1175
        %v1177 = vpop.f32.mrb[0].mxu0
        %v1178 = vpop.f32.mrb[0].mxu0
        %v1179 = vadd.f32 %v1040, %v1178
        %v1180 = vpop.f32.mrb[0].mxu0
        %1181 = vmatprep.mubr.bf16.mxu0 0
        %1182 = vmatmul.mubr.bf16.gmra.mrb[0].mxu0 %v1092
        %v1183 = vpop.f32.mrb[0].mxu0
        %v1184 = vadd.f32 %v1041, %v1183
        %v1185 = vpop.f32.mrb[0].mxu0
        %v1186 = vpop.f32.mrb[0].mxu0
        %v1187 = vadd.f32 %v1042, %v1186
        %v1188 = vpop.f32.mrb[0].mxu0
        %1189 = vmatprep.mubr.bf16.mxu0 0
        %1190 = vmatmul.mubr.bf16.gmra.mrb[0].mxu0 %v1095
        %v1191 = vpop.f32.mrb[0].mxu0
        %v1192 = vadd.f32 %v1043, %v1191
        %v1193 = vpop.f32.mrb[0].mxu0
        %v1194 = vpop.f32.mrb[0].mxu0
        %v1195 = vadd.f32 %v1044, %v1194
        %v1196 = vpop.f32.mrb[0].mxu0
        %1197 = vmatprep.mubr.bf16.mxu0 0
        %1198 = vmatmul.mubr.bf16.gmra.mrb[0].mxu0 %v1098
        %v1199 = vpop.f32.mrb[0].mxu0
        %v1200 = vadd.f32 %v1045, %v1199
        %v1201 = vpop.f32.mrb[0].mxu0
        %v1202 = vpop.f32.mrb[0].mxu0
        %v1203 = vadd.f32 %v1046, %v1202
        %v1204 = vpop.f32.mrb[0].mxu0
        %1205 = vmatprep.mubr.bf16.mxu0 0
        %1206 = vmatmul.mubr.bf16.gmra.mrb[0].mxu0 %v1101
        %v1207 = vpop.f32.mrb[0].mxu0
        %v1208 = vadd.f32 %v1047, %v1207
        %v1209 = vpop.f32.mrb[0].mxu0
        %v1210 = vpop.f32.mrb[0].mxu0
        %v1211 = vadd.f32 %v1048, %v1210
        %v1212 = vpop.f32.mrb[0].mxu0
        %1213 = vmatprep.mubr.bf16.mxu0 0
        %1214 = vmatmul.mubr.bf16.gmra.mrb[0].mxu0 %v1104
        %v1215 = vpop.f32.mrb[0].mxu0
        %v1216 = vadd.f32 %v1049, %v1215
        %v1217 = vpop.f32.mrb[0].mxu0
        %v1218 = vpop.f32.mrb[0].mxu0
        %v1219 = vadd.f32 %v1050, %v1218
        %v1220 = vpop.f32.mrb[0].mxu0
        %1221 = vmatprep.mubr.bf16.mxu0 0
        %1222 = vmatmul.mubr.bf16.gmra.mrb[0].mxu0 %v1107
        %v1223 = vpop.f32.mrb[0].mxu0
        %v1224 = vadd.f32 %v1051, %v1223
        %v1225 = vpop.f32.mrb[0].mxu0
        %v1226 = vpop.f32.mrb[0].mxu0
        %v1227 = vadd.f32 %v1052, %v1226
        %v1228 = vpop.f32.mrb[0].mxu0
        %1229 = vdwg.mxu0
        %v1230 = vadd.f32 %v1168, %v528
        %v1231 = vadd.f32 %v1171, %v529
        %v1232 = vadd.f32 %v1176, %v530
        %v1233 = vadd.f32 %v1179, %v531
        %v1234 = vadd.f32 %v1184, %v532
        %v1235 = vadd.f32 %v1187, %v533
        %v1236 = vadd.f32 %v1192, %v534
        %v1237 = vadd.f32 %v1195, %v535
        %v1238 = vadd.f32 %v1200, %v536
        %v1239 = vadd.f32 %v1203, %v537
        %v1240 = vadd.f32 %v1208, %v538
        %v1241 = vadd.f32 %v1211, %v539
        %v1242 = vadd.f32 %v1216, %v540
        %v1243 = vadd.f32 %v1219, %v541
        %v1244 = vadd.f32 %v1224, %v542
        %v1245 = vadd.f32 %v1227, %v543
        %1246 = vmax.xlane.f32.xlu0 %v1230
        %v1247 = vpop.xlane.xlu0 %1246
        %1248 = vmax.xlane.f32.xlu0 %v1231
        %v1249 = vpop.xlane.xlu0 %1248
        %1250 = vmax.xlane.f32.xlu0 %v1232
        %v1251 = vpop.xlane.xlu0 %1250
        %1252 = vmax.xlane.f32.xlu0 %v1233
        %v1253 = vpop.xlane.xlu0 %1252
        %1254 = vmax.xlane.f32.xlu0 %v1234
        %v1255 = vpop.xlane.xlu0 %1254
        %1256 = vmax.xlane.f32.xlu0 %v1235
        %v1257 = vpop.xlane.xlu0 %1256
        %1258 = vmax.xlane.f32.xlu0 %v1236
        %v1259 = vpop.xlane.xlu0 %1258
        %1260 = vmax.xlane.f32.xlu0 %v1237
        %v1261 = vpop.xlane.xlu0 %1260
        %1262 = vmax.xlane.f32.xlu0 %v1238
        %v1263 = vpop.xlane.xlu0 %1262
        %1264 = vmax.xlane.f32.xlu0 %v1239
        %v1265 = vpop.xlane.xlu0 %1264
        %1266 = vmax.xlane.f32.xlu0 %v1240
        %v1267 = vpop.xlane.xlu0 %1266
        %1268 = vmax.xlane.f32.xlu0 %v1241
        %v1269 = vpop.xlane.xlu0 %1268
        %1270 = vmax.xlane.f32.xlu0 %v1242
        %v1271 = vpop.xlane.xlu0 %1270
        %1272 = vmax.xlane.f32.xlu0 %v1243
        %v1273 = vpop.xlane.xlu0 %1272
        %1274 = vmax.xlane.f32.xlu0 %v1244
        %v1275 = vpop.xlane.xlu0 %1274
        %1276 = vmax.xlane.f32.xlu0 %v1245
        %v1277 = vpop.xlane.xlu0 %1276
        %v1278 = vsub.f32 %v1230, %v1247
        %v1279 = vsub.f32 %v1231, %v1249
        %v1280 = vsub.f32 %v1232, %v1251
        %v1281 = vsub.f32 %v1233, %v1253
        %v1282 = vsub.f32 %v1234, %v1255
        %v1283 = vsub.f32 %v1235, %v1257
        %v1284 = vsub.f32 %v1236, %v1259
        %v1285 = vsub.f32 %v1237, %v1261
        %v1286 = vsub.f32 %v1238, %v1263
        %v1287 = vsub.f32 %v1239, %v1265
        %v1288 = vsub.f32 %v1240, %v1267
        %v1289 = vsub.f32 %v1241, %v1269
        %v1290 = vsub.f32 %v1242, %v1271
        %v1291 = vsub.f32 %v1243, %v1273
        %v1292 = vsub.f32 %v1244, %v1275
        %v1293 = vsub.f32 %v1245, %v1277
        %v1294 = vmul.f32 %v1278, 1.442695
        %v1295 = vpow.pop %v1294
        %v1296 = vmul.f32 %v1279, 1.442695
        %v1297 = vpow.pop %v1296
        %v1298 = vmul.f32 %v1280, 1.442695
        %v1299 = vpow.pop %v1298
        %v1300 = vmul.f32 %v1281, 1.442695
        %v1301 = vpow.pop %v1300
        %v1302 = vmul.f32 %v1282, 1.442695
        %v1303 = vpow.pop %v1302
        %v1304 = vmul.f32 %v1283, 1.442695
        %v1305 = vpow.pop %v1304
        %v1306 = vmul.f32 %v1284, 1.442695
        %v1307 = vpow.pop %v1306
        %v1308 = vmul.f32 %v1285, 1.442695
        %v1309 = vpow.pop %v1308
        %v1310 = vmul.f32 %v1286, 1.442695
        %v1311 = vpow.pop %v1310
        %v1312 = vmul.f32 %v1287, 1.442695
        %v1313 = vpow.pop %v1312
        %v1314 = vmul.f32 %v1288, 1.442695
        %v1315 = vpow.pop %v1314
        %v1316 = vmul.f32 %v1289, 1.442695
        %v1317 = vpow.pop %v1316
        %v1318 = vmul.f32 %v1290, 1.442695
        %v1319 = vpow.pop %v1318
        %v1320 = vmul.f32 %v1291, 1.442695
        %v1321 = vpow.pop %v1320
        %v1322 = vmul.f32 %v1292, 1.442695
        %v1323 = vpow.pop %v1322
        %v1324 = vmul.f32 %v1293, 1.442695
        %v1325 = vpow.pop %v1324
        %1326 = vadd.xlane.f32.xlu0 %v1295
        %v1327 = vpop.xlane.xlu0 %1326
        %1328 = vadd.xlane.f32.xlu0 %v1297
        %v1329 = vpop.xlane.xlu0 %1328
        %1330 = vadd.xlane.f32.xlu0 %v1299
        %v1331 = vpop.xlane.xlu0 %1330
        %1332 = vadd.xlane.f32.xlu0 %v1301
        %v1333 = vpop.xlane.xlu0 %1332
        %1334 = vadd.xlane.f32.xlu0 %v1303
        %v1335 = vpop.xlane.xlu0 %1334
        %1336 = vadd.xlane.f32.xlu0 %v1305
        %v1337 = vpop.xlane.xlu0 %1336
        %1338 = vadd.xlane.f32.xlu0 %v1307
        %v1339 = vpop.xlane.xlu0 %1338
        %1340 = vadd.xlane.f32.xlu0 %v1309
        %v1341 = vpop.xlane.xlu0 %1340
        %1342 = vadd.xlane.f32.xlu0 %v1311
        %v1343 = vpop.xlane.xlu0 %1342
        %1344 = vadd.xlane.f32.xlu0 %v1313
        %v1345 = vpop.xlane.xlu0 %1344
        %1346 = vadd.xlane.f32.xlu0 %v1315
        %v1347 = vpop.xlane.xlu0 %1346
        %1348 = vadd.xlane.f32.xlu0 %v1317
        %v1349 = vpop.xlane.xlu0 %1348
        %1350 = vadd.xlane.f32.xlu0 %v1319
        %v1351 = vpop.xlane.xlu0 %1350
        %1352 = vadd.xlane.f32.xlu0 %v1321
        %v1353 = vpop.xlane.xlu0 %1352
        %1354 = vadd.xlane.f32.xlu0 %v1323
        %v1355 = vpop.xlane.xlu0 %1354
        %1356 = vadd.xlane.f32.xlu0 %v1325
        %v1357 = vpop.xlane.xlu0 %1356
        %v1358 = vrcp.pop %v1327
        %v1359 = vrcp.pop %v1329
        %v1360 = vrcp.pop %v1331
        %v1361 = vrcp.pop %v1333
        %v1362 = vrcp.pop %v1335
        %v1363 = vrcp.pop %v1337
        %v1364 = vrcp.pop %v1339
        %v1365 = vrcp.pop %v1341
        %v1366 = vrcp.pop %v1343
        %v1367 = vrcp.pop %v1345
        %v1368 = vrcp.pop %v1347
        %v1369 = vrcp.pop %v1349
        %v1370 = vrcp.pop %v1351
        %v1371 = vrcp.pop %v1353
        %v1372 = vrcp.pop %v1355
        %v1373 = vrcp.pop %v1357
        %v1374 = vmul.f32 %v1295, %v1358
        %v1375 = vmul.f32 %v1297, %v1359
        %v1376 = vmul.f32 %v1299, %v1360
        %v1377 = vmul.f32 %v1301, %v1361
        %v1378 = vmul.f32 %v1303, %v1362
        %v1379 = vmul.f32 %v1305, %v1363
        %v1380 = vmul.f32 %v1307, %v1364
        %v1381 = vmul.f32 %v1309, %v1365
        %v1382 = vmul.f32 %v1311, %v1366
        %v1383 = vmul.f32 %v1313, %v1367
        %v1384 = vmul.f32 %v1315, %v1368
        %v1385 = vmul.f32 %v1317, %v1369
        %v1386 = vmul.f32 %v1319, %v1370
        %v1387 = vmul.f32 %v1321, %v1371
        %v1388 = vmul.f32 %v1323, %v1372
        %v1389 = vmul.f32 %v1325, %v1373
        %v1390 = vpack.c.bf16 %v1375, %v1374
        %v1391 = vpack.c.bf16 %v1377, %v1376
        %v1392 = vpack.c.bf16 %v1379, %v1378
        %v1393 = vpack.c.bf16 %v1381, %v1380
        %v1394 = vpack.c.bf16 %v1383, %v1382
        %v1395 = vpack.c.bf16 %v1385, %v1384
        %v1396 = vpack.c.bf16 %v1387, %v1386
        %v1397 = vpack.c.bf16 %v1389, %v1388
        %1398 = vrot.lane.b32.xlu0 %v544, 56
        %v1399 = vpop.permute.xlu0 %1398
        %1400 = vrot.lane.b32.xlu0 %v545, 56
        %v1401 = vpop.permute.xlu0 %1400
        %1402 = vrot.lane.b32.xlu0 %v546, 56
        %v1403 = vpop.permute.xlu0 %1402
        %1404 = vrot.lane.b32.xlu0 %v547, 56
        %v1405 = vpop.permute.xlu0 %1404
        %1406 = vrot.lane.b32.xlu0 %v548, 56
        %v1407 = vpop.permute.xlu0 %1406
        %1408 = vrot.lane.b32.xlu0 %v549, 56
        %v1409 = vpop.permute.xlu0 %1408
        %1410 = vrot.lane.b32.xlu0 %v550, 56
        %v1411 = vpop.permute.xlu0 %1410
        %1412 = vrot.lane.b32.xlu0 %v551, 56
        %v1413 = vpop.permute.xlu0 %1412
        %1422 = vmatprep.subr.bf16.mxu0 0
        %1423 = vmatpush1.bf16.msra.mxu0 %v1399
        %1424 = vmatprep.subr.bf16.mxu0 0
        %1425 = vmatpush1.bf16.msra.mxu0 %v1401
        %1426 = vmatprep.subr.bf16.mxu0 0
        %1427 = vmatpush1.bf16.msra.mxu0 %v1403
        %1428 = vmatprep.subr.bf16.mxu0 0
        %1429 = vmatpush1.bf16.msra.mxu0 %v1405
        %1430 = vmatprep.subr.bf16.mxu0 0
        %1431 = vmatpush1.bf16.msra.mxu0 %v1407
        %1432 = vmatprep.subr.bf16.mxu0 0
        %1433 = vmatpush1.bf16.msra.mxu0 %v1409
        %1434 = vmatprep.subr.bf16.mxu0 0
        %1435 = vmatpush1.bf16.msra.mxu0 %v1411
        %1436 = vmatprep.subr.bf16.mxu0 0
        %1437 = vmatpush1.bf16.msra.mxu0 %v1413
        %1438 = vmatprep.subr.bf16.mxu0 0
        %1439 = vmatpush1.bf16.msra.mxu0 0
        %1440 = vmatprep.subr.bf16.mxu0 0
        %1441 = vmatpush1.bf16.msra.mxu0 0
        %1442 = vmatprep.subr.bf16.mxu0 0
        %1443 = vmatpush1.bf16.msra.mxu0 0
        %1444 = vmatprep.subr.bf16.mxu0 0
        %1445 = vmatpush1.bf16.msra.mxu0 0
        %1446 = vmatprep.subr.bf16.mxu0 0
        %1447 = vmatpush1.bf16.msra.mxu0 0
        %1448 = vmatprep.subr.bf16.mxu0 0
        %1449 = vmatpush1.bf16.msra.mxu0 0
        %1450 = vmatprep.subr.bf16.mxu0 0
        %1451 = vmatpush1.bf16.msra.mxu0 0
        %1452 = vmatprep.subr.bf16.mxu0 0
        %1453 = vmatpush1.bf16.msra.mxu0 0
        %1454 = vmatprep.mubr.bf16.mxu0 0
        %1455 = vmatmul.mubr.bf16.gmra.mrb[0].mxu0 %v1390
        %v1456 = vpop.f32.mrb[0].mxu0
        %v1457 = vadd.f32 0.0, %v1456
        %v1458 = vpop.f32.mrb[0].mxu0
        %v1459 = vpop.f32.mrb[0].mxu0
        %v1460 = vadd.f32 0.0, %v1459
        %v1461 = vpop.f32.mrb[0].mxu0
        %1462 = vmatprep.mubr.bf16.mxu0 0
        %1463 = vmatmul.mubr.bf16.gmra.mrb[0].mxu0 %v1391
        %v1464 = vpop.f32.mrb[0].mxu0
        %v1465 = vadd.f32 0.0, %v1464
        %v1466 = vpop.f32.mrb[0].mxu0
        %v1467 = vpop.f32.mrb[0].mxu0
        %v1468 = vadd.f32 0.0, %v1467
        %v1469 = vpop.f32.mrb[0].mxu0
        %1470 = vmatprep.mubr.bf16.mxu0 0
        %1471 = vmatmul.mubr.bf16.gmra.mrb[0].mxu0 %v1392
        %v1472 = vpop.f32.mrb[0].mxu0
        %v1473 = vadd.f32 0.0, %v1472
        %v1474 = vpop.f32.mrb[0].mxu0
        %v1475 = vpop.f32.mrb[0].mxu0
        %v1476 = vadd.f32 0.0, %v1475
        %v1477 = vpop.f32.mrb[0].mxu0
        %1478 = vmatprep.mubr.bf16.mxu0 0
        %1479 = vmatmul.mubr.bf16.gmra.mrb[0].mxu0 %v1393
        %v1480 = vpop.f32.mrb[0].mxu0
        %v1481 = vadd.f32 0.0, %v1480
        %v1482 = vpop.f32.mrb[0].mxu0
        %v1483 = vpop.f32.mrb[0].mxu0
        %v1484 = vadd.f32 0.0, %v1483
        %v1485 = vpop.f32.mrb[0].mxu0
        %1486 = vmatprep.mubr.bf16.mxu0 0
        %1487 = vmatmul.mubr.bf16.gmra.mrb[0].mxu0 %v1394
        %v1488 = vpop.f32.mrb[0].mxu0
        %v1489 = vadd.f32 0.0, %v1488
        %v1490 = vpop.f32.mrb[0].mxu0
        %v1491 = vpop.f32.mrb[0].mxu0
        %v1492 = vadd.f32 0.0, %v1491
        %v1493 = vpop.f32.mrb[0].mxu0
        %1494 = vmatprep.mubr.bf16.mxu0 0
        %1495 = vmatmul.mubr.bf16.gmra.mrb[0].mxu0 %v1395
        %v1496 = vpop.f32.mrb[0].mxu0
        %v1497 = vadd.f32 0.0, %v1496
        %v1498 = vpop.f32.mrb[0].mxu0
        %v1499 = vpop.f32.mrb[0].mxu0
        %v1500 = vadd.f32 0.0, %v1499
        %v1501 = vpop.f32.mrb[0].mxu0
        %1502 = vmatprep.mubr.bf16.mxu0 0
        %1503 = vmatmul.mubr.bf16.gmra.mrb[0].mxu0 %v1396
        %v1504 = vpop.f32.mrb[0].mxu0
        %v1505 = vadd.f32 0.0, %v1504
        %v1506 = vpop.f32.mrb[0].mxu0
        %v1507 = vpop.f32.mrb[0].mxu0
        %v1508 = vadd.f32 0.0, %v1507
        %v1509 = vpop.f32.mrb[0].mxu0
        %1510 = vmatprep.mubr.bf16.mxu0 0
        %1511 = vmatmul.mubr.bf16.gmra.mrb[0].mxu0 %v1397
        %v1512 = vpop.f32.mrb[0].mxu0
        %v1513 = vadd.f32 0.0, %v1512
        %v1514 = vpop.f32.mrb[0].mxu0
        %v1515 = vpop.f32.mrb[0].mxu0
        %v1516 = vadd.f32 0.0, %v1515
        %v1517 = vpop.f32.mrb[0].mxu0
        %1518 = vdwg.mxu0
        %v1519 = vpack.c.bf16 %v1460, %v1457
        %v1520 = vpack.c.bf16 %v1468, %v1465
        %v1521 = vpack.c.bf16 %v1476, %v1473
        %v1522 = vpack.c.bf16 %v1484, %v1481
        %v1523 = vpack.c.bf16 %v1492, %v1489
        %v1524 = vpack.c.bf16 %v1500, %v1497
        %v1525 = vpack.c.bf16 %v1508, %v1505
        %v1526 = vpack.c.bf16 %v1516, %v1513
        %s1527 = scalar_lea.vmem [#allocation7], 4
        %v1528 = vld [vmem:[%s1527] sm:$0xf]
        %v1530 = vsel %vm592, %v1519, 0
        %v1533 = vsel %vm592, %v1520, 0
        %v1536 = vsel %vm592, %v1521, 0
        %v1539 = vsel %vm592, %v1522, 0
        %v1542 = vsel %vm592, %v1523, 0
        %v1545 = vsel %vm592, %v1524, 0
        %v1548 = vsel %vm592, %v1525, 0
        %v1551 = vsel %vm592, %v1526, 0
        %vm1553 = vcmask 1043456
        %v1555 = vsel %vm1553, %v1528, 0
        %1557 = vmatprep.subr.bf16.mxu0 0
        %1558 = vmatpush1.bf16.msra.mxu0 %v1555
        %1559 = vmatprep.subr.bf16.mxu0 0
        %1560 = vmatpush1.bf16.msra.mxu0 0
        %1561 = vmatprep.subr.bf16.mxu0 0
        %1562 = vmatpush1.bf16.msra.mxu0 0
        %1563 = vmatprep.subr.bf16.mxu0 0
        %1564 = vmatpush1.bf16.msra.mxu0 0
        %1565 = vmatprep.subr.bf16.mxu0 0
        %1566 = vmatpush1.bf16.msra.mxu0 0
        %1567 = vmatprep.subr.bf16.mxu0 0
        %1568 = vmatpush1.bf16.msra.mxu0 0
        %1569 = vmatprep.subr.bf16.mxu0 0
        %1570 = vmatpush1.bf16.msra.mxu0 0
        %1571 = vmatprep.subr.bf16.mxu0 0
        %1572 = vmatpush1.bf16.msra.mxu0 0
        %1573 = vmatprep.subr.bf16.mxu0 0
        %1574 = vmatpush1.bf16.msra.mxu0 0
        %1575 = vmatprep.subr.bf16.mxu0 0
        %1576 = vmatpush1.bf16.msra.mxu0 0
        %1577 = vmatprep.subr.bf16.mxu0 0
        %1578 = vmatpush1.bf16.msra.mxu0 0
        %1579 = vmatprep.subr.bf16.mxu0 0
        %1580 = vmatpush1.bf16.msra.mxu0 0
        %1581 = vmatprep.subr.bf16.mxu0 0
        %1582 = vmatpush1.bf16.msra.mxu0 0
        %1583 = vmatprep.subr.bf16.mxu0 0
        %1584 = vmatpush1.bf16.msra.mxu0 0
        %1585 = vmatprep.subr.bf16.mxu0 0
        %1586 = vmatpush1.bf16.msra.mxu0 0
        %1587 = vmatprep.subr.bf16.mxu0 0
        %1588 = vmatpush1.bf16.msra.mxu0 0
        %1589 = vmatprep.mubr.bf16.mxu0 0
        %1590 = vmatmul.mubr.bf16.gmra.mrb[0].mxu0 %v1530
        %v1591 = vpop.f32.mrb[0].mxu0
        %v1592 = vadd.f32 0.0, %v1591
        %v1593 = vpop.f32.mrb[0].mxu0
        %v1594 = vpop.f32.mrb[0].mxu0
        %v1595 = vadd.f32 0.0, %v1594
        %v1596 = vpop.f32.mrb[0].mxu0
        %1597 = vmatprep.mubr.bf16.mxu0 0
        %1598 = vmatmul.mubr.bf16.gmra.mrb[0].mxu0 %v1533
        %v1599 = vpop.f32.mrb[0].mxu0
        %v1600 = vadd.f32 0.0, %v1599
        %v1601 = vpop.f32.mrb[0].mxu0
        %v1602 = vpop.f32.mrb[0].mxu0
        %v1603 = vadd.f32 0.0, %v1602
        %v1604 = vpop.f32.mrb[0].mxu0
        %1605 = vmatprep.mubr.bf16.mxu0 0
        %1606 = vmatmul.mubr.bf16.gmra.mrb[0].mxu0 %v1536
        %v1607 = vpop.f32.mrb[0].mxu0
        %v1608 = vadd.f32 0.0, %v1607
        %v1609 = vpop.f32.mrb[0].mxu0
        %v1610 = vpop.f32.mrb[0].mxu0
        %v1611 = vadd.f32 0.0, %v1610
        %v1612 = vpop.f32.mrb[0].mxu0
        %1613 = vmatprep.mubr.bf16.mxu0 0
        %1614 = vmatmul.mubr.bf16.gmra.mrb[0].mxu0 %v1539
        %v1615 = vpop.f32.mrb[0].mxu0
        %v1616 = vadd.f32 0.0, %v1615
        %v1617 = vpop.f32.mrb[0].mxu0
        %v1618 = vpop.f32.mrb[0].mxu0
        %v1619 = vadd.f32 0.0, %v1618
        %v1620 = vpop.f32.mrb[0].mxu0
        %1621 = vmatprep.mubr.bf16.mxu0 0
        %1622 = vmatmul.mubr.bf16.gmra.mrb[0].mxu0 %v1542
        %v1623 = vpop.f32.mrb[0].mxu0
        %v1624 = vadd.f32 0.0, %v1623
        %v1625 = vpop.f32.mrb[0].mxu0
        %v1626 = vpop.f32.mrb[0].mxu0
        %v1627 = vadd.f32 0.0, %v1626
        %v1628 = vpop.f32.mrb[0].mxu0
        %1629 = vmatprep.mubr.bf16.mxu0 0
        %1630 = vmatmul.mubr.bf16.gmra.mrb[0].mxu0 %v1545
        %v1631 = vpop.f32.mrb[0].mxu0
        %v1632 = vadd.f32 0.0, %v1631
        %v1633 = vpop.f32.mrb[0].mxu0
        %v1634 = vpop.f32.mrb[0].mxu0
        %v1635 = vadd.f32 0.0, %v1634
        %v1636 = vpop.f32.mrb[0].mxu0
        %1637 = vmatprep.mubr.bf16.mxu0 0
        %1638 = vmatmul.mubr.bf16.gmra.mrb[0].mxu0 %v1548
        %v1639 = vpop.f32.mrb[0].mxu0
        %v1640 = vadd.f32 0.0, %v1639
        %v1641 = vpop.f32.mrb[0].mxu0
        %v1642 = vpop.f32.mrb[0].mxu0
        %v1643 = vadd.f32 0.0, %v1642
        %v1644 = vpop.f32.mrb[0].mxu0
        %1645 = vmatprep.mubr.bf16.mxu0 0
        %1646 = vmatmul.mubr.bf16.gmra.mrb[0].mxu0 %v1551
        %v1647 = vpop.f32.mrb[0].mxu0
        %v1648 = vadd.f32 0.0, %v1647
        %v1649 = vpop.f32.mrb[0].mxu0
        %v1650 = vpop.f32.mrb[0].mxu0
        %v1651 = vadd.f32 0.0, %v1650
        %v1652 = vpop.f32.mrb[0].mxu0
        %1653 = vdwg.mxu0
        %v1655 = vsel %vm592, %v1027, 0
        %v1658 = vsel %vm592, %v1028, 0
        %v1661 = vsel %vm592, %v1029, 0
        %v1664 = vsel %vm592, %v1030, 0
        %v1667 = vsel %vm592, %v1031, 0
        %v1670 = vsel %vm592, %v1032, 0
        %v1673 = vsel %vm592, %v1033, 0
        %v1676 = vsel %vm592, %v1034, 0
        %v1679 = vsel %vm1553, %v1035, 0
        %1681 = vmatprep.subr.bf16.mxu0 0
        %1682 = vmatpush1.bf16.msra.mxu0 %v1679
        %1683 = vmatprep.subr.bf16.mxu0 0
        %1684 = vmatpush1.bf16.msra.mxu0 0
        %1685 = vmatprep.subr.bf16.mxu0 0
        %1686 = vmatpush1.bf16.msra.mxu0 0
        %1687 = vmatprep.subr.bf16.mxu0 0
        %1688 = vmatpush1.bf16.msra.mxu0 0
        %1689 = vmatprep.subr.bf16.mxu0 0
        %1690 = vmatpush1.bf16.msra.mxu0 0
        %1691 = vmatprep.subr.bf16.mxu0 0
        %1692 = vmatpush1.bf16.msra.mxu0 0
        %1693 = vmatprep.subr.bf16.mxu0 0
        %1694 = vmatpush1.bf16.msra.mxu0 0
        %1695 = vmatprep.subr.bf16.mxu0 0
        %1696 = vmatpush1.bf16.msra.mxu0 0
        %1697 = vmatprep.subr.bf16.mxu0 0
        %1698 = vmatpush1.bf16.msra.mxu0 0
        %1699 = vmatprep.subr.bf16.mxu0 0
        %1700 = vmatpush1.bf16.msra.mxu0 0
        %1701 = vmatprep.subr.bf16.mxu0 0
        %1702 = vmatpush1.bf16.msra.mxu0 0
        %1703 = vmatprep.subr.bf16.mxu0 0
        %1704 = vmatpush1.bf16.msra.mxu0 0
        %1705 = vmatprep.subr.bf16.mxu0 0
        %1706 = vmatpush1.bf16.msra.mxu0 0
        %1707 = vmatprep.subr.bf16.mxu0 0
        %1708 = vmatpush1.bf16.msra.mxu0 0
        %1709 = vmatprep.subr.bf16.mxu0 0
        %1710 = vmatpush1.bf16.msra.mxu0 0
        %1711 = vmatprep.subr.bf16.mxu0 0
        %1712 = vmatpush1.bf16.msra.mxu0 0
        %1713 = vmatprep.mubr.bf16.mxu0 0
        %1714 = vmatmul.mubr.bf16.gmra.mrb[0].mxu0 %v1655
        %v1715 = vpop.f32.mrb[0].mxu0
        %v1716 = vadd.f32 %v1592, %v1715
        %v1717 = vpop.f32.mrb[0].mxu0
        %v1718 = vpop.f32.mrb[0].mxu0
        %v1719 = vadd.f32 %v1595, %v1718
        %v1720 = vpop.f32.mrb[0].mxu0
        %1721 = vmatprep.mubr.bf16.mxu0 0
        %1722 = vmatmul.mubr.bf16.gmra.mrb[0].mxu0 %v1658
        %v1723 = vpop.f32.mrb[0].mxu0
        %v1724 = vadd.f32 %v1600, %v1723
        %v1725 = vpop.f32.mrb[0].mxu0
        %v1726 = vpop.f32.mrb[0].mxu0
        %v1727 = vadd.f32 %v1603, %v1726
        %v1728 = vpop.f32.mrb[0].mxu0
        %1729 = vmatprep.mubr.bf16.mxu0 0
        %1730 = vmatmul.mubr.bf16.gmra.mrb[0].mxu0 %v1661
        %v1731 = vpop.f32.mrb[0].mxu0
        %v1732 = vadd.f32 %v1608, %v1731
        %v1733 = vpop.f32.mrb[0].mxu0
        %v1734 = vpop.f32.mrb[0].mxu0
        %v1735 = vadd.f32 %v1611, %v1734
        %v1736 = vpop.f32.mrb[0].mxu0
        %1737 = vmatprep.mubr.bf16.mxu0 0
        %1738 = vmatmul.mubr.bf16.gmra.mrb[0].mxu0 %v1664
        %v1739 = vpop.f32.mrb[0].mxu0
        %v1740 = vadd.f32 %v1616, %v1739
        %v1741 = vpop.f32.mrb[0].mxu0
        %v1742 = vpop.f32.mrb[0].mxu0
        %v1743 = vadd.f32 %v1619, %v1742
        %v1744 = vpop.f32.mrb[0].mxu0
        %1745 = vmatprep.mubr.bf16.mxu0 0
        %1746 = vmatmul.mubr.bf16.gmra.mrb[0].mxu0 %v1667
        %v1747 = vpop.f32.mrb[0].mxu0
        %v1748 = vadd.f32 %v1624, %v1747
        %v1749 = vpop.f32.mrb[0].mxu0
        %v1750 = vpop.f32.mrb[0].mxu0
        %v1751 = vadd.f32 %v1627, %v1750
        %v1752 = vpop.f32.mrb[0].mxu0
        %1753 = vmatprep.mubr.bf16.mxu0 0
        %1754 = vmatmul.mubr.bf16.gmra.mrb[0].mxu0 %v1670
        %v1755 = vpop.f32.mrb[0].mxu0
        %v1756 = vadd.f32 %v1632, %v1755
        %v1757 = vpop.f32.mrb[0].mxu0
        %v1758 = vpop.f32.mrb[0].mxu0
        %v1759 = vadd.f32 %v1635, %v1758
        %v1760 = vpop.f32.mrb[0].mxu0
        %1761 = vmatprep.mubr.bf16.mxu0 0
        %1762 = vmatmul.mubr.bf16.gmra.mrb[0].mxu0 %v1673
        %v1763 = vpop.f32.mrb[0].mxu0
        %v1764 = vadd.f32 %v1640, %v1763
        %v1765 = vpop.f32.mrb[0].mxu0
        %v1766 = vpop.f32.mrb[0].mxu0
        %v1767 = vadd.f32 %v1643, %v1766
        %v1768 = vpop.f32.mrb[0].mxu0
        %1769 = vmatprep.mubr.bf16.mxu0 0
        %1770 = vmatmul.mubr.bf16.gmra.mrb[0].mxu0 %v1676
        %v1771 = vpop.f32.mrb[0].mxu0
        %v1772 = vadd.f32 %v1648, %v1771
        %v1773 = vpop.f32.mrb[0].mxu0
        %v1774 = vpop.f32.mrb[0].mxu0
        %v1775 = vadd.f32 %v1651, %v1774
        %v1776 = vpop.f32.mrb[0].mxu0
        %1777 = vdwg.mxu0
        %s1778 = scalar_lea.vmem [#allocation8], 256
        %v1779 = vld [vmem:[%s1778] sm:$0xff]
        %v1780 = vld [vmem:[%s1778 + $0x8] sm:$0xff]
        %v1781 = vld [vmem:[%s1778 + $0x10] sm:$0xff]
        %v1782 = vld [vmem:[%s1778 + $0x18] sm:$0xff]
        %v1783 = vld [vmem:[%s1778 + $0x20] sm:$0xff]
        %v1784 = vld [vmem:[%s1778 + $0x28] sm:$0xff]
        %v1785 = vld [vmem:[%s1778 + $0x30] sm:$0xff]
        %v1786 = vld [vmem:[%s1778 + $0x38] sm:$0xff]
        %v1787 = vld [vmem:[%s1778 + $0x40] sm:$0xff]
        %v1788 = vld [vmem:[%s1778 + $0x48] sm:$0xff]
        %v1789 = vld [vmem:[%s1778 + $0x50] sm:$0xff]
        %v1790 = vld [vmem:[%s1778 + $0x58] sm:$0xff]
        %v1791 = vld [vmem:[%s1778 + $0x60] sm:$0xff]
        %v1792 = vld [vmem:[%s1778 + $0x68] sm:$0xff]
        %v1793 = vld [vmem:[%s1778 + $0x70] sm:$0xff]
        %v1794 = vld [vmem:[%s1778 + $0x78] sm:$0xff]
        %1795 = vrot.lane.b32.xlu0 %v544, 112
        %v1796 = vpop.permute.xlu0 %1795
        %1797 = vrot.lane.b32.xlu0 %v545, 112
        %v1798 = vpop.permute.xlu0 %1797
        %1799 = vrot.lane.b32.xlu0 %v546, 112
        %v1800 = vpop.permute.xlu0 %1799
        %1801 = vrot.lane.b32.xlu0 %v547, 112
        %v1802 = vpop.permute.xlu0 %1801
        %1803 = vrot.lane.b32.xlu0 %v548, 112
        %v1804 = vpop.permute.xlu0 %1803
        %1805 = vrot.lane.b32.xlu0 %v549, 112
        %v1806 = vpop.permute.xlu0 %1805
        %1807 = vrot.lane.b32.xlu0 %v550, 112
        %v1808 = vpop.permute.xlu0 %1807
        %1809 = vrot.lane.b32.xlu0 %v551, 112
        %v1810 = vpop.permute.xlu0 %1809
        %1811 = vrot.lane.b32.xlu0 %v544, 80
        %v1812 = vpop.permute.xlu0 %1811
        %1813 = vrot.lane.b32.xlu0 %v545, 80
        %v1814 = vpop.permute.xlu0 %1813
        %1815 = vrot.lane.b32.xlu0 %v546, 80
        %v1816 = vpop.permute.xlu0 %1815
        %1817 = vrot.lane.b32.xlu0 %v547, 80
        %v1818 = vpop.permute.xlu0 %1817
        %1819 = vrot.lane.b32.xlu0 %v548, 80
        %v1820 = vpop.permute.xlu0 %1819
        %1821 = vrot.lane.b32.xlu0 %v549, 80
        %v1822 = vpop.permute.xlu0 %1821
        %1823 = vrot.lane.b32.xlu0 %v550, 80
        %v1824 = vpop.permute.xlu0 %1823
        %1825 = vrot.lane.b32.xlu0 %v551, 80
        %v1826 = vpop.permute.xlu0 %1825
        %v1828 = vsel %vm592, %v1796, 0
        %v1831 = vsel %vm592, %v1798, 0
        %v1834 = vsel %vm592, %v1800, 0
        %v1837 = vsel %vm592, %v1802, 0
        %v1840 = vsel %vm592, %v1804, 0
        %v1843 = vsel %vm592, %v1806, 0
        %v1846 = vsel %vm592, %v1808, 0
        %v1849 = vsel %vm592, %v1810, 0
        %v1852 = vsel %vm592, %v1812, 0
        %v1855 = vsel %vm592, %v1814, 0
        %v1858 = vsel %vm592, %v1816, 0
        %v1861 = vsel %vm592, %v1818, 0
        %v1864 = vsel %vm592, %v1820, 0
        %v1867 = vsel %vm592, %v1822, 0
        %v1870 = vsel %vm592, %v1824, 0
        %v1873 = vsel %vm592, %v1826, 0
        %1875 = vmatprep.subr.bf16.mxu0 0
        %1876 = vmatpush1.bf16.xpose.msra.mxu0 %v1852
        %1877 = vmatprep.subr.bf16.mxu0 0
        %1878 = vmatpush1.bf16.xpose.msra.mxu0 %v1855
        %1879 = vmatprep.subr.bf16.mxu0 0
        %1880 = vmatpush1.bf16.xpose.msra.mxu0 %v1858
        %1881 = vmatprep.subr.bf16.mxu0 0
        %1882 = vmatpush1.bf16.xpose.msra.mxu0 %v1861
        %1883 = vmatprep.subr.bf16.mxu0 0
        %1884 = vmatpush1.bf16.xpose.msra.mxu0 %v1864
        %1885 = vmatprep.subr.bf16.mxu0 0
        %1886 = vmatpush1.bf16.xpose.msra.mxu0 %v1867
        %1887 = vmatprep.subr.bf16.mxu0 0
        %1888 = vmatpush1.bf16.xpose.msra.mxu0 %v1870
        %1889 = vmatprep.subr.bf16.mxu0 0
        %1890 = vmatpush1.bf16.xpose.msra.mxu0 %v1873
        %1891 = vmatprep.subr.bf16.mxu0 0
        %1892 = vmatpush1.bf16.xpose.msra.mxu0 0
        %1893 = vmatprep.subr.bf16.mxu0 0
        %1894 = vmatpush1.bf16.xpose.msra.mxu0 0
        %1895 = vmatprep.subr.bf16.mxu0 0
        %1896 = vmatpush1.bf16.xpose.msra.mxu0 0
        %1897 = vmatprep.subr.bf16.mxu0 0
        %1898 = vmatpush1.bf16.xpose.msra.mxu0 0
        %1899 = vmatprep.subr.bf16.mxu0 0
        %1900 = vmatpush1.bf16.xpose.msra.mxu0 0
        %1901 = vmatprep.subr.bf16.mxu0 0
        %1902 = vmatpush1.bf16.xpose.msra.mxu0 0
        %1903 = vmatprep.subr.bf16.mxu0 0
        %1904 = vmatpush1.bf16.xpose.msra.mxu0 0
        %1905 = vmatprep.subr.bf16.mxu0 0
        %1906 = vmatpush1.bf16.xpose.msra.mxu0 0
        %1907 = vmatprep.mubr.bf16.mxu0 0
        %1908 = vmatmul.mubr.bf16.gmra.mrb[0].mxu0 %v1828
        %v1909 = vpop.f32.mrb[0].mxu0
        %v1910 = vadd.f32 %v1779, %v1909
        %v1911 = vpop.f32.mrb[0].mxu0
        %v1912 = vpop.f32.mrb[0].mxu0
        %v1913 = vadd.f32 %v1780, %v1912
        %v1914 = vpop.f32.mrb[0].mxu0
        %1915 = vmatprep.mubr.bf16.mxu0 0
        %1916 = vmatmul.mubr.bf16.gmra.mrb[0].mxu0 %v1831
        %v1917 = vpop.f32.mrb[0].mxu0
        %v1918 = vadd.f32 %v1781, %v1917
        %v1919 = vpop.f32.mrb[0].mxu0
        %v1920 = vpop.f32.mrb[0].mxu0
        %v1921 = vadd.f32 %v1782, %v1920
        %v1922 = vpop.f32.mrb[0].mxu0
        %1923 = vmatprep.mubr.bf16.mxu0 0
        %1924 = vmatmul.mubr.bf16.gmra.mrb[0].mxu0 %v1834
        %v1925 = vpop.f32.mrb[0].mxu0
        %v1926 = vadd.f32 %v1783, %v1925
        %v1927 = vpop.f32.mrb[0].mxu0
        %v1928 = vpop.f32.mrb[0].mxu0
        %v1929 = vadd.f32 %v1784, %v1928
        %v1930 = vpop.f32.mrb[0].mxu0
        %1931 = vmatprep.mubr.bf16.mxu0 0
        %1932 = vmatmul.mubr.bf16.gmra.mrb[0].mxu0 %v1837
        %v1933 = vpop.f32.mrb[0].mxu0
        %v1934 = vadd.f32 %v1785, %v1933
        %v1935 = vpop.f32.mrb[0].mxu0
        %v1936 = vpop.f32.mrb[0].mxu0
        %v1937 = vadd.f32 %v1786, %v1936
        %v1938 = vpop.f32.mrb[0].mxu0
        %1939 = vmatprep.mubr.bf16.mxu0 0
        %1940 = vmatmul.mubr.bf16.gmra.mrb[0].mxu0 %v1840
        %v1941 = vpop.f32.mrb[0].mxu0
        %v1942 = vadd.f32 %v1787, %v1941
        %v1943 = vpop.f32.mrb[0].mxu0
        %v1944 = vpop.f32.mrb[0].mxu0
        %v1945 = vadd.f32 %v1788, %v1944
        %v1946 = vpop.f32.mrb[0].mxu0
        %1947 = vmatprep.mubr.bf16.mxu0 0
        %1948 = vmatmul.mubr.bf16.gmra.mrb[0].mxu0 %v1843
        %v1949 = vpop.f32.mrb[0].mxu0
        %v1950 = vadd.f32 %v1789, %v1949
        %v1951 = vpop.f32.mrb[0].mxu0
        %v1952 = vpop.f32.mrb[0].mxu0
        %v1953 = vadd.f32 %v1790, %v1952
        %v1954 = vpop.f32.mrb[0].mxu0
        %1955 = vmatprep.mubr.bf16.mxu0 0
        %1956 = vmatmul.mubr.bf16.gmra.mrb[0].mxu0 %v1846
        %v1957 = vpop.f32.mrb[0].mxu0
        %v1958 = vadd.f32 %v1791, %v1957
        %v1959 = vpop.f32.mrb[0].mxu0
        %v1960 = vpop.f32.mrb[0].mxu0
        %v1961 = vadd.f32 %v1792, %v1960
        %v1962 = vpop.f32.mrb[0].mxu0
        %1963 = vmatprep.mubr.bf16.mxu0 0
        %1964 = vmatmul.mubr.bf16.gmra.mrb[0].mxu0 %v1849
        %v1965 = vpop.f32.mrb[0].mxu0
        %v1966 = vadd.f32 %v1793, %v1965
        %v1967 = vpop.f32.mrb[0].mxu0
        %v1968 = vpop.f32.mrb[0].mxu0
        %v1969 = vadd.f32 %v1794, %v1968
        %v1970 = vpop.f32.mrb[0].mxu0
        %1971 = vdwg.mxu0
        %v1972 = vadd.f32 %v1910, %v528
        %v1973 = vadd.f32 %v1913, %v529
        %v1974 = vadd.f32 %v1918, %v530
        %v1975 = vadd.f32 %v1921, %v531
        %v1976 = vadd.f32 %v1926, %v532
        %v1977 = vadd.f32 %v1929, %v533
        %v1978 = vadd.f32 %v1934, %v534
        %v1979 = vadd.f32 %v1937, %v535
        %v1980 = vadd.f32 %v1942, %v536
        %v1981 = vadd.f32 %v1945, %v537
        %v1982 = vadd.f32 %v1950, %v538
        %v1983 = vadd.f32 %v1953, %v539
        %v1984 = vadd.f32 %v1958, %v540
        %v1985 = vadd.f32 %v1961, %v541
        %v1986 = vadd.f32 %v1966, %v542
        %v1987 = vadd.f32 %v1969, %v543
        %1988 = vmax.xlane.f32.xlu0 %v1972
        %v1989 = vpop.xlane.xlu0 %1988
        %1990 = vmax.xlane.f32.xlu0 %v1973
        %v1991 = vpop.xlane.xlu0 %1990
        %1992 = vmax.xlane.f32.xlu0 %v1974
        %v1993 = vpop.xlane.xlu0 %1992
        %1994 = vmax.xlane.f32.xlu0 %v1975
        %v1995 = vpop.xlane.xlu0 %1994
        %1996 = vmax.xlane.f32.xlu0 %v1976
        %v1997 = vpop.xlane.xlu0 %1996
        %1998 = vmax.xlane.f32.xlu0 %v1977
        %v1999 = vpop.xlane.xlu0 %1998
        %2000 = vmax.xlane.f32.xlu0 %v1978
        %v2001 = vpop.xlane.xlu0 %2000
        %2002 = vmax.xlane.f32.xlu0 %v1979
        %v2003 = vpop.xlane.xlu0 %2002
        %2004 = vmax.xlane.f32.xlu0 %v1980
        %v2005 = vpop.xlane.xlu0 %2004
        %2006 = vmax.xlane.f32.xlu0 %v1981
        %v2007 = vpop.xlane.xlu0 %2006
        %2008 = vmax.xlane.f32.xlu0 %v1982
        %v2009 = vpop.xlane.xlu0 %2008
        %2010 = vmax.xlane.f32.xlu0 %v1983
        %v2011 = vpop.xlane.xlu0 %2010
        %2012 = vmax.xlane.f32.xlu0 %v1984
        %v2013 = vpop.xlane.xlu0 %2012
        %2014 = vmax.xlane.f32.xlu0 %v1985
        %v2015 = vpop.xlane.xlu0 %2014
        %2016 = vmax.xlane.f32.xlu0 %v1986
        %v2017 = vpop.xlane.xlu0 %2016
        %2018 = vmax.xlane.f32.xlu0 %v1987
        %v2019 = vpop.xlane.xlu0 %2018
        %v2020 = vsub.f32 %v1972, %v1989
        %v2021 = vsub.f32 %v1973, %v1991
        %v2022 = vsub.f32 %v1974, %v1993
        %v2023 = vsub.f32 %v1975, %v1995
        %v2024 = vsub.f32 %v1976, %v1997
        %v2025 = vsub.f32 %v1977, %v1999
        %v2026 = vsub.f32 %v1978, %v2001
        %v2027 = vsub.f32 %v1979, %v2003
        %v2028 = vsub.f32 %v1980, %v2005
        %v2029 = vsub.f32 %v1981, %v2007
        %v2030 = vsub.f32 %v1982, %v2009
        %v2031 = vsub.f32 %v1983, %v2011
        %v2032 = vsub.f32 %v1984, %v2013
        %v2033 = vsub.f32 %v1985, %v2015
        %v2034 = vsub.f32 %v1986, %v2017
        %v2035 = vsub.f32 %v1987, %v2019
        %v2036 = vmul.f32 %v2020, 1.442695
        %v2037 = vpow.pop %v2036
        %v2038 = vmul.f32 %v2021, 1.442695
        %v2039 = vpow.pop %v2038
        %v2040 = vmul.f32 %v2022, 1.442695
        %v2041 = vpow.pop %v2040
        %v2042 = vmul.f32 %v2023, 1.442695
        %v2043 = vpow.pop %v2042
        %v2044 = vmul.f32 %v2024, 1.442695
        %v2045 = vpow.pop %v2044
        %v2046 = vmul.f32 %v2025, 1.442695
        %v2047 = vpow.pop %v2046
        %v2048 = vmul.f32 %v2026, 1.442695
        %v2049 = vpow.pop %v2048
        %v2050 = vmul.f32 %v2027, 1.442695
        %v2051 = vpow.pop %v2050
        %v2052 = vmul.f32 %v2028, 1.442695
        %v2053 = vpow.pop %v2052
        %v2054 = vmul.f32 %v2029, 1.442695
        %v2055 = vpow.pop %v2054
        %v2056 = vmul.f32 %v2030, 1.442695
        %v2057 = vpow.pop %v2056
        %v2058 = vmul.f32 %v2031, 1.442695
        %v2059 = vpow.pop %v2058
        %v2060 = vmul.f32 %v2032, 1.442695
        %v2061 = vpow.pop %v2060
        %v2062 = vmul.f32 %v2033, 1.442695
        %v2063 = vpow.pop %v2062
        %v2064 = vmul.f32 %v2034, 1.442695
        %v2065 = vpow.pop %v2064
        %v2066 = vmul.f32 %v2035, 1.442695
        %v2067 = vpow.pop %v2066
        %2068 = vadd.xlane.f32.xlu0 %v2037
        %v2069 = vpop.xlane.xlu0 %2068
        %2070 = vadd.xlane.f32.xlu0 %v2039
        %v2071 = vpop.xlane.xlu0 %2070
        %2072 = vadd.xlane.f32.xlu0 %v2041
        %v2073 = vpop.xlane.xlu0 %2072
        %2074 = vadd.xlane.f32.xlu0 %v2043
        %v2075 = vpop.xlane.xlu0 %2074
        %2076 = vadd.xlane.f32.xlu0 %v2045
        %v2077 = vpop.xlane.xlu0 %2076
        %2078 = vadd.xlane.f32.xlu0 %v2047
        %v2079 = vpop.xlane.xlu0 %2078
        %2080 = vadd.xlane.f32.xlu0 %v2049
        %v2081 = vpop.xlane.xlu0 %2080
        %2082 = vadd.xlane.f32.xlu0 %v2051
        %v2083 = vpop.xlane.xlu0 %2082
        %2084 = vadd.xlane.f32.xlu0 %v2053
        %v2085 = vpop.xlane.xlu0 %2084
        %2086 = vadd.xlane.f32.xlu0 %v2055
        %v2087 = vpop.xlane.xlu0 %2086
        %2088 = vadd.xlane.f32.xlu0 %v2057
        %v2089 = vpop.xlane.xlu0 %2088
        %2090 = vadd.xlane.f32.xlu0 %v2059
        %v2091 = vpop.xlane.xlu0 %2090
        %2092 = vadd.xlane.f32.xlu0 %v2061
        %v2093 = vpop.xlane.xlu0 %2092
        %2094 = vadd.xlane.f32.xlu0 %v2063
        %v2095 = vpop.xlane.xlu0 %2094
        %2096 = vadd.xlane.f32.xlu0 %v2065
        %v2097 = vpop.xlane.xlu0 %2096
        %2098 = vadd.xlane.f32.xlu0 %v2067
        %v2099 = vpop.xlane.xlu0 %2098
        %v2100 = vrcp.pop %v2069
        %v2101 = vrcp.pop %v2071
        %v2102 = vrcp.pop %v2073
        %v2103 = vrcp.pop %v2075
        %v2104 = vrcp.pop %v2077
        %v2105 = vrcp.pop %v2079
        %v2106 = vrcp.pop %v2081
        %v2107 = vrcp.pop %v2083
        %v2108 = vrcp.pop %v2085
        %v2109 = vrcp.pop %v2087
        %v2110 = vrcp.pop %v2089
        %v2111 = vrcp.pop %v2091
        %v2112 = vrcp.pop %v2093
        %v2113 = vrcp.pop %v2095
        %v2114 = vrcp.pop %v2097
        %v2115 = vrcp.pop %v2099
        %v2116 = vmul.f32 %v2037, %v2100
        %v2117 = vmul.f32 %v2039, %v2101
        %v2118 = vmul.f32 %v2041, %v2102
        %v2119 = vmul.f32 %v2043, %v2103
        %v2120 = vmul.f32 %v2045, %v2104
        %v2121 = vmul.f32 %v2047, %v2105
        %v2122 = vmul.f32 %v2049, %v2106
        %v2123 = vmul.f32 %v2051, %v2107
        %v2124 = vmul.f32 %v2053, %v2108
        %v2125 = vmul.f32 %v2055, %v2109
        %v2126 = vmul.f32 %v2057, %v2110
        %v2127 = vmul.f32 %v2059, %v2111
        %v2128 = vmul.f32 %v2061, %v2112
        %v2129 = vmul.f32 %v2063, %v2113
        %v2130 = vmul.f32 %v2065, %v2114
        %v2131 = vmul.f32 %v2067, %v2115
        %v2132 = vpack.c.bf16 %v2117, %v2116
        %v2133 = vpack.c.bf16 %v2119, %v2118
        %v2134 = vpack.c.bf16 %v2121, %v2120
        %v2135 = vpack.c.bf16 %v2123, %v2122
        %v2136 = vpack.c.bf16 %v2125, %v2124
        %v2137 = vpack.c.bf16 %v2127, %v2126
        %v2138 = vpack.c.bf16 %v2129, %v2128
        %v2139 = vpack.c.bf16 %v2131, %v2130
        %2140 = vrot.lane.b32.xlu0 %v544, 48
        %v2141 = vpop.permute.xlu0 %2140
        %2142 = vrot.lane.b32.xlu0 %v545, 48
        %v2143 = vpop.permute.xlu0 %2142
        %2144 = vrot.lane.b32.xlu0 %v546, 48
        %v2145 = vpop.permute.xlu0 %2144
        %2146 = vrot.lane.b32.xlu0 %v547, 48
        %v2147 = vpop.permute.xlu0 %2146
        %2148 = vrot.lane.b32.xlu0 %v548, 48
        %v2149 = vpop.permute.xlu0 %2148
        %2150 = vrot.lane.b32.xlu0 %v549, 48
        %v2151 = vpop.permute.xlu0 %2150
        %2152 = vrot.lane.b32.xlu0 %v550, 48
        %v2153 = vpop.permute.xlu0 %2152
        %2154 = vrot.lane.b32.xlu0 %v551, 48
        %v2155 = vpop.permute.xlu0 %2154
        %2164 = vmatprep.subr.bf16.mxu0 0
        %2165 = vmatpush1.bf16.msra.mxu0 %v2141
        %2166 = vmatprep.subr.bf16.mxu0 0
        %2167 = vmatpush1.bf16.msra.mxu0 %v2143
        %2168 = vmatprep.subr.bf16.mxu0 0
        %2169 = vmatpush1.bf16.msra.mxu0 %v2145
        %2170 = vmatprep.subr.bf16.mxu0 0
        %2171 = vmatpush1.bf16.msra.mxu0 %v2147
        %2172 = vmatprep.subr.bf16.mxu0 0
        %2173 = vmatpush1.bf16.msra.mxu0 %v2149
        %2174 = vmatprep.subr.bf16.mxu0 0
        %2175 = vmatpush1.bf16.msra.mxu0 %v2151
        %2176 = vmatprep.subr.bf16.mxu0 0
        %2177 = vmatpush1.bf16.msra.mxu0 %v2153
        %2178 = vmatprep.subr.bf16.mxu0 0
        %2179 = vmatpush1.bf16.msra.mxu0 %v2155
        %2180 = vmatprep.subr.bf16.mxu0 0
        %2181 = vmatpush1.bf16.msra.mxu0 0
        %2182 = vmatprep.subr.bf16.mxu0 0
        %2183 = vmatpush1.bf16.msra.mxu0 0
        %2184 = vmatprep.subr.bf16.mxu0 0
        %2185 = vmatpush1.bf16.msra.mxu0 0
        %2186 = vmatprep.subr.bf16.mxu0 0
        %2187 = vmatpush1.bf16.msra.mxu0 0
        %2188 = vmatprep.subr.bf16.mxu0 0
        %2189 = vmatpush1.bf16.msra.mxu0 0
        %2190 = vmatprep.subr.bf16.mxu0 0
        %2191 = vmatpush1.bf16.msra.mxu0 0
        %2192 = vmatprep.subr.bf16.mxu0 0
        %2193 = vmatpush1.bf16.msra.mxu0 0
        %2194 = vmatprep.subr.bf16.mxu0 0
        %2195 = vmatpush1.bf16.msra.mxu0 0
        %2196 = vmatprep.mubr.bf16.mxu0 0
        %2197 = vmatmul.mubr.bf16.gmra.mrb[0].mxu0 %v2132
        %v2198 = vpop.f32.mrb[0].mxu0
        %v2199 = vadd.f32 0.0, %v2198
        %v2200 = vpop.f32.mrb[0].mxu0
        %v2201 = vpop.f32.mrb[0].mxu0
        %v2202 = vadd.f32 0.0, %v2201
        %v2203 = vpop.f32.mrb[0].mxu0
        %2204 = vmatprep.mubr.bf16.mxu0 0
        %2205 = vmatmul.mubr.bf16.gmra.mrb[0].mxu0 %v2133
        %v2206 = vpop.f32.mrb[0].mxu0
        %v2207 = vadd.f32 0.0, %v2206
        %v2208 = vpop.f32.mrb[0].mxu0
        %v2209 = vpop.f32.mrb[0].mxu0
        %v2210 = vadd.f32 0.0, %v2209
        %v2211 = vpop.f32.mrb[0].mxu0
        %2212 = vmatprep.mubr.bf16.mxu0 0
        %2213 = vmatmul.mubr.bf16.gmra.mrb[0].mxu0 %v2134
        %v2214 = vpop.f32.mrb[0].mxu0
        %v2215 = vadd.f32 0.0, %v2214
        %v2216 = vpop.f32.mrb[0].mxu0
        %v2217 = vpop.f32.mrb[0].mxu0
        %v2218 = vadd.f32 0.0, %v2217
        %v2219 = vpop.f32.mrb[0].mxu0
        %2220 = vmatprep.mubr.bf16.mxu0 0
        %2221 = vmatmul.mubr.bf16.gmra.mrb[0].mxu0 %v2135
        %v2222 = vpop.f32.mrb[0].mxu0
        %v2223 = vadd.f32 0.0, %v2222
        %v2224 = vpop.f32.mrb[0].mxu0
        %v2225 = vpop.f32.mrb[0].mxu0
        %v2226 = vadd.f32 0.0, %v2225
        %v2227 = vpop.f32.mrb[0].mxu0
        %2228 = vmatprep.mubr.bf16.mxu0 0
        %2229 = vmatmul.mubr.bf16.gmra.mrb[0].mxu0 %v2136
        %v2230 = vpop.f32.mrb[0].mxu0
        %v2231 = vadd.f32 0.0, %v2230
        %v2232 = vpop.f32.mrb[0].mxu0
        %v2233 = vpop.f32.mrb[0].mxu0
        %v2234 = vadd.f32 0.0, %v2233
        %v2235 = vpop.f32.mrb[0].mxu0
        %2236 = vmatprep.mubr.bf16.mxu0 0
        %2237 = vmatmul.mubr.bf16.gmra.mrb[0].mxu0 %v2137
        %v2238 = vpop.f32.mrb[0].mxu0
        %v2239 = vadd.f32 0.0, %v2238
        %v2240 = vpop.f32.mrb[0].mxu0
        %v2241 = vpop.f32.mrb[0].mxu0
        %v2242 = vadd.f32 0.0, %v2241
        %v2243 = vpop.f32.mrb[0].mxu0
        %2244 = vmatprep.mubr.bf16.mxu0 0
        %2245 = vmatmul.mubr.bf16.gmra.mrb[0].mxu0 %v2138
        %v2246 = vpop.f32.mrb[0].mxu0
        %v2247 = vadd.f32 0.0, %v2246
        %v2248 = vpop.f32.mrb[0].mxu0
        %v2249 = vpop.f32.mrb[0].mxu0
        %v2250 = vadd.f32 0.0, %v2249
        %v2251 = vpop.f32.mrb[0].mxu0
        %2252 = vmatprep.mubr.bf16.mxu0 0
        %2253 = vmatmul.mubr.bf16.gmra.mrb[0].mxu0 %v2139
        %v2254 = vpop.f32.mrb[0].mxu0
        %v2255 = vadd.f32 0.0, %v2254
        %v2256 = vpop.f32.mrb[0].mxu0
        %v2257 = vpop.f32.mrb[0].mxu0
        %v2258 = vadd.f32 0.0, %v2257
        %v2259 = vpop.f32.mrb[0].mxu0
        %2260 = vdwg.mxu0
        %v2261 = vpack.c.bf16 %v2202, %v2199
        %v2262 = vpack.c.bf16 %v2210, %v2207
        %v2263 = vpack.c.bf16 %v2218, %v2215
        %v2264 = vpack.c.bf16 %v2226, %v2223
        %v2265 = vpack.c.bf16 %v2234, %v2231
        %v2266 = vpack.c.bf16 %v2242, %v2239
        %v2267 = vpack.c.bf16 %v2250, %v2247
        %v2268 = vpack.c.bf16 %v2258, %v2255
        %s2269 = scalar_lea.vmem [#allocation7], 8
        %v2270 = vld [vmem:[%s2269] sm:$0xf]
        %v2272 = vsel %vm592, %v2261, 0
        %v2275 = vsel %vm592, %v2262, 0
        %v2278 = vsel %vm592, %v2263, 0
        %v2281 = vsel %vm592, %v2264, 0
        %v2284 = vsel %vm592, %v2265, 0
        %v2287 = vsel %vm592, %v2266, 0
        %v2290 = vsel %vm592, %v2267, 0
        %v2293 = vsel %vm592, %v2268, 0
        %v2296 = vsel %vm1553, %v2270, 0
        %2298 = vmatprep.subr.bf16.mxu0 0
        %2299 = vmatpush1.bf16.msra.mxu0 %v2296
        %2300 = vmatprep.subr.bf16.mxu0 0
        %2301 = vmatpush1.bf16.msra.mxu0 0
        %2302 = vmatprep.subr.bf16.mxu0 0
        %2303 = vmatpush1.bf16.msra.mxu0 0
        %2304 = vmatprep.subr.bf16.mxu0 0
        %2305 = vmatpush1.bf16.msra.mxu0 0
        %2306 = vmatprep.subr.bf16.mxu0 0
        %2307 = vmatpush1.bf16.msra.mxu0 0
        %2308 = vmatprep.subr.bf16.mxu0 0
        %2309 = vmatpush1.bf16.msra.mxu0 0
        %2310 = vmatprep.subr.bf16.mxu0 0
        %2311 = vmatpush1.bf16.msra.mxu0 0
        %2312 = vmatprep.subr.bf16.mxu0 0
        %2313 = vmatpush1.bf16.msra.mxu0 0
        %2314 = vmatprep.subr.bf16.mxu0 0
        %2315 = vmatpush1.bf16.msra.mxu0 0
        %2316 = vmatprep.subr.bf16.mxu0 0
        %2317 = vmatpush1.bf16.msra.mxu0 0
        %2318 = vmatprep.subr.bf16.mxu0 0
        %2319 = vmatpush1.bf16.msra.mxu0 0
        %2320 = vmatprep.subr.bf16.mxu0 0
        %2321 = vmatpush1.bf16.msra.mxu0 0
        %2322 = vmatprep.subr.bf16.mxu0 0
        %2323 = vmatpush1.bf16.msra.mxu0 0
        %2324 = vmatprep.subr.bf16.mxu0 0
        %2325 = vmatpush1.bf16.msra.mxu0 0
        %2326 = vmatprep.subr.bf16.mxu0 0
        %2327 = vmatpush1.bf16.msra.mxu0 0
        %2328 = vmatprep.subr.bf16.mxu0 0
        %2329 = vmatpush1.bf16.msra.mxu0 0
        %2330 = vmatprep.mubr.bf16.mxu0 0
        %2331 = vmatmul.mubr.bf16.gmra.mrb[0].mxu0 %v2272
        %v2332 = vpop.f32.mrb[0].mxu0
        %v2333 = vadd.f32 0.0, %v2332
        %v2334 = vpop.f32.mrb[0].mxu0
        %v2335 = vpop.f32.mrb[0].mxu0
        %v2336 = vadd.f32 0.0, %v2335
        %v2337 = vpop.f32.mrb[0].mxu0
        %2338 = vmatprep.mubr.bf16.mxu0 0
        %2339 = vmatmul.mubr.bf16.gmra.mrb[0].mxu0 %v2275
        %v2340 = vpop.f32.mrb[0].mxu0
        %v2341 = vadd.f32 0.0, %v2340
        %v2342 = vpop.f32.mrb[0].mxu0
        %v2343 = vpop.f32.mrb[0].mxu0
        %v2344 = vadd.f32 0.0, %v2343
        %v2345 = vpop.f32.mrb[0].mxu0
        %2346 = vmatprep.mubr.bf16.mxu0 0
        %2347 = vmatmul.mubr.bf16.gmra.mrb[0].mxu0 %v2278
        %v2348 = vpop.f32.mrb[0].mxu0
        %v2349 = vadd.f32 0.0, %v2348
        %v2350 = vpop.f32.mrb[0].mxu0
        %v2351 = vpop.f32.mrb[0].mxu0
        %v2352 = vadd.f32 0.0, %v2351
        %v2353 = vpop.f32.mrb[0].mxu0
        %2354 = vmatprep.mubr.bf16.mxu0 0
        %2355 = vmatmul.mubr.bf16.gmra.mrb[0].mxu0 %v2281
        %v2356 = vpop.f32.mrb[0].mxu0
        %v2357 = vadd.f32 0.0, %v2356
        %v2358 = vpop.f32.mrb[0].mxu0
        %v2359 = vpop.f32.mrb[0].mxu0
        %v2360 = vadd.f32 0.0, %v2359
        %v2361 = vpop.f32.mrb[0].mxu0
        %2362 = vmatprep.mubr.bf16.mxu0 0
        %2363 = vmatmul.mubr.bf16.gmra.mrb[0].mxu0 %v2284
        %v2364 = vpop.f32.mrb[0].mxu0
        %v2365 = vadd.f32 0.0, %v2364
        %v2366 = vpop.f32.mrb[0].mxu0
        %v2367 = vpop.f32.mrb[0].mxu0
        %v2368 = vadd.f32 0.0, %v2367
        %v2369 = vpop.f32.mrb[0].mxu0
        %2370 = vmatprep.mubr.bf16.mxu0 0
        %2371 = vmatmul.mubr.bf16.gmra.mrb[0].mxu0 %v2287
        %v2372 = vpop.f32.mrb[0].mxu0
        %v2373 = vadd.f32 0.0, %v2372
        %v2374 = vpop.f32.mrb[0].mxu0
        %v2375 = vpop.f32.mrb[0].mxu0
        %v2376 = vadd.f32 0.0, %v2375
        %v2377 = vpop.f32.mrb[0].mxu0
        %2378 = vmatprep.mubr.bf16.mxu0 0
        %2379 = vmatmul.mubr.bf16.gmra.mrb[0].mxu0 %v2290
        %v2380 = vpop.f32.mrb[0].mxu0
        %v2381 = vadd.f32 0.0, %v2380
        %v2382 = vpop.f32.mrb[0].mxu0
        %v2383 = vpop.f32.mrb[0].mxu0
        %v2384 = vadd.f32 0.0, %v2383
        %v2385 = vpop.f32.mrb[0].mxu0
        %2386 = vmatprep.mubr.bf16.mxu0 0
        %2387 = vmatmul.mubr.bf16.gmra.mrb[0].mxu0 %v2293
        %v2388 = vpop.f32.mrb[0].mxu0
        %v2389 = vadd.f32 0.0, %v2388
        %v2390 = vpop.f32.mrb[0].mxu0
        %v2391 = vpop.f32.mrb[0].mxu0
        %v2392 = vadd.f32 0.0, %v2391
        %v2393 = vpop.f32.mrb[0].mxu0
        %2394 = vdwg.mxu0
        %v2395 = vadd.f32 %v1716, %v2333
        %v2396 = vadd.f32 %v1719, %v2336
        %v2397 = vadd.f32 %v1724, %v2341
        %v2398 = vadd.f32 %v1727, %v2344
        %v2399 = vadd.f32 %v1732, %v2349
        %v2400 = vadd.f32 %v1735, %v2352
        %v2401 = vadd.f32 %v1740, %v2357
        %v2402 = vadd.f32 %v1743, %v2360
        %v2403 = vadd.f32 %v1748, %v2365
        %v2404 = vadd.f32 %v1751, %v2368
        %v2405 = vadd.f32 %v1756, %v2373
        %v2406 = vadd.f32 %v1759, %v2376
        %v2407 = vadd.f32 %v1764, %v2381
        %v2408 = vadd.f32 %v1767, %v2384
        %v2409 = vadd.f32 %v1772, %v2389
        %v2410 = vadd.f32 %v1775, %v2392
        %s2411 = scalar_lea.vmem [#allocation8], 384
        %v2412 = vld [vmem:[%s2411] sm:$0xff]
        %v2413 = vld [vmem:[%s2411 + $0x8] sm:$0xff]
        %v2414 = vld [vmem:[%s2411 + $0x10] sm:$0xff]
        %v2415 = vld [vmem:[%s2411 + $0x18] sm:$0xff]
        %v2416 = vld [vmem:[%s2411 + $0x20] sm:$0xff]
        %v2417 = vld [vmem:[%s2411 + $0x28] sm:$0xff]
        %v2418 = vld [vmem:[%s2411 + $0x30] sm:$0xff]
        %v2419 = vld [vmem:[%s2411 + $0x38] sm:$0xff]
        %v2420 = vld [vmem:[%s2411 + $0x40] sm:$0xff]
        %v2421 = vld [vmem:[%s2411 + $0x48] sm:$0xff]
        %v2422 = vld [vmem:[%s2411 + $0x50] sm:$0xff]
        %v2423 = vld [vmem:[%s2411 + $0x58] sm:$0xff]
        %v2424 = vld [vmem:[%s2411 + $0x60] sm:$0xff]
        %v2425 = vld [vmem:[%s2411 + $0x68] sm:$0xff]
        %v2426 = vld [vmem:[%s2411 + $0x70] sm:$0xff]
        %v2427 = vld [vmem:[%s2411 + $0x78] sm:$0xff]
        %2428 = vrot.lane.b32.xlu0 %v544, 104
        %v2429 = vpop.permute.xlu0 %2428
        %2430 = vrot.lane.b32.xlu0 %v545, 104
        %v2431 = vpop.permute.xlu0 %2430
        %2432 = vrot.lane.b32.xlu0 %v546, 104
        %v2433 = vpop.permute.xlu0 %2432
        %2434 = vrot.lane.b32.xlu0 %v547, 104
        %v2435 = vpop.permute.xlu0 %2434
        %2436 = vrot.lane.b32.xlu0 %v548, 104
        %v2437 = vpop.permute.xlu0 %2436
        %2438 = vrot.lane.b32.xlu0 %v549, 104
        %v2439 = vpop.permute.xlu0 %2438
        %2440 = vrot.lane.b32.xlu0 %v550, 104
        %v2441 = vpop.permute.xlu0 %2440
        %2442 = vrot.lane.b32.xlu0 %v551, 104
        %v2443 = vpop.permute.xlu0 %2442
        %2444 = vrot.lane.b32.xlu0 %v544, 72
        %v2445 = vpop.permute.xlu0 %2444
        %2446 = vrot.lane.b32.xlu0 %v545, 72
        %v2447 = vpop.permute.xlu0 %2446
        %2448 = vrot.lane.b32.xlu0 %v546, 72
        %v2449 = vpop.permute.xlu0 %2448
        %2450 = vrot.lane.b32.xlu0 %v547, 72
        %v2451 = vpop.permute.xlu0 %2450
        %2452 = vrot.lane.b32.xlu0 %v548, 72
        %v2453 = vpop.permute.xlu0 %2452
        %2454 = vrot.lane.b32.xlu0 %v549, 72
        %v2455 = vpop.permute.xlu0 %2454
        %2456 = vrot.lane.b32.xlu0 %v550, 72
        %v2457 = vpop.permute.xlu0 %2456
        %2458 = vrot.lane.b32.xlu0 %v551, 72
        %v2459 = vpop.permute.xlu0 %2458
        %v2461 = vsel %vm592, %v2429, 0
        %v2464 = vsel %vm592, %v2431, 0
        %v2467 = vsel %vm592, %v2433, 0
        %v2470 = vsel %vm592, %v2435, 0
        %v2473 = vsel %vm592, %v2437, 0
        %v2476 = vsel %vm592, %v2439, 0
        %v2479 = vsel %vm592, %v2441, 0
        %v2482 = vsel %vm592, %v2443, 0
        %v2485 = vsel %vm592, %v2445, 0
        %v2488 = vsel %vm592, %v2447, 0
        %v2491 = vsel %vm592, %v2449, 0
        %v2494 = vsel %vm592, %v2451, 0
        %v2497 = vsel %vm592, %v2453, 0
        %v2500 = vsel %vm592, %v2455, 0
        %v2503 = vsel %vm592, %v2457, 0
        %v2506 = vsel %vm592, %v2459, 0
        %2508 = vmatprep.subr.bf16.mxu0 0
        %2509 = vmatpush1.bf16.xpose.msra.mxu0 %v2485
        %2510 = vmatprep.subr.bf16.mxu0 0
        %2511 = vmatpush1.bf16.xpose.msra.mxu0 %v2488
        %2512 = vmatprep.subr.bf16.mxu0 0
        %2513 = vmatpush1.bf16.xpose.msra.mxu0 %v2491
        %2514 = vmatprep.subr.bf16.mxu0 0
        %2515 = vmatpush1.bf16.xpose.msra.mxu0 %v2494
        %2516 = vmatprep.subr.bf16.mxu0 0
        %2517 = vmatpush1.bf16.xpose.msra.mxu0 %v2497
        %2518 = vmatprep.subr.bf16.mxu0 0
        %2519 = vmatpush1.bf16.xpose.msra.mxu0 %v2500
        %2520 = vmatprep.subr.bf16.mxu0 0
        %2521 = vmatpush1.bf16.xpose.msra.mxu0 %v2503
        %2522 = vmatprep.subr.bf16.mxu0 0
        %2523 = vmatpush1.bf16.xpose.msra.mxu0 %v2506
        %2524 = vmatprep.subr.bf16.mxu0 0
        %2525 = vmatpush1.bf16.xpose.msra.mxu0 0
        %2526 = vmatprep.subr.bf16.mxu0 0
        %2527 = vmatpush1.bf16.xpose.msra.mxu0 0
        %2528 = vmatprep.subr.bf16.mxu0 0
        %2529 = vmatpush1.bf16.xpose.msra.mxu0 0
        %2530 = vmatprep.subr.bf16.mxu0 0
        %2531 = vmatpush1.bf16.xpose.msra.mxu0 0
        %2532 = vmatprep.subr.bf16.mxu0 0
        %2533 = vmatpush1.bf16.xpose.msra.mxu0 0
        %2534 = vmatprep.subr.bf16.mxu0 0
        %2535 = vmatpush1.bf16.xpose.msra.mxu0 0
        %2536 = vmatprep.subr.bf16.mxu0 0
        %2537 = vmatpush1.bf16.xpose.msra.mxu0 0
        %2538 = vmatprep.subr.bf16.mxu0 0
        %2539 = vmatpush1.bf16.xpose.msra.mxu0 0
        %2540 = vmatprep.mubr.bf16.mxu0 0
        %2541 = vmatmul.mubr.bf16.gmra.mrb[0].mxu0 %v2461
        %v2542 = vpop.f32.mrb[0].mxu0
        %v2543 = vadd.f32 %v2412, %v2542
        %v2544 = vpop.f32.mrb[0].mxu0
        %v2545 = vpop.f32.mrb[0].mxu0
        %v2546 = vadd.f32 %v2413, %v2545
        %v2547 = vpop.f32.mrb[0].mxu0
        %2548 = vmatprep.mubr.bf16.mxu0 0
        %2549 = vmatmul.mubr.bf16.gmra.mrb[0].mxu0 %v2464
        %v2550 = vpop.f32.mrb[0].mxu0
        %v2551 = vadd.f32 %v2414, %v2550
        %v2552 = vpop.f32.mrb[0].mxu0
        %v2553 = vpop.f32.mrb[0].mxu0
        %v2554 = vadd.f32 %v2415, %v2553
        %v2555 = vpop.f32.mrb[0].mxu0
        %2556 = vmatprep.mubr.bf16.mxu0 0
        %2557 = vmatmul.mubr.bf16.gmra.mrb[0].mxu0 %v2467
        %v2558 = vpop.f32.mrb[0].mxu0
        %v2559 = vadd.f32 %v2416, %v2558
        %v2560 = vpop.f32.mrb[0].mxu0
        %v2561 = vpop.f32.mrb[0].mxu0
        %v2562 = vadd.f32 %v2417, %v2561
        %v2563 = vpop.f32.mrb[0].mxu0
        %2564 = vmatprep.mubr.bf16.mxu0 0
        %2565 = vmatmul.mubr.bf16.gmra.mrb[0].mxu0 %v2470
        %v2566 = vpop.f32.mrb[0].mxu0
        %v2567 = vadd.f32 %v2418, %v2566
        %v2568 = vpop.f32.mrb[0].mxu0
        %v2569 = vpop.f32.mrb[0].mxu0
        %v2570 = vadd.f32 %v2419, %v2569
        %v2571 = vpop.f32.mrb[0].mxu0
        %2572 = vmatprep.mubr.bf16.mxu0 0
        %2573 = vmatmul.mubr.bf16.gmra.mrb[0].mxu0 %v2473
        %v2574 = vpop.f32.mrb[0].mxu0
        %v2575 = vadd.f32 %v2420, %v2574
        %v2576 = vpop.f32.mrb[0].mxu0
        %v2577 = vpop.f32.mrb[0].mxu0
        %v2578 = vadd.f32 %v2421, %v2577
        %v2579 = vpop.f32.mrb[0].mxu0
        %2580 = vmatprep.mubr.bf16.mxu0 0
        %2581 = vmatmul.mubr.bf16.gmra.mrb[0].mxu0 %v2476
        %v2582 = vpop.f32.mrb[0].mxu0
        %v2583 = vadd.f32 %v2422, %v2582
        %v2584 = vpop.f32.mrb[0].mxu0
        %v2585 = vpop.f32.mrb[0].mxu0
        %v2586 = vadd.f32 %v2423, %v2585
        %v2587 = vpop.f32.mrb[0].mxu0
        %2588 = vmatprep.mubr.bf16.mxu0 0
        %2589 = vmatmul.mubr.bf16.gmra.mrb[0].mxu0 %v2479
        %v2590 = vpop.f32.mrb[0].mxu0
        %v2591 = vadd.f32 %v2424, %v2590
        %v2592 = vpop.f32.mrb[0].mxu0
        %v2593 = vpop.f32.mrb[0].mxu0
        %v2594 = vadd.f32 %v2425, %v2593
        %v2595 = vpop.f32.mrb[0].mxu0
        %2596 = vmatprep.mubr.bf16.mxu0 0
        %2597 = vmatmul.mubr.bf16.gmra.mrb[0].mxu0 %v2482
        %v2598 = vpop.f32.mrb[0].mxu0
        %v2599 = vadd.f32 %v2426, %v2598
        %v2600 = vpop.f32.mrb[0].mxu0
        %v2601 = vpop.f32.mrb[0].mxu0
        %v2602 = vadd.f32 %v2427, %v2601
        %v2603 = vpop.f32.mrb[0].mxu0
        %2604 = vdwg.mxu0
        %v2605 = vadd.f32 %v2543, %v528
        %v2606 = vadd.f32 %v2546, %v529
        %v2607 = vadd.f32 %v2551, %v530
        %v2608 = vadd.f32 %v2554, %v531
        %v2609 = vadd.f32 %v2559, %v532
        %v2610 = vadd.f32 %v2562, %v533
        %v2611 = vadd.f32 %v2567, %v534
        %v2612 = vadd.f32 %v2570, %v535
        %v2613 = vadd.f32 %v2575, %v536
        %v2614 = vadd.f32 %v2578, %v537
        %v2615 = vadd.f32 %v2583, %v538
        %v2616 = vadd.f32 %v2586, %v539
        %v2617 = vadd.f32 %v2591, %v540
        %v2618 = vadd.f32 %v2594, %v541
        %v2619 = vadd.f32 %v2599, %v542
        %v2620 = vadd.f32 %v2602, %v543
        %2621 = vmax.xlane.f32.xlu0 %v2605
        %v2622 = vpop.xlane.xlu0 %2621
        %2623 = vmax.xlane.f32.xlu0 %v2606
        %v2624 = vpop.xlane.xlu0 %2623
        %2625 = vmax.xlane.f32.xlu0 %v2607
        %v2626 = vpop.xlane.xlu0 %2625
        %2627 = vmax.xlane.f32.xlu0 %v2608
        %v2628 = vpop.xlane.xlu0 %2627
        %2629 = vmax.xlane.f32.xlu0 %v2609
        %v2630 = vpop.xlane.xlu0 %2629
        %2631 = vmax.xlane.f32.xlu0 %v2610
        %v2632 = vpop.xlane.xlu0 %2631
        %2633 = vmax.xlane.f32.xlu0 %v2611
        %v2634 = vpop.xlane.xlu0 %2633
        %2635 = vmax.xlane.f32.xlu0 %v2612
        %v2636 = vpop.xlane.xlu0 %2635
        %2637 = vmax.xlane.f32.xlu0 %v2613
        %v2638 = vpop.xlane.xlu0 %2637
        %2639 = vmax.xlane.f32.xlu0 %v2614
        %v2640 = vpop.xlane.xlu0 %2639
        %2641 = vmax.xlane.f32.xlu0 %v2615
        %v2642 = vpop.xlane.xlu0 %2641
        %2643 = vmax.xlane.f32.xlu0 %v2616
        %v2644 = vpop.xlane.xlu0 %2643
        %2645 = vmax.xlane.f32.xlu0 %v2617
        %v2646 = vpop.xlane.xlu0 %2645
        %2647 = vmax.xlane.f32.xlu0 %v2618
        %v2648 = vpop.xlane.xlu0 %2647
        %2649 = vmax.xlane.f32.xlu0 %v2619
        %v2650 = vpop.xlane.xlu0 %2649
        %2651 = vmax.xlane.f32.xlu0 %v2620
        %v2652 = vpop.xlane.xlu0 %2651
        %v2653 = vsub.f32 %v2605, %v2622
        %v2654 = vsub.f32 %v2606, %v2624
        %v2655 = vsub.f32 %v2607, %v2626
        %v2656 = vsub.f32 %v2608, %v2628
        %v2657 = vsub.f32 %v2609, %v2630
        %v2658 = vsub.f32 %v2610, %v2632
        %v2659 = vsub.f32 %v2611, %v2634
        %v2660 = vsub.f32 %v2612, %v2636
        %v2661 = vsub.f32 %v2613, %v2638
        %v2662 = vsub.f32 %v2614, %v2640
        %v2663 = vsub.f32 %v2615, %v2642
        %v2664 = vsub.f32 %v2616, %v2644
        %v2665 = vsub.f32 %v2617, %v2646
        %v2666 = vsub.f32 %v2618, %v2648
        %v2667 = vsub.f32 %v2619, %v2650
        %v2668 = vsub.f32 %v2620, %v2652
        %v2669 = vmul.f32 %v2653, 1.442695
        %v2670 = vpow.pop %v2669
        %v2671 = vmul.f32 %v2654, 1.442695
        %v2672 = vpow.pop %v2671
        %v2673 = vmul.f32 %v2655, 1.442695
        %v2674 = vpow.pop %v2673
        %v2675 = vmul.f32 %v2656, 1.442695
        %v2676 = vpow.pop %v2675
        %v2677 = vmul.f32 %v2657, 1.442695
        %v2678 = vpow.pop %v2677
        %v2679 = vmul.f32 %v2658, 1.442695
        %v2680 = vpow.pop %v2679
        %v2681 = vmul.f32 %v2659, 1.442695
        %v2682 = vpow.pop %v2681
        %v2683 = vmul.f32 %v2660, 1.442695
        %v2684 = vpow.pop %v2683
        %v2685 = vmul.f32 %v2661, 1.442695
        %v2686 = vpow.pop %v2685
        %v2687 = vmul.f32 %v2662, 1.442695
        %v2688 = vpow.pop %v2687
        %v2689 = vmul.f32 %v2663, 1.442695
        %v2690 = vpow.pop %v2689
        %v2691 = vmul.f32 %v2664, 1.442695
        %v2692 = vpow.pop %v2691
        %v2693 = vmul.f32 %v2665, 1.442695
        %v2694 = vpow.pop %v2693
        %v2695 = vmul.f32 %v2666, 1.442695
        %v2696 = vpow.pop %v2695
        %v2697 = vmul.f32 %v2667, 1.442695
        %v2698 = vpow.pop %v2697
        %v2699 = vmul.f32 %v2668, 1.442695
        %v2700 = vpow.pop %v2699
        %2701 = vadd.xlane.f32.xlu0 %v2670
        %v2702 = vpop.xlane.xlu0 %2701
        %2703 = vadd.xlane.f32.xlu0 %v2672
        %v2704 = vpop.xlane.xlu0 %2703
        %2705 = vadd.xlane.f32.xlu0 %v2674
        %v2706 = vpop.xlane.xlu0 %2705
        %2707 = vadd.xlane.f32.xlu0 %v2676
        %v2708 = vpop.xlane.xlu0 %2707
        %2709 = vadd.xlane.f32.xlu0 %v2678
        %v2710 = vpop.xlane.xlu0 %2709
        %2711 = vadd.xlane.f32.xlu0 %v2680
        %v2712 = vpop.xlane.xlu0 %2711
        %2713 = vadd.xlane.f32.xlu0 %v2682
        %v2714 = vpop.xlane.xlu0 %2713
        %2715 = vadd.xlane.f32.xlu0 %v2684
        %v2716 = vpop.xlane.xlu0 %2715
        %2717 = vadd.xlane.f32.xlu0 %v2686
        %v2718 = vpop.xlane.xlu0 %2717
        %2719 = vadd.xlane.f32.xlu0 %v2688
        %v2720 = vpop.xlane.xlu0 %2719
        %2721 = vadd.xlane.f32.xlu0 %v2690
        %v2722 = vpop.xlane.xlu0 %2721
        %2723 = vadd.xlane.f32.xlu0 %v2692
        %v2724 = vpop.xlane.xlu0 %2723
        %2725 = vadd.xlane.f32.xlu0 %v2694
        %v2726 = vpop.xlane.xlu0 %2725
        %2727 = vadd.xlane.f32.xlu0 %v2696
        %v2728 = vpop.xlane.xlu0 %2727
        %2729 = vadd.xlane.f32.xlu0 %v2698
        %v2730 = vpop.xlane.xlu0 %2729
        %2731 = vadd.xlane.f32.xlu0 %v2700
        %v2732 = vpop.xlane.xlu0 %2731
        %v2733 = vrcp.pop %v2702
        %v2734 = vrcp.pop %v2704
        %v2735 = vrcp.pop %v2706
        %v2736 = vrcp.pop %v2708
        %v2737 = vrcp.pop %v2710
        %v2738 = vrcp.pop %v2712
        %v2739 = vrcp.pop %v2714
        %v2740 = vrcp.pop %v2716
        %v2741 = vrcp.pop %v2718
        %v2742 = vrcp.pop %v2720
        %v2743 = vrcp.pop %v2722
        %v2744 = vrcp.pop %v2724
        %v2745 = vrcp.pop %v2726
        %v2746 = vrcp.pop %v2728
        %v2747 = vrcp.pop %v2730
        %v2748 = vrcp.pop %v2732
        %v2749 = vmul.f32 %v2670, %v2733
        %v2750 = vmul.f32 %v2672, %v2734
        %v2751 = vmul.f32 %v2674, %v2735
        %v2752 = vmul.f32 %v2676, %v2736
        %v2753 = vmul.f32 %v2678, %v2737
        %v2754 = vmul.f32 %v2680, %v2738
        %v2755 = vmul.f32 %v2682, %v2739
        %v2756 = vmul.f32 %v2684, %v2740
        %v2757 = vmul.f32 %v2686, %v2741
        %v2758 = vmul.f32 %v2688, %v2742
        %v2759 = vmul.f32 %v2690, %v2743
        %v2760 = vmul.f32 %v2692, %v2744
        %v2761 = vmul.f32 %v2694, %v2745
        %v2762 = vmul.f32 %v2696, %v2746
        %v2763 = vmul.f32 %v2698, %v2747
        %v2764 = vmul.f32 %v2700, %v2748
        %v2765 = vpack.c.bf16 %v2750, %v2749
        %v2766 = vpack.c.bf16 %v2752, %v2751
        %v2767 = vpack.c.bf16 %v2754, %v2753
        %v2768 = vpack.c.bf16 %v2756, %v2755
        %v2769 = vpack.c.bf16 %v2758, %v2757
        %v2770 = vpack.c.bf16 %v2760, %v2759
        %v2771 = vpack.c.bf16 %v2762, %v2761
        %v2772 = vpack.c.bf16 %v2764, %v2763
        %2773 = vrot.lane.b32.xlu0 %v544, 40
        %v2774 = vpop.permute.xlu0 %2773
        %2775 = vrot.lane.b32.xlu0 %v545, 40
        %v2776 = vpop.permute.xlu0 %2775
        %2777 = vrot.lane.b32.xlu0 %v546, 40
        %v2778 = vpop.permute.xlu0 %2777
        %2779 = vrot.lane.b32.xlu0 %v547, 40
        %v2780 = vpop.permute.xlu0 %2779
        %2781 = vrot.lane.b32.xlu0 %v548, 40
        %v2782 = vpop.permute.xlu0 %2781
        %2783 = vrot.lane.b32.xlu0 %v549, 40
        %v2784 = vpop.permute.xlu0 %2783
        %2785 = vrot.lane.b32.xlu0 %v550, 40
        %v2786 = vpop.permute.xlu0 %2785
        %2787 = vrot.lane.b32.xlu0 %v551, 40
        %v2788 = vpop.permute.xlu0 %2787
        %2797 = vmatprep.subr.bf16.mxu0 0
        %2798 = vmatpush1.bf16.msra.mxu0 %v2774
        %2799 = vmatprep.subr.bf16.mxu0 0
        %2800 = vmatpush1.bf16.msra.mxu0 %v2776
        %2801 = vmatprep.subr.bf16.mxu0 0
        %2802 = vmatpush1.bf16.msra.mxu0 %v2778
        %2803 = vmatprep.subr.bf16.mxu0 0
        %2804 = vmatpush1.bf16.msra.mxu0 %v2780
        %2805 = vmatprep.subr.bf16.mxu0 0
        %2806 = vmatpush1.bf16.msra.mxu0 %v2782
        %2807 = vmatprep.subr.bf16.mxu0 0
        %2808 = vmatpush1.bf16.msra.mxu0 %v2784
        %2809 = vmatprep.subr.bf16.mxu0 0
        %2810 = vmatpush1.bf16.msra.mxu0 %v2786
        %2811 = vmatprep.subr.bf16.mxu0 0
        %2812 = vmatpush1.bf16.msra.mxu0 %v2788
        %2813 = vmatprep.subr.bf16.mxu0 0
        %2814 = vmatpush1.bf16.msra.mxu0 0
        %2815 = vmatprep.subr.bf16.mxu0 0
        %2816 = vmatpush1.bf16.msra.mxu0 0
        %2817 = vmatprep.subr.bf16.mxu0 0
        %2818 = vmatpush1.bf16.msra.mxu0 0
        %2819 = vmatprep.subr.bf16.mxu0 0
        %2820 = vmatpush1.bf16.msra.mxu0 0
        %2821 = vmatprep.subr.bf16.mxu0 0
        %2822 = vmatpush1.bf16.msra.mxu0 0
        %2823 = vmatprep.subr.bf16.mxu0 0
        %2824 = vmatpush1.bf16.msra.mxu0 0
        %2825 = vmatprep.subr.bf16.mxu0 0
        %2826 = vmatpush1.bf16.msra.mxu0 0
        %2827 = vmatprep.subr.bf16.mxu0 0
        %2828 = vmatpush1.bf16.msra.mxu0 0
        %2829 = vmatprep.mubr.bf16.mxu0 0
        %2830 = vmatmul.mubr.bf16.gmra.mrb[0].mxu0 %v2765
        %v2831 = vpop.f32.mrb[0].mxu0
        %v2832 = vadd.f32 0.0, %v2831
        %v2833 = vpop.f32.mrb[0].mxu0
        %v2834 = vpop.f32.mrb[0].mxu0
        %v2835 = vadd.f32 0.0, %v2834
        %v2836 = vpop.f32.mrb[0].mxu0
        %2837 = vmatprep.mubr.bf16.mxu0 0
        %2838 = vmatmul.mubr.bf16.gmra.mrb[0].mxu0 %v2766
        %v2839 = vpop.f32.mrb[0].mxu0
        %v2840 = vadd.f32 0.0, %v2839
        %v2841 = vpop.f32.mrb[0].mxu0
        %v2842 = vpop.f32.mrb[0].mxu0
        %v2843 = vadd.f32 0.0, %v2842
        %v2844 = vpop.f32.mrb[0].mxu0
        %2845 = vmatprep.mubr.bf16.mxu0 0
        %2846 = vmatmul.mubr.bf16.gmra.mrb[0].mxu0 %v2767
        %v2847 = vpop.f32.mrb[0].mxu0
        %v2848 = vadd.f32 0.0, %v2847
        %v2849 = vpop.f32.mrb[0].mxu0
        %v2850 = vpop.f32.mrb[0].mxu0
        %v2851 = vadd.f32 0.0, %v2850
        %v2852 = vpop.f32.mrb[0].mxu0
        %2853 = vmatprep.mubr.bf16.mxu0 0
        %2854 = vmatmul.mubr.bf16.gmra.mrb[0].mxu0 %v2768
        %v2855 = vpop.f32.mrb[0].mxu0
        %v2856 = vadd.f32 0.0, %v2855
        %v2857 = vpop.f32.mrb[0].mxu0
        %v2858 = vpop.f32.mrb[0].mxu0
        %v2859 = vadd.f32 0.0, %v2858
        %v2860 = vpop.f32.mrb[0].mxu0
        %2861 = vmatprep.mubr.bf16.mxu0 0
        %2862 = vmatmul.mubr.bf16.gmra.mrb[0].mxu0 %v2769
        %v2863 = vpop.f32.mrb[0].mxu0
        %v2864 = vadd.f32 0.0, %v2863
        %v2865 = vpop.f32.mrb[0].mxu0
        %v2866 = vpop.f32.mrb[0].mxu0
        %v2867 = vadd.f32 0.0, %v2866
        %v2868 = vpop.f32.mrb[0].mxu0
        %2869 = vmatprep.mubr.bf16.mxu0 0
        %2870 = vmatmul.mubr.bf16.gmra.mrb[0].mxu0 %v2770
        %v2871 = vpop.f32.mrb[0].mxu0
        %v2872 = vadd.f32 0.0, %v2871
        %v2873 = vpop.f32.mrb[0].mxu0
        %v2874 = vpop.f32.mrb[0].mxu0
        %v2875 = vadd.f32 0.0, %v2874
        %v2876 = vpop.f32.mrb[0].mxu0
        %2877 = vmatprep.mubr.bf16.mxu0 0
        %2878 = vmatmul.mubr.bf16.gmra.mrb[0].mxu0 %v2771
        %v2879 = vpop.f32.mrb[0].mxu0
        %v2880 = vadd.f32 0.0, %v2879
        %v2881 = vpop.f32.mrb[0].mxu0
        %v2882 = vpop.f32.mrb[0].mxu0
        %v2883 = vadd.f32 0.0, %v2882
        %v2884 = vpop.f32.mrb[0].mxu0
        %2885 = vmatprep.mubr.bf16.mxu0 0
        %2886 = vmatmul.mubr.bf16.gmra.mrb[0].mxu0 %v2772
        %v2887 = vpop.f32.mrb[0].mxu0
        %v2888 = vadd.f32 0.0, %v2887
        %v2889 = vpop.f32.mrb[0].mxu0
        %v2890 = vpop.f32.mrb[0].mxu0
        %v2891 = vadd.f32 0.0, %v2890
        %v2892 = vpop.f32.mrb[0].mxu0
        %2893 = vdwg.mxu0
        %v2894 = vpack.c.bf16 %v2835, %v2832
        %v2895 = vpack.c.bf16 %v2843, %v2840
        %v2896 = vpack.c.bf16 %v2851, %v2848
        %v2897 = vpack.c.bf16 %v2859, %v2856
        %v2898 = vpack.c.bf16 %v2867, %v2864
        %v2899 = vpack.c.bf16 %v2875, %v2872
        %v2900 = vpack.c.bf16 %v2883, %v2880
        %v2901 = vpack.c.bf16 %v2891, %v2888
        %s2902 = scalar_lea.vmem [#allocation7], 12
        %v2903 = vld [vmem:[%s2902] sm:$0xf]
        %v2905 = vsel %vm592, %v2894, 0
        %v2908 = vsel %vm592, %v2895, 0
        %v2911 = vsel %vm592, %v2896, 0
        %v2914 = vsel %vm592, %v2897, 0
        %v2917 = vsel %vm592, %v2898, 0
        %v2920 = vsel %vm592, %v2899, 0
        %v2923 = vsel %vm592, %v2900, 0
        %v2926 = vsel %vm592, %v2901, 0
        %v2929 = vsel %vm1553, %v2903, 0
        %2931 = vmatprep.subr.bf16.mxu0 0
        %2932 = vmatpush1.bf16.msra.mxu0 %v2929
        %2933 = vmatprep.subr.bf16.mxu0 0
        %2934 = vmatpush1.bf16.msra.mxu0 0
        %2935 = vmatprep.subr.bf16.mxu0 0
        %2936 = vmatpush1.bf16.msra.mxu0 0
        %2937 = vmatprep.subr.bf16.mxu0 0
        %2938 = vmatpush1.bf16.msra.mxu0 0
        %2939 = vmatprep.subr.bf16.mxu0 0
        %2940 = vmatpush1.bf16.msra.mxu0 0
        %2941 = vmatprep.subr.bf16.mxu0 0
        %2942 = vmatpush1.bf16.msra.mxu0 0
        %2943 = vmatprep.subr.bf16.mxu0 0
        %2944 = vmatpush1.bf16.msra.mxu0 0
        %2945 = vmatprep.subr.bf16.mxu0 0
        %2946 = vmatpush1.bf16.msra.mxu0 0
        %2947 = vmatprep.subr.bf16.mxu0 0
        %2948 = vmatpush1.bf16.msra.mxu0 0
        %2949 = vmatprep.subr.bf16.mxu0 0
        %2950 = vmatpush1.bf16.msra.mxu0 0
        %2951 = vmatprep.subr.bf16.mxu0 0
        %2952 = vmatpush1.bf16.msra.mxu0 0
        %2953 = vmatprep.subr.bf16.mxu0 0
        %2954 = vmatpush1.bf16.msra.mxu0 0
        %2955 = vmatprep.subr.bf16.mxu0 0
        %2956 = vmatpush1.bf16.msra.mxu0 0
        %2957 = vmatprep.subr.bf16.mxu0 0
        %2958 = vmatpush1.bf16.msra.mxu0 0
        %2959 = vmatprep.subr.bf16.mxu0 0
        %2960 = vmatpush1.bf16.msra.mxu0 0
        %2961 = vmatprep.subr.bf16.mxu0 0
        %2962 = vmatpush1.bf16.msra.mxu0 0
        %2963 = vmatprep.mubr.bf16.mxu0 0
        %2964 = vmatmul.mubr.bf16.gmra.mrb[0].mxu0 %v2905
        %v2965 = vpop.f32.mrb[0].mxu0
        %v2966 = vadd.f32 0.0, %v2965
        %v2967 = vpop.f32.mrb[0].mxu0
        %v2968 = vpop.f32.mrb[0].mxu0
        %v2969 = vadd.f32 0.0, %v2968
        %v2970 = vpop.f32.mrb[0].mxu0
        %2971 = vmatprep.mubr.bf16.mxu0 0
        %2972 = vmatmul.mubr.bf16.gmra.mrb[0].mxu0 %v2908
        %v2973 = vpop.f32.mrb[0].mxu0
        %v2974 = vadd.f32 0.0, %v2973
        %v2975 = vpop.f32.mrb[0].mxu0
        %v2976 = vpop.f32.mrb[0].mxu0
        %v2977 = vadd.f32 0.0, %v2976
        %v2978 = vpop.f32.mrb[0].mxu0
        %2979 = vmatprep.mubr.bf16.mxu0 0
        %2980 = vmatmul.mubr.bf16.gmra.mrb[0].mxu0 %v2911
        %v2981 = vpop.f32.mrb[0].mxu0
        %v2982 = vadd.f32 0.0, %v2981
        %v2983 = vpop.f32.mrb[0].mxu0
        %v2984 = vpop.f32.mrb[0].mxu0
        %v2985 = vadd.f32 0.0, %v2984
        %v2986 = vpop.f32.mrb[0].mxu0
        %2987 = vmatprep.mubr.bf16.mxu0 0
        %2988 = vmatmul.mubr.bf16.gmra.mrb[0].mxu0 %v2914
        %v2989 = vpop.f32.mrb[0].mxu0
        %v2990 = vadd.f32 0.0, %v2989
        %v2991 = vpop.f32.mrb[0].mxu0
        %v2992 = vpop.f32.mrb[0].mxu0
        %v2993 = vadd.f32 0.0, %v2992
        %v2994 = vpop.f32.mrb[0].mxu0
        %2995 = vmatprep.mubr.bf16.mxu0 0
        %2996 = vmatmul.mubr.bf16.gmra.mrb[0].mxu0 %v2917
        %v2997 = vpop.f32.mrb[0].mxu0
        %v2998 = vadd.f32 0.0, %v2997
        %v2999 = vpop.f32.mrb[0].mxu0
        %v3000 = vpop.f32.mrb[0].mxu0
        %v3001 = vadd.f32 0.0, %v3000
        %v3002 = vpop.f32.mrb[0].mxu0
        %3003 = vmatprep.mubr.bf16.mxu0 0
        %3004 = vmatmul.mubr.bf16.gmra.mrb[0].mxu0 %v2920
        %v3005 = vpop.f32.mrb[0].mxu0
        %v3006 = vadd.f32 0.0, %v3005
        %v3007 = vpop.f32.mrb[0].mxu0
        %v3008 = vpop.f32.mrb[0].mxu0
        %v3009 = vadd.f32 0.0, %v3008
        %v3010 = vpop.f32.mrb[0].mxu0
        %3011 = vmatprep.mubr.bf16.mxu0 0
        %3012 = vmatmul.mubr.bf16.gmra.mrb[0].mxu0 %v2923
        %v3013 = vpop.f32.mrb[0].mxu0
        %v3014 = vadd.f32 0.0, %v3013
        %v3015 = vpop.f32.mrb[0].mxu0
        %v3016 = vpop.f32.mrb[0].mxu0
        %v3017 = vadd.f32 0.0, %v3016
        %v3018 = vpop.f32.mrb[0].mxu0
        %3019 = vmatprep.mubr.bf16.mxu0 0
        %3020 = vmatmul.mubr.bf16.gmra.mrb[0].mxu0 %v2926
        %v3021 = vpop.f32.mrb[0].mxu0
        %v3022 = vadd.f32 0.0, %v3021
        %v3023 = vpop.f32.mrb[0].mxu0
        %v3024 = vpop.f32.mrb[0].mxu0
        %v3025 = vadd.f32 0.0, %v3024
        %v3026 = vpop.f32.mrb[0].mxu0
        %3027 = vdwg.mxu0
        %v3028 = vadd.f32 %v2395, %v2966
        %v3029 = vadd.f32 %v2396, %v2969
        %v3030 = vadd.f32 %v2397, %v2974
        %v3031 = vadd.f32 %v2398, %v2977
        %v3032 = vadd.f32 %v2399, %v2982
        %v3033 = vadd.f32 %v2400, %v2985
        %v3034 = vadd.f32 %v2401, %v2990
        %v3035 = vadd.f32 %v2402, %v2993
        %v3036 = vadd.f32 %v2403, %v2998
        %v3037 = vadd.f32 %v2404, %v3001
        %v3038 = vadd.f32 %v2405, %v3006
        %v3039 = vadd.f32 %v2406, %v3009
        %v3040 = vadd.f32 %v2407, %v3014
        %v3041 = vadd.f32 %v2408, %v3017
        %v3042 = vadd.f32 %v2409, %v3022
        %v3043 = vadd.f32 %v2410, %v3025
        %v3044 = vld [vmem:[%s4] sm:$0x1]
        %v3046 = vlaneseq
        %v3047 = vshrl.u32 %v3046, 7
        %v3048 = vsub.s32 0, %v3047
        %v3049 = vrot.slane %v3044, %v3048
        %v3051 = vadd.f32 %v3028, %v3049
        %v3052 = vadd.f32 %v3029, %v3049
        %v3053 = vadd.f32 %v3030, %v3049
        %v3054 = vadd.f32 %v3031, %v3049
        %v3055 = vadd.f32 %v3032, %v3049
        %v3056 = vadd.f32 %v3033, %v3049
        %v3057 = vadd.f32 %v3034, %v3049
        %v3058 = vadd.f32 %v3035, %v3049
        %v3059 = vadd.f32 %v3036, %v3049
        %v3060 = vadd.f32 %v3037, %v3049
        %v3061 = vadd.f32 %v3038, %v3049
        %v3062 = vadd.f32 %v3039, %v3049
        %v3063 = vadd.f32 %v3040, %v3049
        %v3064 = vadd.f32 %v3041, %v3049
        %v3065 = vadd.f32 %v3042, %v3049
        %v3066 = vadd.f32 %v3043, %v3049
        %3067 = vst.msk [vmem:[%s355] sm:$0xff] %vm406, %v3051
        %3068 = vst.msk [vmem:[%s355 + $0x8] sm:$0xff] %vm406, %v3052
        %3069 = vst.msk [vmem:[%s355 + $0x10] sm:$0xff] %vm406, %v3053
        %3070 = vst.msk [vmem:[%s355 + $0x18] sm:$0xff] %vm406, %v3054
        %3071 = vst.msk [vmem:[%s355 + $0x20] sm:$0xff] %vm406, %v3055
        %3072 = vst.msk [vmem:[%s355 + $0x28] sm:$0xff] %vm406, %v3056
        %3073 = vst.msk [vmem:[%s355 + $0x30] sm:$0xff] %vm406, %v3057
        %3074 = vst.msk [vmem:[%s355 + $0x38] sm:$0xff] %vm406, %v3058
        %3075 = vst.msk [vmem:[%s355 + $0x40] sm:$0xff] %vm406, %v3059
        %3076 = vst.msk [vmem:[%s355 + $0x48] sm:$0xff] %vm406, %v3060
        %3077 = vst.msk [vmem:[%s355 + $0x50] sm:$0xff] %vm406, %v3061
        %3078 = vst.msk [vmem:[%s355 + $0x58] sm:$0xff] %vm406, %v3062
        %3079 = vst.msk [vmem:[%s355 + $0x60] sm:$0xff] %vm406, %v3063
        %3080 = vst.msk [vmem:[%s355 + $0x68] sm:$0xff] %vm406, %v3064
        %3081 = vst.msk [vmem:[%s355 + $0x70] sm:$0xff] %vm406, %v3065
        %3082 = vst.msk [vmem:[%s355 + $0x78] sm:$0xff] %vm406, %v3066
        %s3083 = sand.u32 %s186, 1
        %s3084 = scalar_lea.sflag [#allocation4], %s3083
        %s3085 = sand.u32 %s186, 1
        %s3086 = smul.addr %s3085, 128
        %s3087 = scalar_lea.vmem [#allocation11], %s3086
        // Predicated region
        $region69: #{tpu_custom_call.1} parent=47 // pred_check
          %p3088 = pneg %p196
        $region70: #{tpu_custom_call.1} parent=47 // pred_check_branch
          %3090 = sbr.rel (%p3088) target = $region72
        $region71: #{tpu_custom_call.1} parent=47 // pred_region
          %s3091 = smul.u32 8, %s26
          %s3093 = ssub.s32 2048, 2048
          %3094 = vsyncadd %s3084, %s3093
          %s3095 = smul.addr %s3091, 2
          %s3096 = smul.addr %s3095, 128
          %s3097 = scalar_lea.hbm %s7, %s3096
          %s3098 = sshll.u32 %s3087, 4
          %s3099 = int_to_ptr.vmem [resolvable:$true] %s3098
          %3104 = dma.vmem_to_hbm [thread:$0]  %s3099, 2048, %s3097, %s3084, 128, 128, 8
        $region72: #{tpu_custom_call.1} parent=47 // pred_fallthru
          _
      $region48: #{tpu_custom_call.1} parent=5 // pred_fallthru
        _
      %p3105 = scmp.le.s32.totalorder 2, %s21
      // Predicated region
      $region73: #{tpu_custom_call.1} parent=5 // pred_check
        %p3106 = pneg %p3105
      $region74: #{tpu_custom_call.1} parent=5 // pred_check_branch
        %3108 = sbr.rel (%p3106) target = $region76
      $region75: #{tpu_custom_call.1} parent=5 // pred_region
        %s3109 = ssub.s32 %s21, 2
        // Predicated region
        $region77: #{tpu_custom_call.1} parent=75 // pred_check
          %p3110 = pneg %p202
        $region78: #{tpu_custom_call.1} parent=75 // pred_check_branch
          %3112 = sbr.rel (%p3110) target = $region80
        $region79: #{tpu_custom_call.1} parent=75 // pred_region
          %s3113 = sand.u32 %s187, 1
          %s3114 = scalar_lea.sflag [#allocation4], %s3113
          %s3115 = sand.u32 %s187, 1
          %s3116 = smul.addr %s3115, 128
          %s3117 = scalar_lea.vmem [#allocation11], %s3116
          %3118 = dma.done %s3114, 2048
        $region80: #{tpu_custom_call.1} parent=75 // pred_fallthru
          _
      $region76: #{tpu_custom_call.1} parent=5 // pred_fallthru
        _
    $region6: #{tpu_custom_call.1} parent=1 // loop_footer
      %s25 = sadd.s32 1, %s21
    $region7: #{tpu_custom_call.1} parent=1 // loop_footer_branch
      %20 = sbr.rel target = $region3
    $region8: #{tpu_custom_call.1} parent=1 // loop_exit
      _
    %3119 = vsyncpa [#allocation3], 1
    %s3120 = scalar_lea.sflag [#allocation3], 1
    %3121 = vsyncpa %s3120, 1
    %3122 = vsyncpa [#allocation6], 1
    %3123 = vsyncpa [#allocation9], 1
    %3124 = vsyncpa [#allocation4], 1
    %s3125 = scalar_lea.sflag [#allocation4], 1
    %3126 = vsyncpa %s3125, 1

</llo_original>
